<compile_context>
chip_gen: v6e
topology: v6e:2x2x1
jax: 0.10.0
libtpu: 0.0.40
codegen_flags: <defaults>
</compile_context>

<pallas_src>
import math

import jax
import jax.numpy as jnp
import numpy as np
from jax.experimental import pallas as pl
from jax.experimental.pallas import tpu as pltpu


# ------------------------- config (mirrors the PyTorch config object) --------
class Config:
    hidden_size = 32
    num_attention_heads = 4
    attention_probs_dropout_prob = 0.1   # eval-mode => identity
    output_attentions = True
    syntax = {"use_dep_rel": True}


# ------------------------------- Pallas kernel -------------------------------
def _rel_attn_kernel(h_ref, wq_ref, wk_ref, wv_ref, bq_ref, bk_ref, bv_ref,
                     mask_ref, rel_ref, ctx_ref, probs_ref):
    # Per-batch block shapes (batch dim squeezed out by the BlockSpecs):
    #   h_ref    : (S, E)       wq/wk/wv_ref : (E, E)     b*_ref : (1, E)
    #   mask_ref : (1, S)       rel_ref      : (S, S, Dh)
    #   ctx_ref  : (S, E)       probs_ref    : (H, S, S)
    S, E = h_ref.shape
    H = probs_ref.shape[0]
    Dh = rel_ref.shape[-1]
    scale = 1.0 / math.sqrt(Dh)

    x = h_ref[...]                                                    # (S, E)

    # Single full-width Q/K/V projections (all heads at once).
    q = jnp.dot(x, wq_ref[...], preferred_element_type=jnp.float32) + bq_ref[...]
    k = jnp.dot(x, wk_ref[...], preferred_element_type=jnp.float32) + bk_ref[...]
    v = jnp.dot(x, wv_ref[...], preferred_element_type=jnp.float32) + bv_ref[...]

    rel = rel_ref[...]                                                # (S, S, Dh)
    mask = mask_ref[...]                                              # (1, S)

    # Relational score term for ALL heads as one batched MXU contraction:
    #   rel_scores[i, h, j] = sum_d q[i, h*Dh + d] * rel[i, j, d]
    q_ihd = q.reshape(S, H, Dh)
    rel_scores = jnp.einsum("ihd,ijd->ihj", q_ihd, rel,
                            preferred_element_type=jnp.float32)       # (S, H, S)

    probs_list = []
    ctx_list = []
    for h in range(H):                      # H is small & static -> unrolled
        lo = h * Dh
        qh = q[:, lo:lo + Dh]                                          # (S, Dh)
        kh = k[:, lo:lo + Dh]
        vh = v[:, lo:lo + Dh]

        scores = jnp.einsum("id,jd->ij", qh, kh,
                            preferred_element_type=jnp.float32)        # (S, S)
        scores = (scores + rel_scores[:, h, :]) * scale + mask

        # softmax over the key axis
        m = jnp.max(scores, axis=-1, keepdims=True)
        e = jnp.exp(scores - m)
        denom = jnp.sum(e, axis=-1, keepdims=True)
        r = pl.reciprocal(denom, approx=True)
        r = r * (2.0 - denom * r)            # one Newton step -> ~f32 exact
        probs_h = e * r                                                # (S, S)
        # TODO(synk): attention-probs dropout omitted (eval-mode identity).

        probs_ref[h, :, :] = probs_h
        probs_list.append(probs_h)
        ctx_list.append(jnp.dot(probs_h, vh,
                                preferred_element_type=jnp.float32))   # (S, Dh)

    # Relational value term for ALL heads as one batched MXU contraction:
    #   ctx_rel[i, h, d] = sum_j probs[h, i, j] * rel[i, j, d]
    probs_ihj = jnp.stack(probs_list, axis=1)                          # (S, H, S)
    ctx_rel = jnp.einsum("ihj,ijd->ihd", probs_ihj, rel,
                         preferred_element_type=jnp.float32)           # (S, H, Dh)

    ctx_pv = jnp.stack(ctx_list, axis=1)                               # (S, H, Dh)
    ctx = (ctx_pv + ctx_rel).reshape(S, H * Dh)                        # (S, E)
    ctx_ref[...] = ctx.astype(ctx_ref.dtype)


# --------------------------------- wrapper -----------------------------------
def relational_self_attention(hidden_states, attention_mask, dep_rel_matrix, params,
                              config):
    B, S, E = hidden_states.shape
    H = config.num_attention_heads
    Dh = E // H

    # Weights stay full (E, E); biases reshaped to (1, E) for clean 2-D blocks.
    bq = params["bq"].reshape(1, E)
    bk = params["bk"].reshape(1, E)
    bv = params["bv"].reshape(1, E)
    mask2 = attention_mask.reshape(B, 1, S)   # (B,1,1,S) -> (B,1,S)

    w_spec = pl.BlockSpec((E, E), lambda b: (0, 0))     # index-invariant -> no re-DMA
    b_spec = pl.BlockSpec((1, E), lambda b: (0, 0))

    context, probs = pl.pallas_call(
        _rel_attn_kernel,
        grid=(B,),
        in_specs=[
            pl.BlockSpec((None, S, E), lambda b: (b, 0, 0)),        # hidden_states
            w_spec, w_spec, w_spec,                                  # wq, wk, wv
            b_spec, b_spec, b_spec,                                  # bq, bk, bv
            pl.BlockSpec((None, 1, S), lambda b: (b, 0, 0)),         # attention_mask
            pl.BlockSpec((None, S, S, Dh), lambda b: (b, 0, 0, 0)),  # dep_rel_matrix
        ],
        out_specs=[
            pl.BlockSpec((None, S, E), lambda b: (b, 0, 0)),         # context (B,S,E)
            pl.BlockSpec((None, H, S, S), lambda b: (b, 0, 0, 0)),   # probs   (B,H,S,S)
        ],
        out_shape=[
            jax.ShapeDtypeStruct((B, S, E), jnp.float32),
            jax.ShapeDtypeStruct((B, H, S, S), jnp.float32),
        ],
        compiler_params=pltpu.CompilerParams(
            dimension_semantics=("parallel",)),
    )(hidden_states, params["wq"], params["wk"], params["wv"],
      bq, bk, bv, mask2, dep_rel_matrix)

    if config.output_attentions:
        return context, probs
    return (context,)


# ---------------------------- pure-JAX reference ------------------------------
def reference_forward(hidden_states, attention_mask, dep_rel_matrix, params, config):
    B, S, E = hidden_states.shape
    H = config.num_attention_heads
    Dh = E // H

    def proj(w, b):
        y = hidden_states @ w + b                            # (B, S, E)
        return y.reshape(B, S, H, Dh).transpose(0, 2, 1, 3)  # (B, H, S, Dh)

    q = proj(params["wq"], params["bq"])
    k = proj(params["wk"], params["bk"])
    v = proj(params["wv"], params["bv"])

    scores = jnp.einsum("bhqd,bhkd->bhqk", q, k)
    rel_scores = jnp.sum(q[:, :, :, None, :] * dep_rel_matrix[:, None, :, :, :], -1)
    scores = (scores + rel_scores) / math.sqrt(Dh)
    scores = scores + attention_mask
    probs = jax.nn.softmax(scores, axis=-1)
    ctx = jnp.einsum("bhqk,bhkd->bhqd", probs, v)
    val_edge = probs[:, :, :, :, None] * dep_rel_matrix[:, None, :, :, :]
    ctx = ctx + jnp.sum(val_edge, axis=-2)
    ctx = ctx.transpose(0, 2, 1, 3).reshape(B, S, H * Dh)
    return ctx, probs


# ------------------------------------ main ------------------------------------
if __name__ == "__main__":
    cfg = Config()
    B, S, E = 2, 8, cfg.hidden_size
    H = cfg.num_attention_heads
    Dh = E // H

    key = jax.random.PRNGKey(0)
    ks = jax.random.split(key, 10)
    scale = 1.0 / math.sqrt(E)
    params = {
        "wq": jax.random.normal(ks[0], (E, E), jnp.float32) * scale,
        "wk": jax.random.normal(ks[1], (E, E), jnp.float32) * scale,
        "wv": jax.random.normal(ks[2], (E, E), jnp.float32) * scale,
        "bq": jax.random.normal(ks[3], (E,), jnp.float32) * 0.02,
        "bk": jax.random.normal(ks[4], (E,), jnp.float32) * 0.02,
        "bv": jax.random.normal(ks[5], (E,), jnp.float32) * 0.02,
    }

    hidden_states = jax.random.normal(ks[6], (B, S, E), jnp.float32)
    dep_rel_matrix = jax.random.normal(ks[7], (B, S, S, Dh), jnp.float32) * 0.1
    # additive mask: 0 for attend, -10000 for masked-out (last 2 keys of batch 1)
    mask_bits = jnp.ones((B, S), jnp.float32).at[1, -2:].set(0.0)
    attention_mask = (1.0 - mask_bits)[:, None, None, :] * -10000.0   # (B,1,1,S)

    ctx, probs = relational_self_attention(
        hidden_states, attention_mask, dep_rel_matrix, params, cfg)
    ctx = jax.block_until_ready(ctx)
    probs = jax.block_until_ready(probs)

    ctx_expected, probs_expected = reference_forward(
        hidden_states, attention_mask, dep_rel_matrix, params, cfg)

    np.testing.assert_allclose(np.asarray(ctx), np.asarray(ctx_expected),
                               rtol=1e-5, atol=1e-5)
    np.testing.assert_allclose(np.asarray(probs), np.asarray(probs_expected),
                               rtol=1e-5, atol=1e-5)

    print("KERNEL_OK")
</pallas_src>

<mosaic_0001>
module attributes {stable_mosaic.version = 11 : i64} {
  func.func @_rel_attn_kernel(%arg0: i32, %arg1: memref<1x8x32xf32, #tpu.memory_space<vmem>>, %arg2: memref<32x32xf32, #tpu.memory_space<vmem>>, %arg3: memref<32x32xf32, #tpu.memory_space<vmem>>, %arg4: memref<32x32xf32, #tpu.memory_space<vmem>>, %arg5: memref<1x32xf32, #tpu.memory_space<vmem>>, %arg6: memref<1x32xf32, #tpu.memory_space<vmem>>, %arg7: memref<1x32xf32, #tpu.memory_space<vmem>>, %arg8: memref<1x1x8xf32, #tpu.memory_space<vmem>>, %arg9: memref<1x8x8x8xf32, #tpu.memory_space<vmem>>, %arg10: memref<1x8x32xf32, #tpu.memory_space<vmem>>, %arg11: memref<1x4x8x8xf32, #tpu.memory_space<vmem>>) attributes {dimension_semantics = [#tpu.dimension_semantics<parallel>], iteration_bounds = array<i64: 2>, scalar_prefetch = 0 : i64, scratch_operands = 0 : i64, tpu.core_type = #tpu.core_type<tc>, window_params = [{transform_indices = @transform_0, window_bounds = array<i64: 1, 8, 32>}, {pipeline_mode = #tpu.pipeline_mode<synchronous>, transform_indices = @transform_1, window_bounds = array<i64: 32, 32>}, {pipeline_mode = #tpu.pipeline_mode<synchronous>, transform_indices = @transform_2, window_bounds = array<i64: 32, 32>}, {pipeline_mode = #tpu.pipeline_mode<synchronous>, transform_indices = @transform_3, window_bounds = array<i64: 32, 32>}, {pipeline_mode = #tpu.pipeline_mode<synchronous>, transform_indices = @transform_4, window_bounds = array<i64: 1, 32>}, {pipeline_mode = #tpu.pipeline_mode<synchronous>, transform_indices = @transform_5, window_bounds = array<i64: 1, 32>}, {pipeline_mode = #tpu.pipeline_mode<synchronous>, transform_indices = @transform_6, window_bounds = array<i64: 1, 32>}, {transform_indices = @transform_7, window_bounds = array<i64: 1, 1, 8>}, {transform_indices = @transform_8, window_bounds = array<i64: 1, 8, 8, 8>}, {transform_indices = @transform_9, window_bounds = array<i64: 1, 8, 32>}, {transform_indices = @transform_10, window_bounds = array<i64: 1, 4, 8, 8>}]} {
    %c0 = arith.constant 0 : index
    %c0_0 = arith.constant 0 : index
    %c0_1 = arith.constant 0 : index
    %0 = vector.load %arg1[%c0, %c0_0, %c0_1] : memref<1x8x32xf32, #tpu.memory_space<vmem>>, vector<1x8x32xf32>
    %1 = vector.shape_cast %0 : vector<1x8x32xf32> to vector<8x32xf32>
    %c0_2 = arith.constant 0 : index
    %c0_3 = arith.constant 0 : index
    %2 = vector.load %arg2[%c0_2, %c0_3] : memref<32x32xf32, #tpu.memory_space<vmem>>, vector<32x32xf32>
    %cst = arith.constant dense<0.000000e+00> : vector<8x32xf32>
    %3 = tpu.matmul %1, %2, %cst {dimension_numbers = #tpu.dot_dimension_numbers<[1], [0], [0], [1], [0, 0, 1, 1], [], []>} : vector<8x32xf32>, vector<32x32xf32>, vector<8x32xf32> -> vector<8x32xf32>
    %c0_4 = arith.constant 0 : index
    %c0_5 = arith.constant 0 : index
    %4 = vector.load %arg5[%c0_4, %c0_5] : memref<1x32xf32, #tpu.memory_space<vmem>>, vector<1x32xf32>
    %5 = vector.broadcast %4 : vector<1x32xf32> to vector<8x32xf32>
    %6 = arith.addf %3, %5 : vector<8x32xf32>
    %c0_6 = arith.constant 0 : index
    %c0_7 = arith.constant 0 : index
    %7 = vector.load %arg3[%c0_6, %c0_7] : memref<32x32xf32, #tpu.memory_space<vmem>>, vector<32x32xf32>
    %cst_8 = arith.constant dense<0.000000e+00> : vector<8x32xf32>
    %8 = tpu.matmul %1, %7, %cst_8 {dimension_numbers = #tpu.dot_dimension_numbers<[1], [0], [0], [1], [0, 0, 1, 1], [], []>} : vector<8x32xf32>, vector<32x32xf32>, vector<8x32xf32> -> vector<8x32xf32>
    %c0_9 = arith.constant 0 : index
    %c0_10 = arith.constant 0 : index
    %9 = vector.load %arg6[%c0_9, %c0_10] : memref<1x32xf32, #tpu.memory_space<vmem>>, vector<1x32xf32>
    %10 = vector.broadcast %9 : vector<1x32xf32> to vector<8x32xf32>
    %11 = arith.addf %8, %10 : vector<8x32xf32>
    %c0_11 = arith.constant 0 : index
    %c0_12 = arith.constant 0 : index
    %12 = vector.load %arg4[%c0_11, %c0_12] : memref<32x32xf32, #tpu.memory_space<vmem>>, vector<32x32xf32>
    %cst_13 = arith.constant dense<0.000000e+00> : vector<8x32xf32>
    %13 = tpu.matmul %1, %12, %cst_13 {dimension_numbers = #tpu.dot_dimension_numbers<[1], [0], [0], [1], [0, 0, 1, 1], [], []>} : vector<8x32xf32>, vector<32x32xf32>, vector<8x32xf32> -> vector<8x32xf32>
    %c0_14 = arith.constant 0 : index
    %c0_15 = arith.constant 0 : index
    %14 = vector.load %arg7[%c0_14, %c0_15] : memref<1x32xf32, #tpu.memory_space<vmem>>, vector<1x32xf32>
    %15 = vector.broadcast %14 : vector<1x32xf32> to vector<8x32xf32>
    %16 = arith.addf %13, %15 : vector<8x32xf32>
    %c0_16 = arith.constant 0 : index
    %c0_17 = arith.constant 0 : index
    %c0_18 = arith.constant 0 : index
    %c0_19 = arith.constant 0 : index
    %17 = vector.load %arg9[%c0_16, %c0_17, %c0_18, %c0_19] : memref<1x8x8x8xf32, #tpu.memory_space<vmem>>, vector<1x8x8x8xf32>
    %18 = vector.shape_cast %17 : vector<1x8x8x8xf32> to vector<8x8x8xf32>
    %c0_20 = arith.constant 0 : index
    %c0_21 = arith.constant 0 : index
    %c0_22 = arith.constant 0 : index
    %19 = vector.load %arg8[%c0_20, %c0_21, %c0_22] : memref<1x1x8xf32, #tpu.memory_space<vmem>>, vector<1x1x8xf32>
    %20 = vector.shape_cast %19 : vector<1x1x8xf32> to vector<1x8xf32>
    %21 = vector.shape_cast %6 : vector<8x32xf32> to vector<8x4x8xf32>
    "tpu.trace_start"() <{level = 10 : i32, message = "ihd,ijd->ihj"}> : () -> ()
    %cst_23 = arith.constant dense<0.000000e+00> : vector<8x4x8xf32>
    %22 = tpu.matmul %21, %18, %cst_23 {dimension_numbers = #tpu.dot_dimension_numbers<[2], [2], [1], [1], [0, 0, 0, 1, 1, 1], [0], [0]>} : vector<8x4x8xf32>, vector<8x8x8xf32>, vector<8x4x8xf32> -> vector<8x4x8xf32>
    "tpu.trace_stop"() : () -> ()
    %23 = vector.extract_strided_slice %6 {offsets = [0, 0], sizes = [8, 8], strides = [1, 1]} : vector<8x32xf32> to vector<8x8xf32>
    %24 = vector.extract_strided_slice %11 {offsets = [0, 0], sizes = [8, 8], strides = [1, 1]} : vector<8x32xf32> to vector<8x8xf32>
    %25 = vector.extract_strided_slice %16 {offsets = [0, 0], sizes = [8, 8], strides = [1, 1]} : vector<8x32xf32> to vector<8x8xf32>
    "tpu.trace_start"() <{level = 10 : i32, message = "id,jd->ij"}> : () -> ()
    %cst_24 = arith.constant dense<0.000000e+00> : vector<8x8xf32>
    %26 = tpu.matmul %23, %24, %cst_24 {dimension_numbers = #tpu.dot_dimension_numbers<[1], [1], [0], [0], [0, 0, 1, 0], [], []>} : vector<8x8xf32>, vector<8x8xf32>, vector<8x8xf32> -> vector<8x8xf32>
    "tpu.trace_stop"() : () -> ()
    %27 = vector.extract_strided_slice %22 {offsets = [0, 0, 0], sizes = [8, 1, 8], strides = [1, 1, 1]} : vector<8x4x8xf32> to vector<8x1x8xf32>
    %28 = vector.shape_cast %27 : vector<8x1x8xf32> to vector<8x8xf32>
    %29 = arith.addf %26, %28 : vector<8x8xf32>
    %cst_25 = arith.constant 0.353553385 : f32
    %30 = vector.broadcast %cst_25 : f32 to vector<8x8xf32>
    %31 = arith.mulf %29, %30 : vector<8x8xf32>
    %32 = vector.broadcast %20 : vector<1x8xf32> to vector<8x8xf32>
    %33 = arith.addf %31, %32 : vector<8x8xf32>
    %cst_26 = arith.constant dense<0xFF800000> : vector<8xf32>
    %34 = vector.multi_reduction <maximumf>, %33, %cst_26 [1] : vector<8x8xf32> to vector<8xf32>
    %35 = vector.shape_cast %34 : vector<8xf32> to vector<8x1xf32>
    %36 = vector.broadcast %35 : vector<8x1xf32> to vector<8x8xf32>
    %37 = arith.subf %33, %36 : vector<8x8xf32>
    %38 = math.exp %37 : vector<8x8xf32>
    %cst_27 = arith.constant dense<0.000000e+00> : vector<8xf32>
    %39 = vector.multi_reduction <add>, %38, %cst_27 [1] : vector<8x8xf32> to vector<8xf32>
    %40 = vector.shape_cast %39 : vector<8xf32> to vector<8x1xf32>
    %41 = tpu.reciprocal %40 {approx = true} : vector<8x1xf32> -> vector<8x1xf32>
    %42 = arith.mulf %40, %41 : vector<8x1xf32>
    %cst_28 = arith.constant 2.000000e+00 : f32
    %43 = vector.broadcast %cst_28 : f32 to vector<8x1xf32>
    %44 = arith.subf %43, %42 : vector<8x1xf32>
    %45 = arith.mulf %41, %44 : vector<8x1xf32>
    %46 = vector.broadcast %45 : vector<8x1xf32> to vector<8x8xf32>
    %47 = arith.mulf %38, %46 : vector<8x8xf32>
    %c0_29 = arith.constant 0 : index
    %c0_30 = arith.constant 0 : index
    %c0_31 = arith.constant 0 : index
    %c0_32 = arith.constant 0 : index
    %48 = vector.load %arg11[%c0_29, %c0_30, %c0_31, %c0_32] : memref<1x4x8x8xf32, #tpu.memory_space<vmem>>, vector<1x1x8x8xf32>
    %49 = vector.shape_cast %48 : vector<1x1x8x8xf32> to vector<8x8xf32>
    %50 = vector.shape_cast %47 : vector<8x8xf32> to vector<1x1x8x8xf32>
    tpu.vector_store %arg11[%c0_29, %c0_30, %c0_31, %c0_32], %50 {strides = array<i32>} : memref<1x4x8x8xf32, #tpu.memory_space<vmem>>, vector<1x1x8x8xf32>,
    %cst_33 = arith.constant dense<0.000000e+00> : vector<8x8xf32>
    %51 = tpu.matmul %47, %25, %cst_33 {dimension_numbers = #tpu.dot_dimension_numbers<[1], [0], [0], [1], [0, 0, 1, 1], [], []>} : vector<8x8xf32>, vector<8x8xf32>, vector<8x8xf32> -> vector<8x8xf32>
    %52 = vector.extract_strided_slice %6 {offsets = [0, 8], sizes = [8, 8], strides = [1, 1]} : vector<8x32xf32> to vector<8x8xf32>
    %53 = vector.extract_strided_slice %11 {offsets = [0, 8], sizes = [8, 8], strides = [1, 1]} : vector<8x32xf32> to vector<8x8xf32>
    %54 = vector.extract_strided_slice %16 {offsets = [0, 8], sizes = [8, 8], strides = [1, 1]} : vector<8x32xf32> to vector<8x8xf32>
    "tpu.trace_start"() <{level = 10 : i32, message = "id,jd->ij"}> : () -> ()
    %cst_34 = arith.constant dense<0.000000e+00> : vector<8x8xf32>
    %55 = tpu.matmul %52, %53, %cst_34 {dimension_numbers = #tpu.dot_dimension_numbers<[1], [1], [0], [0], [0, 0, 1, 0], [], []>} : vector<8x8xf32>, vector<8x8xf32>, vector<8x8xf32> -> vector<8x8xf32>
    "tpu.trace_stop"() : () -> ()
    %56 = vector.extract_strided_slice %22 {offsets = [0, 1, 0], sizes = [8, 1, 8], strides = [1, 1, 1]} : vector<8x4x8xf32> to vector<8x1x8xf32>
    %57 = vector.shape_cast %56 : vector<8x1x8xf32> to vector<8x8xf32>
    %58 = arith.addf %55, %57 : vector<8x8xf32>
    %cst_35 = arith.constant 0.353553385 : f32
    %59 = vector.broadcast %cst_35 : f32 to vector<8x8xf32>
    %60 = arith.mulf %58, %59 : vector<8x8xf32>
    %61 = vector.broadcast %20 : vector<1x8xf32> to vector<8x8xf32>
    %62 = arith.addf %60, %61 : vector<8x8xf32>
    %cst_36 = arith.constant dense<0xFF800000> : vector<8xf32>
    %63 = vector.multi_reduction <maximumf>, %62, %cst_36 [1] : vector<8x8xf32> to vector<8xf32>
    %64 = vector.shape_cast %63 : vector<8xf32> to vector<8x1xf32>
    %65 = vector.broadcast %64 : vector<8x1xf32> to vector<8x8xf32>
    %66 = arith.subf %62, %65 : vector<8x8xf32>
    %67 = math.exp %66 : vector<8x8xf32>
    %cst_37 = arith.constant dense<0.000000e+00> : vector<8xf32>
    %68 = vector.multi_reduction <add>, %67, %cst_37 [1] : vector<8x8xf32> to vector<8xf32>
    %69 = vector.shape_cast %68 : vector<8xf32> to vector<8x1xf32>
    %70 = tpu.reciprocal %69 {approx = true} : vector<8x1xf32> -> vector<8x1xf32>
    %71 = arith.mulf %69, %70 : vector<8x1xf32>
    %cst_38 = arith.constant 2.000000e+00 : f32
    %72 = vector.broadcast %cst_38 : f32 to vector<8x1xf32>
    %73 = arith.subf %72, %71 : vector<8x1xf32>
    %74 = arith.mulf %70, %73 : vector<8x1xf32>
    %75 = vector.broadcast %74 : vector<8x1xf32> to vector<8x8xf32>
    %76 = arith.mulf %67, %75 : vector<8x8xf32>
    %c0_39 = arith.constant 0 : index
    %c1 = arith.constant 1 : index
    %c0_40 = arith.constant 0 : index
    %c0_41 = arith.constant 0 : index
    %77 = vector.load %arg11[%c0_39, %c1, %c0_40, %c0_41] : memref<1x4x8x8xf32, #tpu.memory_space<vmem>>, vector<1x1x8x8xf32>
    %78 = vector.shape_cast %77 : vector<1x1x8x8xf32> to vector<8x8xf32>
    %79 = vector.shape_cast %76 : vector<8x8xf32> to vector<1x1x8x8xf32>
    tpu.vector_store %arg11[%c0_39, %c1, %c0_40, %c0_41], %79 {strides = array<i32>} : memref<1x4x8x8xf32, #tpu.memory_space<vmem>>, vector<1x1x8x8xf32>,
    %cst_42 = arith.constant dense<0.000000e+00> : vector<8x8xf32>
    %80 = tpu.matmul %76, %54, %cst_42 {dimension_numbers = #tpu.dot_dimension_numbers<[1], [0], [0], [1], [0, 0, 1, 1], [], []>} : vector<8x8xf32>, vector<8x8xf32>, vector<8x8xf32> -> vector<8x8xf32>
    %81 = vector.extract_strided_slice %6 {offsets = [0, 16], sizes = [8, 8], strides = [1, 1]} : vector<8x32xf32> to vector<8x8xf32>
    %82 = vector.extract_strided_slice %11 {offsets = [0, 16], sizes = [8, 8], strides = [1, 1]} : vector<8x32xf32> to vector<8x8xf32>
    %83 = vector.extract_strided_slice %16 {offsets = [0, 16], sizes = [8, 8], strides = [1, 1]} : vector<8x32xf32> to vector<8x8xf32>
    "tpu.trace_start"() <{level = 10 : i32, message = "id,jd->ij"}> : () -> ()
    %cst_43 = arith.constant dense<0.000000e+00> : vector<8x8xf32>
    %84 = tpu.matmul %81, %82, %cst_43 {dimension_numbers = #tpu.dot_dimension_numbers<[1], [1], [0], [0], [0, 0, 1, 0], [], []>} : vector<8x8xf32>, vector<8x8xf32>, vector<8x8xf32> -> vector<8x8xf32>
    "tpu.trace_stop"() : () -> ()
    %85 = vector.extract_strided_slice %22 {offsets = [0, 2, 0], sizes = [8, 1, 8], strides = [1, 1, 1]} : vector<8x4x8xf32> to vector<8x1x8xf32>
    %86 = vector.shape_cast %85 : vector<8x1x8xf32> to vector<8x8xf32>
    %87 = arith.addf %84, %86 : vector<8x8xf32>
    %cst_44 = arith.constant 0.353553385 : f32
    %88 = vector.broadcast %cst_44 : f32 to vector<8x8xf32>
    %89 = arith.mulf %87, %88 : vector<8x8xf32>
    %90 = vector.broadcast %20 : vector<1x8xf32> to vector<8x8xf32>
    %91 = arith.addf %89, %90 : vector<8x8xf32>
    %cst_45 = arith.constant dense<0xFF800000> : vector<8xf32>
    %92 = vector.multi_reduction <maximumf>, %91, %cst_45 [1] : vector<8x8xf32> to vector<8xf32>
    %93 = vector.shape_cast %92 : vector<8xf32> to vector<8x1xf32>
    %94 = vector.broadcast %93 : vector<8x1xf32> to vector<8x8xf32>
    %95 = arith.subf %91, %94 : vector<8x8xf32>
    %96 = math.exp %95 : vector<8x8xf32>
    %cst_46 = arith.constant dense<0.000000e+00> : vector<8xf32>
    %97 = vector.multi_reduction <add>, %96, %cst_46 [1] : vector<8x8xf32> to vector<8xf32>
    %98 = vector.shape_cast %97 : vector<8xf32> to vector<8x1xf32>
    %99 = tpu.reciprocal %98 {approx = true} : vector<8x1xf32> -> vector<8x1xf32>
    %100 = arith.mulf %98, %99 : vector<8x1xf32>
    %cst_47 = arith.constant 2.000000e+00 : f32
    %101 = vector.broadcast %cst_47 : f32 to vector<8x1xf32>
    %102 = arith.subf %101, %100 : vector<8x1xf32>
    %103 = arith.mulf %99, %102 : vector<8x1xf32>
    %104 = vector.broadcast %103 : vector<8x1xf32> to vector<8x8xf32>
    %105 = arith.mulf %96, %104 : vector<8x8xf32>
    %c0_48 = arith.constant 0 : index
    %c2 = arith.constant 2 : index
    %c0_49 = arith.constant 0 : index
    %c0_50 = arith.constant 0 : index
    %106 = vector.load %arg11[%c0_48, %c2, %c0_49, %c0_50] : memref<1x4x8x8xf32, #tpu.memory_space<vmem>>, vector<1x1x8x8xf32>
    %107 = vector.shape_cast %106 : vector<1x1x8x8xf32> to vector<8x8xf32>
    %108 = vector.shape_cast %105 : vector<8x8xf32> to vector<1x1x8x8xf32>
    tpu.vector_store %arg11[%c0_48, %c2, %c0_49, %c0_50], %108 {strides = array<i32>} : memref<1x4x8x8xf32, #tpu.memory_space<vmem>>, vector<1x1x8x8xf32>,
    %cst_51 = arith.constant dense<0.000000e+00> : vector<8x8xf32>
    %109 = tpu.matmul %105, %83, %cst_51 {dimension_numbers = #tpu.dot_dimension_numbers<[1], [0], [0], [1], [0, 0, 1, 1], [], []>} : vector<8x8xf32>, vector<8x8xf32>, vector<8x8xf32> -> vector<8x8xf32>
    %110 = vector.extract_strided_slice %6 {offsets = [0, 24], sizes = [8, 8], strides = [1, 1]} : vector<8x32xf32> to vector<8x8xf32>
    %111 = vector.extract_strided_slice %11 {offsets = [0, 24], sizes = [8, 8], strides = [1, 1]} : vector<8x32xf32> to vector<8x8xf32>
    %112 = vector.extract_strided_slice %16 {offsets = [0, 24], sizes = [8, 8], strides = [1, 1]} : vector<8x32xf32> to vector<8x8xf32>
    "tpu.trace_start"() <{level = 10 : i32, message = "id,jd->ij"}> : () -> ()
    %cst_52 = arith.constant dense<0.000000e+00> : vector<8x8xf32>
    %113 = tpu.matmul %110, %111, %cst_52 {dimension_numbers = #tpu.dot_dimension_numbers<[1], [1], [0], [0], [0, 0, 1, 0], [], []>} : vector<8x8xf32>, vector<8x8xf32>, vector<8x8xf32> -> vector<8x8xf32>
    "tpu.trace_stop"() : () -> ()
    %114 = vector.extract_strided_slice %22 {offsets = [0, 3, 0], sizes = [8, 1, 8], strides = [1, 1, 1]} : vector<8x4x8xf32> to vector<8x1x8xf32>
    %115 = vector.shape_cast %114 : vector<8x1x8xf32> to vector<8x8xf32>
    %116 = arith.addf %113, %115 : vector<8x8xf32>
    %cst_53 = arith.constant 0.353553385 : f32
    %117 = vector.broadcast %cst_53 : f32 to vector<8x8xf32>
    %118 = arith.mulf %116, %117 : vector<8x8xf32>
    %119 = vector.broadcast %20 : vector<1x8xf32> to vector<8x8xf32>
    %120 = arith.addf %118, %119 : vector<8x8xf32>
    %cst_54 = arith.constant dense<0xFF800000> : vector<8xf32>
    %121 = vector.multi_reduction <maximumf>, %120, %cst_54 [1] : vector<8x8xf32> to vector<8xf32>
    %122 = vector.shape_cast %121 : vector<8xf32> to vector<8x1xf32>
    %123 = vector.broadcast %122 : vector<8x1xf32> to vector<8x8xf32>
    %124 = arith.subf %120, %123 : vector<8x8xf32>
    %125 = math.exp %124 : vector<8x8xf32>
    %cst_55 = arith.constant dense<0.000000e+00> : vector<8xf32>
    %126 = vector.multi_reduction <add>, %125, %cst_55 [1] : vector<8x8xf32> to vector<8xf32>
    %127 = vector.shape_cast %126 : vector<8xf32> to vector<8x1xf32>
    %128 = tpu.reciprocal %127 {approx = true} : vector<8x1xf32> -> vector<8x1xf32>
    %129 = arith.mulf %127, %128 : vector<8x1xf32>
    %cst_56 = arith.constant 2.000000e+00 : f32
    %130 = vector.broadcast %cst_56 : f32 to vector<8x1xf32>
    %131 = arith.subf %130, %129 : vector<8x1xf32>
    %132 = arith.mulf %128, %131 : vector<8x1xf32>
    %133 = vector.broadcast %132 : vector<8x1xf32> to vector<8x8xf32>
    %134 = arith.mulf %125, %133 : vector<8x8xf32>
    %c0_57 = arith.constant 0 : index
    %c3 = arith.constant 3 : index
    %c0_58 = arith.constant 0 : index
    %c0_59 = arith.constant 0 : index
    %135 = vector.load %arg11[%c0_57, %c3, %c0_58, %c0_59] : memref<1x4x8x8xf32, #tpu.memory_space<vmem>>, vector<1x1x8x8xf32>
    %136 = vector.shape_cast %135 : vector<1x1x8x8xf32> to vector<8x8xf32>
    %137 = vector.shape_cast %134 : vector<8x8xf32> to vector<1x1x8x8xf32>
    tpu.vector_store %arg11[%c0_57, %c3, %c0_58, %c0_59], %137 {strides = array<i32>} : memref<1x4x8x8xf32, #tpu.memory_space<vmem>>, vector<1x1x8x8xf32>,
    %cst_60 = arith.constant dense<0.000000e+00> : vector<8x8xf32>
    %138 = tpu.matmul %134, %112, %cst_60 {dimension_numbers = #tpu.dot_dimension_numbers<[1], [0], [0], [1], [0, 0, 1, 1], [], []>} : vector<8x8xf32>, vector<8x8xf32>, vector<8x8xf32> -> vector<8x8xf32>
    %139 = vector.shape_cast %47 : vector<8x8xf32> to vector<8x1x8xf32>
    %140 = vector.shape_cast %76 : vector<8x8xf32> to vector<8x1x8xf32>
    %141 = vector.shape_cast %105 : vector<8x8xf32> to vector<8x1x8xf32>
    %142 = vector.shape_cast %134 : vector<8x8xf32> to vector<8x1x8xf32>
    %143 = tpu.concatenate %139, %140, %141, %142 in 1 : vector<8x1x8xf32>, vector<8x1x8xf32>, vector<8x1x8xf32>, vector<8x1x8xf32> -> vector<8x4x8xf32>
    "tpu.trace_start"() <{level = 10 : i32, message = "ihj,ijd->ihd"}> : () -> ()
    %cst_61 = arith.constant dense<0.000000e+00> : vector<8x4x8xf32>
    %144 = tpu.matmul %143, %18, %cst_61 {dimension_numbers = #tpu.dot_dimension_numbers<[2], [1], [1], [2], [0, 0, 0, 1, 1, 2], [0], [0]>} : vector<8x4x8xf32>, vector<8x8x8xf32>, vector<8x4x8xf32> -> vector<8x4x8xf32>
    "tpu.trace_stop"() : () -> ()
    %145 = vector.shape_cast %51 : vector<8x8xf32> to vector<8x1x8xf32>
    %146 = vector.shape_cast %80 : vector<8x8xf32> to vector<8x1x8xf32>
    %147 = vector.shape_cast %109 : vector<8x8xf32> to vector<8x1x8xf32>
    %148 = vector.shape_cast %138 : vector<8x8xf32> to vector<8x1x8xf32>
    %149 = tpu.concatenate %145, %146, %147, %148 in 1 : vector<8x1x8xf32>, vector<8x1x8xf32>, vector<8x1x8xf32>, vector<8x1x8xf32> -> vector<8x4x8xf32>
    %150 = arith.addf %149, %144 : vector<8x4x8xf32>
    %151 = vector.shape_cast %150 : vector<8x4x8xf32> to vector<8x32xf32>
    %c0_62 = arith.constant 0 : index
    %c0_63 = arith.constant 0 : index
    %c0_64 = arith.constant 0 : index
    %152 = vector.load %arg10[%c0_62, %c0_63, %c0_64] : memref<1x8x32xf32, #tpu.memory_space<vmem>>, vector<1x8x32xf32>
    %153 = vector.shape_cast %152 : vector<1x8x32xf32> to vector<8x32xf32>
    %154 = vector.shape_cast %151 : vector<8x32xf32> to vector<1x8x32xf32>
    tpu.vector_store %arg10[%c0_62, %c0_63, %c0_64], %154 {strides = array<i32>} : memref<1x8x32xf32, #tpu.memory_space<vmem>>, vector<1x8x32xf32>,
    return
  }
  func.func @transform_0(%arg0: i32) -> (i32, i32, i32) {
    %c0_i32 = arith.constant 0 : i32
    %c0_i32_0 = arith.constant 0 : i32
    %c0_i32_1 = arith.constant 0 : i32
    return %arg0, %c0_i32, %c0_i32_0 : i32, i32, i32
  }
  func.func @transform_1(%arg0: i32) -> (i32, i32) {
    %c0_i32 = arith.constant 0 : i32
    %c0_i32_0 = arith.constant 0 : i32
    %c0_i32_1 = arith.constant 0 : i32
    return %c0_i32, %c0_i32_0 : i32, i32
  }
  func.func @transform_2(%arg0: i32) -> (i32, i32) {
    %c0_i32 = arith.constant 0 : i32
    %c0_i32_0 = arith.constant 0 : i32
    %c0_i32_1 = arith.constant 0 : i32
    return %c0_i32, %c0_i32_0 : i32, i32
  }
  func.func @transform_3(%arg0: i32) -> (i32, i32) {
    %c0_i32 = arith.constant 0 : i32
    %c0_i32_0 = arith.constant 0 : i32
    %c0_i32_1 = arith.constant 0 : i32
    return %c0_i32, %c0_i32_0 : i32, i32
  }
  func.func @transform_4(%arg0: i32) -> (i32, i32) {
    %c0_i32 = arith.constant 0 : i32
    %c0_i32_0 = arith.constant 0 : i32
    %c0_i32_1 = arith.constant 0 : i32
    return %c0_i32, %c0_i32_0 : i32, i32
  }
  func.func @transform_5(%arg0: i32) -> (i32, i32) {
    %c0_i32 = arith.constant 0 : i32
    %c0_i32_0 = arith.constant 0 : i32
    %c0_i32_1 = arith.constant 0 : i32
    return %c0_i32, %c0_i32_0 : i32, i32
  }
  func.func @transform_6(%arg0: i32) -> (i32, i32) {
    %c0_i32 = arith.constant 0 : i32
    %c0_i32_0 = arith.constant 0 : i32
    %c0_i32_1 = arith.constant 0 : i32
    return %c0_i32, %c0_i32_0 : i32, i32
  }
  func.func @transform_7(%arg0: i32) -> (i32, i32, i32) {
    %c0_i32 = arith.constant 0 : i32
    %c0_i32_0 = arith.constant 0 : i32
    %c0_i32_1 = arith.constant 0 : i32
    return %arg0, %c0_i32, %c0_i32_0 : i32, i32, i32
  }
  func.func @transform_8(%arg0: i32) -> (i32, i32, i32, i32) {
    %c0_i32 = arith.constant 0 : i32
    %c0_i32_0 = arith.constant 0 : i32
    %c0_i32_1 = arith.constant 0 : i32
    %c0_i32_2 = arith.constant 0 : i32
    return %arg0, %c0_i32, %c0_i32_0, %c0_i32_1 : i32, i32, i32, i32
  }
  func.func @transform_9(%arg0: i32) -> (i32, i32, i32) {
    %c0_i32 = arith.constant 0 : i32
    %c0_i32_0 = arith.constant 0 : i32
    %c0_i32_1 = arith.constant 0 : i32
    return %arg0, %c0_i32, %c0_i32_0 : i32, i32, i32
  }
  func.func @transform_10(%arg0: i32) -> (i32, i32, i32, i32) {
    %c0_i32 = arith.constant 0 : i32
    %c0_i32_0 = arith.constant 0 : i32
    %c0_i32_1 = arith.constant 0 : i32
    %c0_i32_2 = arith.constant 0 : i32
    return %arg0, %c0_i32, %c0_i32_0, %c0_i32_1 : i32, i32, i32, i32
  }
}

</mosaic_0001>

<llo_original>
// kernel: tpu_custom_call.1
$region0: #{tpu_custom_call.1}
  #allocation0 [shape = 'u32[]', space=smem, size = 0x4, offset = 0x4, fixed_abs, tag = 'smem constant byte address 0x4 - core index']
  #allocation1 [shape = 'u32[144,128]{1,0:T(1,128)}', space=vmem, size = 0x12000, scoped, tag = 'internal scratch']
  %s0 = inlined_call_operand.hbm [shape: f32[2,8,32], index: 0, kind: input, shape index: {}]
  %s1 = inlined_call_operand.hbm [shape: f32[32,32], index: 1, kind: input, shape index: {}]
  %s2 = inlined_call_operand.hbm [shape: f32[32,32], index: 2, kind: input, shape index: {}]
  %s3 = inlined_call_operand.hbm [shape: f32[32,32], index: 3, kind: input, shape index: {}]
  %s4 = inlined_call_operand.vmem [shape: f32[1,32], index: 4, kind: input, shape index: {}]
  %s5 = inlined_call_operand.vmem [shape: f32[1,32], index: 5, kind: input, shape index: {}]
  %s6 = inlined_call_operand.vmem [shape: f32[1,32], index: 6, kind: input, shape index: {}]
  %s7 = inlined_call_operand.vmem [shape: f32[2,1,8], index: 7, kind: input, shape index: {}]
  %s8 = inlined_call_operand.hbm [shape: f32[2,8,8,8], index: 8, kind: input, shape index: {}]
  %s9 = inlined_call_operand.hbm [shape: f32[2,8,32], index: 9, kind: output, shape index: {0}]
  %s10 = inlined_call_operand.hbm [shape: f32[2,4,8,8], index: 10, kind: output, shape index: {1}]
  %11 = xla_tuple %s9, %s10
  %s12 = sld [smem:[#allocation0]]
  $region97: #{tpu_custom_call.1} parent=0
    _
  %s14 = ssub.s32 1, %s12
  %s15 = scalar_select 0, %s14, %s12
  $region1: #{tpu_custom_call.1} parent=0
    #allocation2 [shape = 'u8[8192]{0}', space=vmem, size = 0x2000, scoped, tag = 'input window, operand 0']
    #allocation3 [shape = 's32[2]{0}', space=sflag, size = 0x8, scoped, tag = 'scoped memory for tpu_custom_call.1']
    #allocation4 [shape = 's32[2]{0}', space=sflag, size = 0x8, scoped, tag = 'scoped memory for tpu_custom_call.1']
    #allocation5 [shape = 'u8[16384]{0}', space=vmem, size = 0x4000, scoped, tag = 'input window, operand 1, single buffered']
    #allocation6 [shape = 's32[1]{0}', space=sflag, size = 0x4, scoped, tag = 'scoped memory for tpu_custom_call.1']
    #allocation7 [shape = 'u8[16384]{0}', space=vmem, size = 0x4000, scoped, tag = 'input window, operand 2, single buffered']
    #allocation8 [shape = 'u8[16384]{0}', space=vmem, size = 0x4000, scoped, tag = 'input window, operand 3, single buffered']
    #allocation9 [shape = 's32[1]{0}', space=sflag, size = 0x4, scoped, tag = 'scoped memory for tpu_custom_call.1']
    #allocation10 [shape = 'u8[65536]{0}', space=vmem, size = 0x10000, scoped, tag = 'input window, operand 8']
    #allocation11 [shape = 'u8[8192]{0}', space=vmem, size = 0x2000, scoped, tag = 'output window, operand 0']
    #allocation12 [shape = 'u8[32768]{0}', space=vmem, size = 0x8000, scoped, tag = 'output window, operand 1']
    #allocation13 [shape = 's32[2]{0}', space=sflag, size = 0x8, scoped, tag = 'scoped memory for tpu_custom_call.1']
    %16 = vsyncpa [#allocation3], 0
    %s17 = scalar_lea.sflag [#allocation3], 1
    %18 = vsyncpa %s17, 0
    %19 = vsyncpa [#allocation6], 0
    %20 = vsyncpa [#allocation9], 0
    %21 = vsyncpa [#allocation4], 0
    %s22 = scalar_lea.sflag [#allocation4], 1
    %23 = vsyncpa %s22, 0
    %24 = vsyncpa [#allocation13], 0
    %s25 = scalar_lea.sflag [#allocation13], 1
    %26 = vsyncpa %s25, 0
    loop: start=0, step=1, limit=4
    $region2: #{tpu_custom_call.1} parent=1 // loop_pre_header
      _
    $region3: #{tpu_custom_call.1} parent=1 // loop_header
      %s28 = sphi 0, %s32
      %p29 = scmp.ge.s32.totalorder %s28, 4
      %s38 = sphi 0, %s40
      %s41 = sphi 0, %s38
      %s42 = sphi 0, %s41
      %s58 = sphi 0, %s42
      %s62 = sphi 0, %s62
      %s64 = sphi 0, %s62
      %s65 = sphi 0, %s64
      %s79 = sphi 0, %s65
      %s83 = sphi 0, %s83
      %s85 = sphi 0, %s83
      %s86 = sphi 0, %s85
      %s100 = sphi 0, %s86
      %s104 = sphi 0, %s104
      %s106 = sphi 0, %s104
      %s107 = sphi 0, %s106
      %s121 = sphi 0, %s107
      %s125 = sphi 0, %s125
      %s127 = sphi 0, %s125
      %s128 = sphi 0, %s127
      %s142 = sphi 0, %s128
      %s146 = sphi 0, %s146
      %s148 = sphi 0, %s146
      %s149 = sphi 0, %s148
      %s163 = sphi 0, %s149
      %s167 = sphi 0, %s167
      %s169 = sphi 0, %s167
      %s170 = sphi 0, %s169
      %s184 = sphi 0, %s170
      %s190 = sphi 0, %s192
      %s193 = sphi 0, %s190
      %s194 = sphi 0, %s193
      %s210 = sphi 0, %s194
      %s216 = sphi 0, %s218
      %s219 = sphi 0, %s216
      %s220 = sphi 0, %s219
      %s236 = sphi 0, %s220
      %s242 = sphi 0, %s244
      %s245 = sphi 0, %s242
      %s246 = sphi 0, %s245
      %s262 = sphi 0, %s246
      %s268 = sphi 0, %s270
      %s271 = sphi 0, %s268
      %s272 = sphi 0, %s271
      %s288 = sphi 0, %s272
    $region4: #{tpu_custom_call.1} parent=1 // loop_header_branch
      %31 = sbr.rel (%p29) target = $region8
    $region5: #{tpu_custom_call.1} parent=1 // loop_body
      %s33 = ssub.s32 %s28, 1
      %s34 = ssub.s32 %s28, 2
      %s35 = sadd.s32 %s28, 1
      %s36 = ssub.s32 %s28, %s35
      %p37 = scmp.eq.s32.totalorder %s36, 0
      %s39 = sadd.s32 %s38, 1
      %s40 = scalar_select %p37, %s38, %s39
      %p43 = pneg %p37
      %p44 = scmp.eq.s32.totalorder %s28, 1
      %p45 = por %p43, %p44
      %p46 = scmp.ne.s32.totalorder %s38, %s41
      %p47 = scmp.eq.s32.totalorder %s28, 0
      %p48 = por %p46, %p47
      %p49 = scmp.ne.s32.totalorder %s38, %s41
      %p50 = scmp.eq.s32.totalorder %s33, 1
      %p51 = por %p49, %p50
      %p52 = scmp.ne.s32.totalorder %s41, %s42
      %p53 = scmp.eq.s32.totalorder %s33, 0
      %p54 = por %p52, %p53
      %p55 = scmp.ne.s32.totalorder %s41, %s42
      %p56 = scmp.eq.s32.totalorder %s34, 1
      %p57 = por %p55, %p56
      %p59 = scmp.ne.s32.totalorder %s42, %s58
      %p60 = scmp.eq.s32.totalorder %s34, 0
      %p61 = por %p59, %p60
      %s63 = sadd.s32 %s62, 1
      %p66 = scmp.eq.s32.totalorder %s28, 1
      %p67 = scmp.ne.s32.totalorder %s62, %s64
      %p68 = scmp.eq.s32.totalorder %s28, 0
      %p69 = por %p67, %p68
      %p70 = scmp.ne.s32.totalorder %s62, %s64
      %p71 = scmp.eq.s32.totalorder %s33, 1
      %p72 = por %p70, %p71
      %p73 = scmp.ne.s32.totalorder %s64, %s65
      %p74 = scmp.eq.s32.totalorder %s33, 0
      %p75 = por %p73, %p74
      %p76 = scmp.ne.s32.totalorder %s64, %s65
      %p77 = scmp.eq.s32.totalorder %s34, 1
      %p78 = por %p76, %p77
      %p80 = scmp.ne.s32.totalorder %s65, %s79
      %p81 = scmp.eq.s32.totalorder %s34, 0
      %p82 = por %p80, %p81
      %s84 = sadd.s32 %s83, 1
      %p87 = scmp.eq.s32.totalorder %s28, 1
      %p88 = scmp.ne.s32.totalorder %s83, %s85
      %p89 = scmp.eq.s32.totalorder %s28, 0
      %p90 = por %p88, %p89
      %p91 = scmp.ne.s32.totalorder %s83, %s85
      %p92 = scmp.eq.s32.totalorder %s33, 1
      %p93 = por %p91, %p92
      %p94 = scmp.ne.s32.totalorder %s85, %s86
      %p95 = scmp.eq.s32.totalorder %s33, 0
      %p96 = por %p94, %p95
      %p97 = scmp.ne.s32.totalorder %s85, %s86
      %p98 = scmp.eq.s32.totalorder %s34, 1
      %p99 = por %p97, %p98
      %p101 = scmp.ne.s32.totalorder %s86, %s100
      %p102 = scmp.eq.s32.totalorder %s34, 0
      %p103 = por %p101, %p102
      %s105 = sadd.s32 %s104, 1
      %p108 = scmp.eq.s32.totalorder %s28, 1
      %p109 = scmp.ne.s32.totalorder %s104, %s106
      %p110 = scmp.eq.s32.totalorder %s28, 0
      %p111 = por %p109, %p110
      %p112 = scmp.ne.s32.totalorder %s104, %s106
      %p113 = scmp.eq.s32.totalorder %s33, 1
      %p114 = por %p112, %p113
      %p115 = scmp.ne.s32.totalorder %s106, %s107
      %p116 = scmp.eq.s32.totalorder %s33, 0
      %p117 = por %p115, %p116
      %p118 = scmp.ne.s32.totalorder %s106, %s107
      %p119 = scmp.eq.s32.totalorder %s34, 1
      %p120 = por %p118, %p119
      %p122 = scmp.ne.s32.totalorder %s107, %s121
      %p123 = scmp.eq.s32.totalorder %s34, 0
      %p124 = por %p122, %p123
      %s126 = sadd.s32 %s125, 1
      %p129 = scmp.eq.s32.totalorder %s28, 1
      %p130 = scmp.ne.s32.totalorder %s125, %s127
      %p131 = scmp.eq.s32.totalorder %s28, 0
      %p132 = por %p130, %p131
      %p133 = scmp.ne.s32.totalorder %s125, %s127
      %p134 = scmp.eq.s32.totalorder %s33, 1
      %p135 = por %p133, %p134
      %p136 = scmp.ne.s32.totalorder %s127, %s128
      %p137 = scmp.eq.s32.totalorder %s33, 0
      %p138 = por %p136, %p137
      %p139 = scmp.ne.s32.totalorder %s127, %s128
      %p140 = scmp.eq.s32.totalorder %s34, 1
      %p141 = por %p139, %p140
      %p143 = scmp.ne.s32.totalorder %s128, %s142
      %p144 = scmp.eq.s32.totalorder %s34, 0
      %p145 = por %p143, %p144
      %s147 = sadd.s32 %s146, 1
      %p150 = scmp.eq.s32.totalorder %s28, 1
      %p151 = scmp.ne.s32.totalorder %s146, %s148
      %p152 = scmp.eq.s32.totalorder %s28, 0
      %p153 = por %p151, %p152
      %p154 = scmp.ne.s32.totalorder %s146, %s148
      %p155 = scmp.eq.s32.totalorder %s33, 1
      %p156 = por %p154, %p155
      %p157 = scmp.ne.s32.totalorder %s148, %s149
      %p158 = scmp.eq.s32.totalorder %s33, 0
      %p159 = por %p157, %p158
      %p160 = scmp.ne.s32.totalorder %s148, %s149
      %p161 = scmp.eq.s32.totalorder %s34, 1
      %p162 = por %p160, %p161
      %p164 = scmp.ne.s32.totalorder %s149, %s163
      %p165 = scmp.eq.s32.totalorder %s34, 0
      %p166 = por %p164, %p165
      %s168 = sadd.s32 %s167, 1
      %p171 = scmp.eq.s32.totalorder %s28, 1
      %p172 = scmp.ne.s32.totalorder %s167, %s169
      %p173 = scmp.eq.s32.totalorder %s28, 0
      %p174 = por %p172, %p173
      %p175 = scmp.ne.s32.totalorder %s167, %s169
      %p176 = scmp.eq.s32.totalorder %s33, 1
      %p177 = por %p175, %p176
      %p178 = scmp.ne.s32.totalorder %s169, %s170
      %p179 = scmp.eq.s32.totalorder %s33, 0
      %p180 = por %p178, %p179
      %p181 = scmp.ne.s32.totalorder %s169, %s170
      %p182 = scmp.eq.s32.totalorder %s34, 1
      %p183 = por %p181, %p182
      %p185 = scmp.ne.s32.totalorder %s170, %s184
      %p186 = scmp.eq.s32.totalorder %s34, 0
      %p187 = por %p185, %p186
      %s188 = ssub.s32 %s28, %s35
      %p189 = scmp.eq.s32.totalorder %s188, 0
      %s191 = sadd.s32 %s190, 1
      %s192 = scalar_select %p189, %s190, %s191
      %p195 = pneg %p189
      %p196 = scmp.eq.s32.totalorder %s28, 1
      %p197 = por %p195, %p196
      %p198 = scmp.ne.s32.totalorder %s190, %s193
      %p199 = scmp.eq.s32.totalorder %s28, 0
      %p200 = por %p198, %p199
      %p201 = scmp.ne.s32.totalorder %s190, %s193
      %p202 = scmp.eq.s32.totalorder %s33, 1
      %p203 = por %p201, %p202
      %p204 = scmp.ne.s32.totalorder %s193, %s194
      %p205 = scmp.eq.s32.totalorder %s33, 0
      %p206 = por %p204, %p205
      %p207 = scmp.ne.s32.totalorder %s193, %s194
      %p208 = scmp.eq.s32.totalorder %s34, 1
      %p209 = por %p207, %p208
      %p211 = scmp.ne.s32.totalorder %s194, %s210
      %p212 = scmp.eq.s32.totalorder %s34, 0
      %p213 = por %p211, %p212
      %s214 = ssub.s32 %s28, %s35
      %p215 = scmp.eq.s32.totalorder %s214, 0
      %s217 = sadd.s32 %s216, 1
      %s218 = scalar_select %p215, %s216, %s217
      %p221 = pneg %p215
      %p222 = scmp.eq.s32.totalorder %s28, 1
      %p223 = por %p221, %p222
      %p224 = scmp.ne.s32.totalorder %s216, %s219
      %p225 = scmp.eq.s32.totalorder %s28, 0
      %p226 = por %p224, %p225
      %p227 = scmp.ne.s32.totalorder %s216, %s219
      %p228 = scmp.eq.s32.totalorder %s33, 1
      %p229 = por %p227, %p228
      %p230 = scmp.ne.s32.totalorder %s219, %s220
      %p231 = scmp.eq.s32.totalorder %s33, 0
      %p232 = por %p230, %p231
      %p233 = scmp.ne.s32.totalorder %s219, %s220
      %p234 = scmp.eq.s32.totalorder %s34, 1
      %p235 = por %p233, %p234
      %p237 = scmp.ne.s32.totalorder %s220, %s236
      %p238 = scmp.eq.s32.totalorder %s34, 0
      %p239 = por %p237, %p238
      %s240 = ssub.s32 %s28, %s35
      %p241 = scmp.eq.s32.totalorder %s240, 0
      %s243 = sadd.s32 %s242, 1
      %s244 = scalar_select %p241, %s242, %s243
      %p247 = pneg %p241
      %p248 = scmp.eq.s32.totalorder %s28, 1
      %p249 = por %p247, %p248
      %p250 = scmp.ne.s32.totalorder %s242, %s245
      %p251 = scmp.eq.s32.totalorder %s28, 0
      %p252 = por %p250, %p251
      %p253 = scmp.ne.s32.totalorder %s242, %s245
      %p254 = scmp.eq.s32.totalorder %s33, 1
      %p255 = por %p253, %p254
      %p256 = scmp.ne.s32.totalorder %s245, %s246
      %p257 = scmp.eq.s32.totalorder %s33, 0
      %p258 = por %p256, %p257
      %p259 = scmp.ne.s32.totalorder %s245, %s246
      %p260 = scmp.eq.s32.totalorder %s34, 1
      %p261 = por %p259, %p260
      %p263 = scmp.ne.s32.totalorder %s246, %s262
      %p264 = scmp.eq.s32.totalorder %s34, 0
      %p265 = por %p263, %p264
      %s266 = ssub.s32 %s28, %s35
      %p267 = scmp.eq.s32.totalorder %s266, 0
      %s269 = sadd.s32 %s268, 1
      %s270 = scalar_select %p267, %s268, %s269
      %p273 = pneg %p267
      %p274 = scmp.eq.s32.totalorder %s28, 1
      %p275 = por %p273, %p274
      %p276 = scmp.ne.s32.totalorder %s268, %s271
      %p277 = scmp.eq.s32.totalorder %s28, 0
      %p278 = por %p276, %p277
      %p279 = scmp.ne.s32.totalorder %s268, %s271
      %p280 = scmp.eq.s32.totalorder %s33, 1
      %p281 = por %p279, %p280
      %p282 = scmp.ne.s32.totalorder %s271, %s272
      %p283 = scmp.eq.s32.totalorder %s33, 0
      %p284 = por %p282, %p283
      %p285 = scmp.ne.s32.totalorder %s271, %s272
      %p286 = scmp.eq.s32.totalorder %s34, 1
      %p287 = por %p285, %p286
      %p289 = scmp.ne.s32.totalorder %s272, %s288
      %p290 = scmp.eq.s32.totalorder %s34, 0
      %p291 = por %p289, %p290
      %p292 = scmp.le.s32.totalorder 1, %s28
      %p293 = scmp.lt.s32.totalorder %s28, 3
      %p294 = pnand %p292, %p293
      %p295 = pneg %p294
      // Predicated region
      $region9: #{tpu_custom_call.1} parent=5 // pred_check
        _
      $region10: #{tpu_custom_call.1} parent=5 // pred_check_branch
        %297 = sbr.rel (%p294) target = $region12
      $region11: #{tpu_custom_call.1} parent=5 // pred_region
        %s298 = ssub.s32 %s28, 1
        // Predicated region
        $region13: #{tpu_custom_call.1} parent=11 // pred_check
          %p299 = pneg %p75
        $region14: #{tpu_custom_call.1} parent=11 // pred_check_branch
          %301 = sbr.rel (%p299) target = $region16
        $region15: #{tpu_custom_call.1} parent=11 // pred_region
          %s303 = ssub.s32 512, 512
          %304 = vsyncadd [#allocation6], %s303
          %s305 = sshll.u32 [#allocation5], 4
          %s306 = int_to_ptr.vmem [resolvable:$true] %s305
          %311 = dma.hbm_to_vmem [thread:$0]  %s1, 512, %s306, [#allocation6], 128, 128, 8
        $region16: #{tpu_custom_call.1} parent=11 // pred_fallthru
          _
        // Predicated region
        $region17: #{tpu_custom_call.1} parent=11 // pred_check
          %p312 = pneg %p96
        $region18: #{tpu_custom_call.1} parent=11 // pred_check_branch
          %314 = sbr.rel (%p312) target = $region20
        $region19: #{tpu_custom_call.1} parent=11 // pred_region
          %s316 = ssub.s32 512, 512
          %317 = vsyncadd [#allocation6], %s316
          %s318 = sshll.u32 [#allocation7], 4
          %s319 = int_to_ptr.vmem [resolvable:$true] %s318
          %324 = dma.hbm_to_vmem [thread:$0]  %s2, 512, %s319, [#allocation6], 128, 128, 8
        $region20: #{tpu_custom_call.1} parent=11 // pred_fallthru
          _
        // Predicated region
        $region21: #{tpu_custom_call.1} parent=11 // pred_check
          %p325 = pneg %p117
        $region22: #{tpu_custom_call.1} parent=11 // pred_check_branch
          %327 = sbr.rel (%p325) target = $region24
        $region23: #{tpu_custom_call.1} parent=11 // pred_region
          %s329 = ssub.s32 512, 512
          %330 = vsyncadd [#allocation9], %s329
          %s331 = sshll.u32 [#allocation8], 4
          %s332 = int_to_ptr.vmem [resolvable:$true] %s331
          %337 = dma.hbm_to_vmem [thread:$0]  %s3, 512, %s332, [#allocation9], 128, 128, 8
        $region24: #{tpu_custom_call.1} parent=11 // pred_fallthru
          _
        // Predicated region
        $region25: #{tpu_custom_call.1} parent=11 // pred_check
          %p338 = pneg %p138
        $region26: #{tpu_custom_call.1} parent=11 // pred_check_branch
          %340 = sbr.rel (%p338) target = $region28
        $region27: #{tpu_custom_call.1} parent=11 // pred_region
          _
        $region28: #{tpu_custom_call.1} parent=11 // pred_fallthru
          _
        // Predicated region
        $region29: #{tpu_custom_call.1} parent=11 // pred_check
          %p341 = pneg %p159
        $region30: #{tpu_custom_call.1} parent=11 // pred_check_branch
          %343 = sbr.rel (%p341) target = $region32
        $region31: #{tpu_custom_call.1} parent=11 // pred_region
          _
        $region32: #{tpu_custom_call.1} parent=11 // pred_fallthru
          _
        // Predicated region
        $region33: #{tpu_custom_call.1} parent=11 // pred_check
          %p344 = pneg %p180
        $region34: #{tpu_custom_call.1} parent=11 // pred_check_branch
          %346 = sbr.rel (%p344) target = $region36
        $region35: #{tpu_custom_call.1} parent=11 // pred_region
          _
        $region36: #{tpu_custom_call.1} parent=11 // pred_fallthru
          _
      $region12: #{tpu_custom_call.1} parent=5 // pred_fallthru
        _
      %p347 = scmp.lt.s32.totalorder %s28, 2
      // Predicated region
      $region37: #{tpu_custom_call.1} parent=5 // pred_check
        %p348 = pneg %p347
      $region38: #{tpu_custom_call.1} parent=5 // pred_check_branch
        %350 = sbr.rel (%p348) target = $region40
      $region39: #{tpu_custom_call.1} parent=5 // pred_region
        // Predicated region
        $region41: #{tpu_custom_call.1} parent=39 // pred_check
          %p351 = pneg %p48
        $region42: #{tpu_custom_call.1} parent=39 // pred_check_branch
          %353 = sbr.rel (%p351) target = $region44
        $region43: #{tpu_custom_call.1} parent=39 // pred_region
          %s354 = sand.u32 %s28, 1
          %s355 = scalar_lea.sflag [#allocation3], %s354
          %s356 = sand.u32 %s38, 1
          %s357 = smul.addr %s356, 8
          %s358 = scalar_lea.vmem [#allocation2], %s357
          %s360 = ssub.s32 128, 128
          %361 = vsyncadd %s355, %s360
          %s362 = smul.addr %s28, 128
          %s363 = scalar_lea.hbm %s0, %s362
          %s365 = sshll.u32 %s358, 4
          %s366 = int_to_ptr.vmem [resolvable:$true] %s365
          %368 = dma.hbm_to_vmem [thread:$0]  %s363, 128, %s366, %s355
        $region44: #{tpu_custom_call.1} parent=39 // pred_fallthru
          _
        // Predicated region
        $region45: #{tpu_custom_call.1} parent=39 // pred_check
          %p369 = pneg %p200
        $region46: #{tpu_custom_call.1} parent=39 // pred_check_branch
          %371 = sbr.rel (%p369) target = $region48
        $region47: #{tpu_custom_call.1} parent=39 // pred_region
          %p372 = scmp.lt.s32.totalorder %s28, 1
          %s373 = scalar_select %p372, %s28, 1
          %s374 = scalar_lea.vmem %s7, %s373
        $region48: #{tpu_custom_call.1} parent=39 // pred_fallthru
          _
        // Predicated region
        $region49: #{tpu_custom_call.1} parent=39 // pred_check
          %p375 = pneg %p226
        $region50: #{tpu_custom_call.1} parent=39 // pred_check_branch
          %377 = sbr.rel (%p375) target = $region52
        $region51: #{tpu_custom_call.1} parent=39 // pred_region
          %s378 = sand.u32 %s28, 1
          %s379 = scalar_lea.sflag [#allocation3], %s378
          %s380 = sand.u32 %s216, 1
          %s381 = smul.addr %s380, 64
          %s382 = scalar_lea.vmem [#allocation10], %s381
          %s384 = ssub.s32 1024, 1024
          %385 = vsyncadd %s379, %s384
          %s386 = smul.addr %s28, 8
          %s387 = smul.addr %s386, 128
          %s388 = scalar_lea.hbm %s8, %s387
          %s389 = sshll.u32 %s382, 4
          %s390 = int_to_ptr.vmem [resolvable:$true] %s389
          %395 = dma.hbm_to_vmem [thread:$0]  %s388, 1024, %s390, %s379, 128, 128, 8
        $region52: #{tpu_custom_call.1} parent=39 // pred_fallthru
          _
      $region40: #{tpu_custom_call.1} parent=5 // pred_fallthru
        _
      %p396 = scmp.le.s32.totalorder 1, %s28
      %p397 = scmp.lt.s32.totalorder %s28, 3
      %p398 = pnand %p396, %p397
      %p399 = pneg %p398
      // Predicated region
      $region53: #{tpu_custom_call.1} parent=5 // pred_check
        _
      $region54: #{tpu_custom_call.1} parent=5 // pred_check_branch
        %401 = sbr.rel (%p398) target = $region56
      $region55: #{tpu_custom_call.1} parent=5 // pred_region
        %s402 = ssub.s32 %s28, 1
        %s403 = sand.u32 %s33, 1
        %s404 = scalar_lea.sflag [#allocation3], %s403
        %s405 = sand.u32 %s41, 1
        %s406 = smul.addr %s405, 8
        %s407 = scalar_lea.vmem [#allocation2], %s406
        // Predicated region
        $region57: #{tpu_custom_call.1} parent=55 // pred_check
          %p408 = pneg %p54
        $region58: #{tpu_custom_call.1} parent=55 // pred_check_branch
          %410 = sbr.rel (%p408) target = $region60
        $region59: #{tpu_custom_call.1} parent=55 // pred_region
          %411 = dma.done %s404, 128
        $region60: #{tpu_custom_call.1} parent=55 // pred_fallthru
          _
        // Predicated region
        $region61: #{tpu_custom_call.1} parent=55 // pred_check
          %p412 = pneg %p75
        $region62: #{tpu_custom_call.1} parent=55 // pred_check_branch
          %414 = sbr.rel (%p412) target = $region64
        $region63: #{tpu_custom_call.1} parent=55 // pred_region
          %415 = dma.done [#allocation6], 512
        $region64: #{tpu_custom_call.1} parent=55 // pred_fallthru
          _
        // Predicated region
        $region65: #{tpu_custom_call.1} parent=55 // pred_check
          %p416 = pneg %p96
        $region66: #{tpu_custom_call.1} parent=55 // pred_check_branch
          %418 = sbr.rel (%p416) target = $region68
        $region67: #{tpu_custom_call.1} parent=55 // pred_region
          %419 = dma.done [#allocation6], 512
        $region68: #{tpu_custom_call.1} parent=55 // pred_fallthru
          _
        // Predicated region
        $region69: #{tpu_custom_call.1} parent=55 // pred_check
          %p420 = pneg %p117
        $region70: #{tpu_custom_call.1} parent=55 // pred_check_branch
          %422 = sbr.rel (%p420) target = $region72
        $region71: #{tpu_custom_call.1} parent=55 // pred_region
          %423 = dma.done [#allocation9], 512
        $region72: #{tpu_custom_call.1} parent=55 // pred_fallthru
          _
        %s424 = sand.u32 %s33, 1
        %s425 = scalar_lea.sflag [#allocation3], %s424
        %s426 = sand.u32 %s219, 1
        %s427 = smul.addr %s426, 64
        %s428 = scalar_lea.vmem [#allocation10], %s427
        // Predicated region
        $region73: #{tpu_custom_call.1} parent=55 // pred_check
          %p429 = pneg %p232
        $region74: #{tpu_custom_call.1} parent=55 // pred_check_branch
          %431 = sbr.rel (%p429) target = $region76
        $region75: #{tpu_custom_call.1} parent=55 // pred_region
          %432 = dma.done %s425, 1024
        $region76: #{tpu_custom_call.1} parent=55 // pred_fallthru
          _
        %s433 = sand.u32 %s33, 1
        %s434 = scalar_lea.sflag [#allocation3], %s433
        %s435 = sand.u32 %s41, 1
        %s436 = smul.addr %s435, 8
        %s437 = scalar_lea.vmem [#allocation2], %s436
        %p438 = pneg %p54
        %p439 = pneg %p51
        %p440 = pneg %p75
        %p441 = pneg %p72
        %p442 = pneg %p96
        %p443 = pneg %p93
        %p444 = pneg %p117
        %p445 = pneg %p114
        %p446 = pneg %p138
        %p447 = pneg %p135
        %p448 = pneg %p159
        %p449 = pneg %p156
        %p450 = pneg %p180
        %p451 = pneg %p177
        %p452 = scmp.lt.s32.totalorder %s33, 1
        %s453 = scalar_select %p452, %s33, 1
        %s454 = scalar_lea.vmem %s7, %s453
        %p455 = pneg %p206
        %p456 = pneg %p203
        %s457 = sand.u32 %s33, 1
        %s458 = scalar_lea.sflag [#allocation3], %s457
        %s459 = sand.u32 %s219, 1
        %s460 = smul.addr %s459, 64
        %s461 = scalar_lea.vmem [#allocation10], %s460
        %p462 = pneg %p232
        %p463 = pneg %p229
        %p464 = pneg %p258
        %p465 = pneg %p255
        %s466 = sand.u32 %s245, 1
        %s467 = scalar_lea.sflag [#allocation4], %s466
        %s468 = sand.u32 %s245, 1
        %s469 = smul.addr %s468, 8
        %s470 = scalar_lea.vmem [#allocation11], %s469
        %p471 = pneg %p284
        %p472 = pneg %p281
        %s473 = sand.u32 %s271, 1
        %s474 = scalar_lea.sflag [#allocation13], %s473
        %s475 = sand.u32 %s271, 1
        %s476 = smul.addr %s475, 32
        %s477 = scalar_lea.vmem [#allocation12], %s476
        %p478 = scmp.lt.s32.totalorder %s33, 1
        %s479 = scalar_select %p478, %s33, 1
        %s480 = scalar_lea.vmem %s7, %s479
        %v481 = vld [vmem:[%s407] sm:$0xff]
        %v482 = vld [vmem:[#allocation5] sm:$0xff]
        %v483 = vld [vmem:[#allocation5 + $0x8] sm:$0xff]
        %v484 = vld [vmem:[#allocation5 + $0x10] sm:$0xff]
        %v485 = vld [vmem:[#allocation5 + $0x18] sm:$0xff]
        %v486 = vld [vmem:[%s4] sm:$0x1]
        %v488 = vlaneseq
        %v489 = vshrl.u32 %v488, 7
        %v490 = vsub.s32 0, %v489
        %v491 = vrot.slane %v486, %v490
        %vm493 = vcmask 261120
        %v495 = vsel %vm493, %v481, 0
        %497 = vmatprep.subr.mxu0 0.0
        %498 = vmatpush1.msra.mxu0 0.0
        %499 = vmatprep.subr.mxu0 0.0
        %500 = vmatpush1.msra.mxu0 0.0
        %501 = vmatprep.subr.mxu0 0.0
        %502 = vmatpush1.msra.mxu0 0.0
        %503 = vmatprep.subr.mxu0 0.0
        %504 = vmatpush1.msra.mxu0 0.0
        %505 = vmatprep.subr.mxu0 0.0
        %506 = vmatpush1.msra.mxu0 0.0
        %507 = vmatprep.subr.mxu0 0.0
        %508 = vmatpush1.msra.mxu0 0.0
        %509 = vmatprep.subr.mxu0 0.0
        %510 = vmatpush1.msra.mxu0 0.0
        %511 = vmatprep.subr.mxu0 0.0
        %512 = vmatpush1.msra.mxu0 0.0
        %513 = vmatprep.subr.mxu0 0.0
        %514 = vmatpush1.msra.mxu0 0.0
        %515 = vmatprep.subr.mxu0 0.0
        %516 = vmatpush1.msra.mxu0 0.0
        %517 = vmatprep.subr.mxu0 0.0
        %518 = vmatpush1.msra.mxu0 0.0
        %519 = vmatprep.subr.mxu0 0.0
        %520 = vmatpush1.msra.mxu0 0.0
        %521 = vmatprep.subr.mxu0 0.0
        %522 = vmatpush1.msra.mxu0 %v485
        %523 = vmatprep.subr.mxu0 0.0
        %524 = vmatpush1.msra.mxu0 %v484
        %525 = vmatprep.subr.mxu0 0.0
        %526 = vmatpush1.msra.mxu0 %v483
        %527 = vmatprep.subr.mxu0 0.0
        %528 = vmatpush1.msra.mxu0 %v482
        %529 = vmatprep.subr.mxu0 0.0
        %530 = vmatpush2.msra.mxu0 0.0
        %531 = vmatprep.subr.mxu0 0.0
        %532 = vmatpush2.msra.mxu0 0.0
        %533 = vmatprep.subr.mxu0 0.0
        %534 = vmatpush2.msra.mxu0 0.0
        %535 = vmatprep.subr.mxu0 0.0
        %536 = vmatpush2.msra.mxu0 0.0
        %537 = vmatprep.subr.mxu0 0.0
        %538 = vmatpush2.msra.mxu0 0.0
        %539 = vmatprep.subr.mxu0 0.0
        %540 = vmatpush2.msra.mxu0 0.0
        %541 = vmatprep.subr.mxu0 0.0
        %542 = vmatpush2.msra.mxu0 0.0
        %543 = vmatprep.subr.mxu0 0.0
        %544 = vmatpush2.msra.mxu0 0.0
        %545 = vmatprep.subr.mxu0 0.0
        %546 = vmatpush2.msra.mxu0 0.0
        %547 = vmatprep.subr.mxu0 0.0
        %548 = vmatpush2.msra.mxu0 0.0
        %549 = vmatprep.subr.mxu0 0.0
        %550 = vmatpush2.msra.mxu0 0.0
        %551 = vmatprep.subr.mxu0 0.0
        %552 = vmatpush2.msra.mxu0 0.0
        %553 = vmatprep.subr.mxu0 0.0
        %554 = vmatpush2.msra.mxu0 0.0
        %555 = vmatprep.subr.mxu0 0.0
        %556 = vmatpush2.msra.mxu0 0.0
        %557 = vmatprep.subr.mxu0 0.0
        %558 = vmatpush2.msra.mxu0 0.0
        %559 = vmatprep.subr.mxu0 0.0
        %560 = vmatpush2.msra.mxu0 0.0
        %561 = vmatprep.mubr.f32.mxu0 0.0
        %562 = vmatmul.mubr.f32.gmra.mxu0 %v495
        %v563 = vpop.f32.mrf.mxu0
        %v564 = vadd.f32 %v491, %v563
        %v565 = vpop.f32.mrf.mxu0
        %566 = vdwg.mxu0
        %v567 = vld [vmem:[#allocation7] sm:$0xff]
        %v568 = vld [vmem:[#allocation7 + $0x8] sm:$0xff]
        %v569 = vld [vmem:[#allocation7 + $0x10] sm:$0xff]
        %v570 = vld [vmem:[#allocation7 + $0x18] sm:$0xff]
        %v571 = vld [vmem:[%s5] sm:$0x1]
        %v573 = vlaneseq
        %v574 = vshrl.u32 %v573, 7
        %v575 = vsub.s32 0, %v574
        %v576 = vrot.slane %v571, %v575
        %578 = vmatprep.subr.mxu0 0.0
        %579 = vmatpush1.msra.mxu0 0.0
        %580 = vmatprep.subr.mxu0 0.0
        %581 = vmatpush1.msra.mxu0 0.0
        %582 = vmatprep.subr.mxu0 0.0
        %583 = vmatpush1.msra.mxu0 0.0
        %584 = vmatprep.subr.mxu0 0.0
        %585 = vmatpush1.msra.mxu0 0.0
        %586 = vmatprep.subr.mxu0 0.0
        %587 = vmatpush1.msra.mxu0 0.0
        %588 = vmatprep.subr.mxu0 0.0
        %589 = vmatpush1.msra.mxu0 0.0
        %590 = vmatprep.subr.mxu0 0.0
        %591 = vmatpush1.msra.mxu0 0.0
        %592 = vmatprep.subr.mxu0 0.0
        %593 = vmatpush1.msra.mxu0 0.0
        %594 = vmatprep.subr.mxu0 0.0
        %595 = vmatpush1.msra.mxu0 0.0
        %596 = vmatprep.subr.mxu0 0.0
        %597 = vmatpush1.msra.mxu0 0.0
        %598 = vmatprep.subr.mxu0 0.0
        %599 = vmatpush1.msra.mxu0 0.0
        %600 = vmatprep.subr.mxu0 0.0
        %601 = vmatpush1.msra.mxu0 0.0
        %602 = vmatprep.subr.mxu0 0.0
        %603 = vmatpush1.msra.mxu0 %v570
        %604 = vmatprep.subr.mxu0 0.0
        %605 = vmatpush1.msra.mxu0 %v569
        %606 = vmatprep.subr.mxu0 0.0
        %607 = vmatpush1.msra.mxu0 %v568
        %608 = vmatprep.subr.mxu0 0.0
        %609 = vmatpush1.msra.mxu0 %v567
        %610 = vmatprep.subr.mxu0 0.0
        %611 = vmatpush2.msra.mxu0 0.0
        %612 = vmatprep.subr.mxu0 0.0
        %613 = vmatpush2.msra.mxu0 0.0
        %614 = vmatprep.subr.mxu0 0.0
        %615 = vmatpush2.msra.mxu0 0.0
        %616 = vmatprep.subr.mxu0 0.0
        %617 = vmatpush2.msra.mxu0 0.0
        %618 = vmatprep.subr.mxu0 0.0
        %619 = vmatpush2.msra.mxu0 0.0
        %620 = vmatprep.subr.mxu0 0.0
        %621 = vmatpush2.msra.mxu0 0.0
        %622 = vmatprep.subr.mxu0 0.0
        %623 = vmatpush2.msra.mxu0 0.0
        %624 = vmatprep.subr.mxu0 0.0
        %625 = vmatpush2.msra.mxu0 0.0
        %626 = vmatprep.subr.mxu0 0.0
        %627 = vmatpush2.msra.mxu0 0.0
        %628 = vmatprep.subr.mxu0 0.0
        %629 = vmatpush2.msra.mxu0 0.0
        %630 = vmatprep.subr.mxu0 0.0
        %631 = vmatpush2.msra.mxu0 0.0
        %632 = vmatprep.subr.mxu0 0.0
        %633 = vmatpush2.msra.mxu0 0.0
        %634 = vmatprep.subr.mxu0 0.0
        %635 = vmatpush2.msra.mxu0 0.0
        %636 = vmatprep.subr.mxu0 0.0
        %637 = vmatpush2.msra.mxu0 0.0
        %638 = vmatprep.subr.mxu0 0.0
        %639 = vmatpush2.msra.mxu0 0.0
        %640 = vmatprep.subr.mxu0 0.0
        %641 = vmatpush2.msra.mxu0 0.0
        %642 = vmatprep.mubr.f32.mxu0 0.0
        %643 = vmatmul.mubr.f32.gmra.mxu0 %v495
        %v644 = vpop.f32.mrf.mxu0
        %v645 = vadd.f32 %v576, %v644
        %v646 = vpop.f32.mrf.mxu0
        %647 = vdwg.mxu0
        %v648 = vld [vmem:[#allocation8] sm:$0xff]
        %v649 = vld [vmem:[#allocation8 + $0x8] sm:$0xff]
        %v650 = vld [vmem:[#allocation8 + $0x10] sm:$0xff]
        %v651 = vld [vmem:[#allocation8 + $0x18] sm:$0xff]
        %v652 = vld [vmem:[%s6] sm:$0x1]
        %v654 = vlaneseq
        %v655 = vshrl.u32 %v654, 7
        %v656 = vsub.s32 0, %v655
        %v657 = vrot.slane %v652, %v656
        %659 = vmatprep.subr.mxu0 0.0
        %660 = vmatpush1.msra.mxu0 0.0
        %661 = vmatprep.subr.mxu0 0.0
        %662 = vmatpush1.msra.mxu0 0.0
        %663 = vmatprep.subr.mxu0 0.0
        %664 = vmatpush1.msra.mxu0 0.0
        %665 = vmatprep.subr.mxu0 0.0
        %666 = vmatpush1.msra.mxu0 0.0
        %667 = vmatprep.subr.mxu0 0.0
        %668 = vmatpush1.msra.mxu0 0.0
        %669 = vmatprep.subr.mxu0 0.0
        %670 = vmatpush1.msra.mxu0 0.0
        %671 = vmatprep.subr.mxu0 0.0
        %672 = vmatpush1.msra.mxu0 0.0
        %673 = vmatprep.subr.mxu0 0.0
        %674 = vmatpush1.msra.mxu0 0.0
        %675 = vmatprep.subr.mxu0 0.0
        %676 = vmatpush1.msra.mxu0 0.0
        %677 = vmatprep.subr.mxu0 0.0
        %678 = vmatpush1.msra.mxu0 0.0
        %679 = vmatprep.subr.mxu0 0.0
        %680 = vmatpush1.msra.mxu0 0.0
        %681 = vmatprep.subr.mxu0 0.0
        %682 = vmatpush1.msra.mxu0 0.0
        %683 = vmatprep.subr.mxu0 0.0
        %684 = vmatpush1.msra.mxu0 %v651
        %685 = vmatprep.subr.mxu0 0.0
        %686 = vmatpush1.msra.mxu0 %v650
        %687 = vmatprep.subr.mxu0 0.0
        %688 = vmatpush1.msra.mxu0 %v649
        %689 = vmatprep.subr.mxu0 0.0
        %690 = vmatpush1.msra.mxu0 %v648
        %691 = vmatprep.subr.mxu0 0.0
        %692 = vmatpush2.msra.mxu0 0.0
        %693 = vmatprep.subr.mxu0 0.0
        %694 = vmatpush2.msra.mxu0 0.0
        %695 = vmatprep.subr.mxu0 0.0
        %696 = vmatpush2.msra.mxu0 0.0
        %697 = vmatprep.subr.mxu0 0.0
        %698 = vmatpush2.msra.mxu0 0.0
        %699 = vmatprep.subr.mxu0 0.0
        %700 = vmatpush2.msra.mxu0 0.0
        %701 = vmatprep.subr.mxu0 0.0
        %702 = vmatpush2.msra.mxu0 0.0
        %703 = vmatprep.subr.mxu0 0.0
        %704 = vmatpush2.msra.mxu0 0.0
        %705 = vmatprep.subr.mxu0 0.0
        %706 = vmatpush2.msra.mxu0 0.0
        %707 = vmatprep.subr.mxu0 0.0
        %708 = vmatpush2.msra.mxu0 0.0
        %709 = vmatprep.subr.mxu0 0.0
        %710 = vmatpush2.msra.mxu0 0.0
        %711 = vmatprep.subr.mxu0 0.0
        %712 = vmatpush2.msra.mxu0 0.0
        %713 = vmatprep.subr.mxu0 0.0
        %714 = vmatpush2.msra.mxu0 0.0
        %715 = vmatprep.subr.mxu0 0.0
        %716 = vmatpush2.msra.mxu0 0.0
        %717 = vmatprep.subr.mxu0 0.0
        %718 = vmatpush2.msra.mxu0 0.0
        %719 = vmatprep.subr.mxu0 0.0
        %720 = vmatpush2.msra.mxu0 0.0
        %721 = vmatprep.subr.mxu0 0.0
        %722 = vmatpush2.msra.mxu0 0.0
        %723 = vmatprep.mubr.f32.mxu0 0.0
        %724 = vmatmul.mubr.f32.gmra.mxu0 %v495
        %v725 = vpop.f32.mrf.mxu0
        %v726 = vadd.f32 %v657, %v725
        %v727 = vpop.f32.mrf.mxu0
        %728 = vdwg.mxu0
        %v729 = vld [vmem:[%s428] sm:$0xff]
        %v730 = vld [vmem:[%s428 + $0x8] sm:$0xff]
        %v731 = vld [vmem:[%s428 + $0x10] sm:$0xff]
        %v732 = vld [vmem:[%s428 + $0x18] sm:$0xff]
        %v733 = vld [vmem:[%s428 + $0x20] sm:$0xff]
        %v734 = vld [vmem:[%s428 + $0x28] sm:$0xff]
        %v735 = vld [vmem:[%s428 + $0x30] sm:$0xff]
        %v736 = vld [vmem:[%s428 + $0x38] sm:$0xff]
        %v737 = vld [vmem:[%s480] sm:$0x1]
        %739 = vrot.lane.b32.xlu0 %v564, 120
        %v740 = vpop.permute.xlu0 %739
        %742 = vrot.lane.b32.xlu0 %v564, 112
        %v743 = vpop.permute.xlu0 %742
        %745 = vrot.lane.b32.xlu0 %v564, 104
        %v746 = vpop.permute.xlu0 %745
        %v748 = vcombine.low %v564, %v743
        %v749 = vcombine.high %v564, %v743
        %v751 = vunpack.c.l.s4 1983009808
        %v752 = vunpack.c.0.s8 %v751
        %v753 = vlaneseq
        %v754 = vshrl.u32 %v753, 7
        %v755 = vsub.s32 %v752, %v754
        %v756 = vrot.slane %v748, %v755
        %v758 = vunpack.c.l.s4 1983009808
        %v759 = vunpack.c.0.s8 %v758
        %v760 = vlaneseq
        %v761 = vshrl.u32 %v760, 7
        %v762 = vsub.s32 %v759, %v761
        %v763 = vrot.slane %v749, %v762
        %v764 = vcombine.low %v740, %v746
        %v765 = vcombine.high %v740, %v746
        %v767 = vunpack.c.l.s4 1983009808
        %v768 = vunpack.c.0.s8 %v767
        %v769 = vlaneseq
        %v770 = vshrl.u32 %v769, 7
        %v771 = vsub.s32 %v768, %v770
        %v772 = vrot.slane %v764, %v771
        %v774 = vunpack.c.l.s4 1983009808
        %v775 = vunpack.c.0.s8 %v774
        %v776 = vlaneseq
        %v777 = vshrl.u32 %v776, 7
        %v778 = vsub.s32 %v775, %v777
        %v779 = vrot.slane %v765, %v778
        %v780 = vcombine.low %v756, %v772
        %v781 = vcombine.high %v756, %v772
        %v783 = vunpack.c.l.s4 1934713408
        %v784 = vunpack.c.0.s8 %v783
        %v785 = vlaneseq
        %v786 = vshrl.u32 %v785, 7
        %v787 = vsub.s32 %v784, %v786
        %v788 = vrot.slane %v780, %v787
        %v790 = vunpack.c.l.s4 1934713408
        %v791 = vunpack.c.0.s8 %v790
        %v792 = vlaneseq
        %v793 = vshrl.u32 %v792, 7
        %v794 = vsub.s32 %v791, %v793
        %v795 = vrot.slane %v781, %v794
        %v796 = vcombine.low %v763, %v779
        %v797 = vcombine.high %v763, %v779
        %v799 = vunpack.c.l.s4 1934713408
        %v800 = vunpack.c.0.s8 %v799
        %v801 = vlaneseq
        %v802 = vshrl.u32 %v801, 7
        %v803 = vsub.s32 %v800, %v802
        %v804 = vrot.slane %v796, %v803
        %v806 = vunpack.c.l.s4 1934713408
        %v807 = vunpack.c.0.s8 %v806
        %v808 = vlaneseq
        %v809 = vshrl.u32 %v808, 7
        %v810 = vsub.s32 %v807, %v809
        %v811 = vrot.slane %v797, %v810
        %v812 = vcombine.high %v788, 0.0
        %v813 = vcombine.high %v795, 0.0
        %v814 = vcombine.high %v804, 0.0
        %v815 = vcombine.high %v811, 0.0
        %vm816 = vcmask 64512
        %v818 = vsel %vm816, %v788, 0
        %v821 = vsel %vm816, %v729, 0
        %823 = vmatprep.subr.mxu0 0.0
        %824 = vmatpush1.xpose.msra.mxu0 0.0
        %825 = vmatprep.subr.mxu0 0.0
        %826 = vmatpush1.xpose.msra.mxu0 0.0
        %827 = vmatprep.subr.mxu0 0.0
        %828 = vmatpush1.xpose.msra.mxu0 0.0
        %829 = vmatprep.subr.mxu0 0.0
        %830 = vmatpush1.xpose.msra.mxu0 0.0
        %831 = vmatprep.subr.mxu0 0.0
        %832 = vmatpush1.xpose.msra.mxu0 0.0
        %833 = vmatprep.subr.mxu0 0.0
        %834 = vmatpush1.xpose.msra.mxu0 0.0
        %835 = vmatprep.subr.mxu0 0.0
        %836 = vmatpush1.xpose.msra.mxu0 0.0
        %837 = vmatprep.subr.mxu0 0.0
        %838 = vmatpush1.xpose.msra.mxu0 0.0
        %839 = vmatprep.subr.mxu0 0.0
        %840 = vmatpush1.xpose.msra.mxu0 0.0
        %841 = vmatprep.subr.mxu0 0.0
        %842 = vmatpush1.xpose.msra.mxu0 0.0
        %843 = vmatprep.subr.mxu0 0.0
        %844 = vmatpush1.xpose.msra.mxu0 0.0
        %845 = vmatprep.subr.mxu0 0.0
        %846 = vmatpush1.xpose.msra.mxu0 0.0
        %847 = vmatprep.subr.mxu0 0.0
        %848 = vmatpush1.xpose.msra.mxu0 0.0
        %849 = vmatprep.subr.mxu0 0.0
        %850 = vmatpush1.xpose.msra.mxu0 0.0
        %851 = vmatprep.subr.mxu0 0.0
        %852 = vmatpush1.xpose.msra.mxu0 0.0
        %853 = vmatprep.subr.mxu0 0.0
        %854 = vmatpush1.xpose.msra.mxu0 %v821
        %855 = vmatprep.subr.mxu0 0.0
        %856 = vmatpush2.xpose.msra.mxu0 0.0
        %857 = vmatprep.subr.mxu0 0.0
        %858 = vmatpush2.xpose.msra.mxu0 0.0
        %859 = vmatprep.subr.mxu0 0.0
        %860 = vmatpush2.xpose.msra.mxu0 0.0
        %861 = vmatprep.subr.mxu0 0.0
        %862 = vmatpush2.xpose.msra.mxu0 0.0
        %863 = vmatprep.subr.mxu0 0.0
        %864 = vmatpush2.xpose.msra.mxu0 0.0
        %865 = vmatprep.subr.mxu0 0.0
        %866 = vmatpush2.xpose.msra.mxu0 0.0
        %867 = vmatprep.subr.mxu0 0.0
        %868 = vmatpush2.xpose.msra.mxu0 0.0
        %869 = vmatprep.subr.mxu0 0.0
        %870 = vmatpush2.xpose.msra.mxu0 0.0
        %871 = vmatprep.subr.mxu0 0.0
        %872 = vmatpush2.xpose.msra.mxu0 0.0
        %873 = vmatprep.subr.mxu0 0.0
        %874 = vmatpush2.xpose.msra.mxu0 0.0
        %875 = vmatprep.subr.mxu0 0.0
        %876 = vmatpush2.xpose.msra.mxu0 0.0
        %877 = vmatprep.subr.mxu0 0.0
        %878 = vmatpush2.xpose.msra.mxu0 0.0
        %879 = vmatprep.subr.mxu0 0.0
        %880 = vmatpush2.xpose.msra.mxu0 0.0
        %881 = vmatprep.subr.mxu0 0.0
        %882 = vmatpush2.xpose.msra.mxu0 0.0
        %883 = vmatprep.subr.mxu0 0.0
        %884 = vmatpush2.xpose.msra.mxu0 0.0
        %885 = vmatprep.subr.mxu0 0.0
        %886 = vmatpush2.xpose.msra.mxu0 0.0
        %887 = vmatprep.mubr.f32.mxu0 0.0
        %888 = vmatmul.mubr.f32.gmra.mxu0 %v818
        %v889 = vpop.f32.mrf.mxu0
        %v890 = vadd.f32 0.0, %v889
        %v891 = vpop.f32.mrf.mxu0
        %892 = vdwg.mxu0
        %v894 = vsel %vm816, %v812, 0
        %v897 = vsel %vm816, %v730, 0
        %899 = vmatprep.subr.mxu0 0.0
        %900 = vmatpush1.xpose.msra.mxu0 0.0
        %901 = vmatprep.subr.mxu0 0.0
        %902 = vmatpush1.xpose.msra.mxu0 0.0
        %903 = vmatprep.subr.mxu0 0.0
        %904 = vmatpush1.xpose.msra.mxu0 0.0
        %905 = vmatprep.subr.mxu0 0.0
        %906 = vmatpush1.xpose.msra.mxu0 0.0
        %907 = vmatprep.subr.mxu0 0.0
        %908 = vmatpush1.xpose.msra.mxu0 0.0
        %909 = vmatprep.subr.mxu0 0.0
        %910 = vmatpush1.xpose.msra.mxu0 0.0
        %911 = vmatprep.subr.mxu0 0.0
        %912 = vmatpush1.xpose.msra.mxu0 0.0
        %913 = vmatprep.subr.mxu0 0.0
        %914 = vmatpush1.xpose.msra.mxu0 0.0
        %915 = vmatprep.subr.mxu0 0.0
        %916 = vmatpush1.xpose.msra.mxu0 0.0
        %917 = vmatprep.subr.mxu0 0.0
        %918 = vmatpush1.xpose.msra.mxu0 0.0
        %919 = vmatprep.subr.mxu0 0.0
        %920 = vmatpush1.xpose.msra.mxu0 0.0
        %921 = vmatprep.subr.mxu0 0.0
        %922 = vmatpush1.xpose.msra.mxu0 0.0
        %923 = vmatprep.subr.mxu0 0.0
        %924 = vmatpush1.xpose.msra.mxu0 0.0
        %925 = vmatprep.subr.mxu0 0.0
        %926 = vmatpush1.xpose.msra.mxu0 0.0
        %927 = vmatprep.subr.mxu0 0.0
        %928 = vmatpush1.xpose.msra.mxu0 0.0
        %929 = vmatprep.subr.mxu0 0.0
        %930 = vmatpush1.xpose.msra.mxu0 %v897
        %931 = vmatprep.subr.mxu0 0.0
        %932 = vmatpush2.xpose.msra.mxu0 0.0
        %933 = vmatprep.subr.mxu0 0.0
        %934 = vmatpush2.xpose.msra.mxu0 0.0
        %935 = vmatprep.subr.mxu0 0.0
        %936 = vmatpush2.xpose.msra.mxu0 0.0
        %937 = vmatprep.subr.mxu0 0.0
        %938 = vmatpush2.xpose.msra.mxu0 0.0
        %939 = vmatprep.subr.mxu0 0.0
        %940 = vmatpush2.xpose.msra.mxu0 0.0
        %941 = vmatprep.subr.mxu0 0.0
        %942 = vmatpush2.xpose.msra.mxu0 0.0
        %943 = vmatprep.subr.mxu0 0.0
        %944 = vmatpush2.xpose.msra.mxu0 0.0
        %945 = vmatprep.subr.mxu0 0.0
        %946 = vmatpush2.xpose.msra.mxu0 0.0
        %947 = vmatprep.subr.mxu0 0.0
        %948 = vmatpush2.xpose.msra.mxu0 0.0
        %949 = vmatprep.subr.mxu0 0.0
        %950 = vmatpush2.xpose.msra.mxu0 0.0
        %951 = vmatprep.subr.mxu0 0.0
        %952 = vmatpush2.xpose.msra.mxu0 0.0
        %953 = vmatprep.subr.mxu0 0.0
        %954 = vmatpush2.xpose.msra.mxu0 0.0
        %955 = vmatprep.subr.mxu0 0.0
        %956 = vmatpush2.xpose.msra.mxu0 0.0
        %957 = vmatprep.subr.mxu0 0.0
        %958 = vmatpush2.xpose.msra.mxu0 0.0
        %959 = vmatprep.subr.mxu0 0.0
        %960 = vmatpush2.xpose.msra.mxu0 0.0
        %961 = vmatprep.subr.mxu0 0.0
        %962 = vmatpush2.xpose.msra.mxu0 0.0
        %963 = vmatprep.mubr.f32.mxu0 0.0
        %964 = vmatmul.mubr.f32.gmra.mxu0 %v894
        %v965 = vpop.f32.mrf.mxu0
        %v966 = vadd.f32 0.0, %v965
        %v967 = vpop.f32.mrf.mxu0
        %968 = vdwg.mxu0
        %v970 = vsel %vm816, %v795, 0
        %v973 = vsel %vm816, %v731, 0
        %975 = vmatprep.subr.mxu0 0.0
        %976 = vmatpush1.xpose.msra.mxu0 0.0
        %977 = vmatprep.subr.mxu0 0.0
        %978 = vmatpush1.xpose.msra.mxu0 0.0
        %979 = vmatprep.subr.mxu0 0.0
        %980 = vmatpush1.xpose.msra.mxu0 0.0
        %981 = vmatprep.subr.mxu0 0.0
        %982 = vmatpush1.xpose.msra.mxu0 0.0
        %983 = vmatprep.subr.mxu0 0.0
        %984 = vmatpush1.xpose.msra.mxu0 0.0
        %985 = vmatprep.subr.mxu0 0.0
        %986 = vmatpush1.xpose.msra.mxu0 0.0
        %987 = vmatprep.subr.mxu0 0.0
        %988 = vmatpush1.xpose.msra.mxu0 0.0
        %989 = vmatprep.subr.mxu0 0.0
        %990 = vmatpush1.xpose.msra.mxu0 0.0
        %991 = vmatprep.subr.mxu0 0.0
        %992 = vmatpush1.xpose.msra.mxu0 0.0
        %993 = vmatprep.subr.mxu0 0.0
        %994 = vmatpush1.xpose.msra.mxu0 0.0
        %995 = vmatprep.subr.mxu0 0.0
        %996 = vmatpush1.xpose.msra.mxu0 0.0
        %997 = vmatprep.subr.mxu0 0.0
        %998 = vmatpush1.xpose.msra.mxu0 0.0
        %999 = vmatprep.subr.mxu0 0.0
        %1000 = vmatpush1.xpose.msra.mxu0 0.0
        %1001 = vmatprep.subr.mxu0 0.0
        %1002 = vmatpush1.xpose.msra.mxu0 0.0
        %1003 = vmatprep.subr.mxu0 0.0
        %1004 = vmatpush1.xpose.msra.mxu0 0.0
        %1005 = vmatprep.subr.mxu0 0.0
        %1006 = vmatpush1.xpose.msra.mxu0 %v973
        %1007 = vmatprep.subr.mxu0 0.0
        %1008 = vmatpush2.xpose.msra.mxu0 0.0
        %1009 = vmatprep.subr.mxu0 0.0
        %1010 = vmatpush2.xpose.msra.mxu0 0.0
        %1011 = vmatprep.subr.mxu0 0.0
        %1012 = vmatpush2.xpose.msra.mxu0 0.0
        %1013 = vmatprep.subr.mxu0 0.0
        %1014 = vmatpush2.xpose.msra.mxu0 0.0
        %1015 = vmatprep.subr.mxu0 0.0
        %1016 = vmatpush2.xpose.msra.mxu0 0.0
        %1017 = vmatprep.subr.mxu0 0.0
        %1018 = vmatpush2.xpose.msra.mxu0 0.0
        %1019 = vmatprep.subr.mxu0 0.0
        %1020 = vmatpush2.xpose.msra.mxu0 0.0
        %1021 = vmatprep.subr.mxu0 0.0
        %1022 = vmatpush2.xpose.msra.mxu0 0.0
        %1023 = vmatprep.subr.mxu0 0.0
        %1024 = vmatpush2.xpose.msra.mxu0 0.0
        %1025 = vmatprep.subr.mxu0 0.0
        %1026 = vmatpush2.xpose.msra.mxu0 0.0
        %1027 = vmatprep.subr.mxu0 0.0
        %1028 = vmatpush2.xpose.msra.mxu0 0.0
        %1029 = vmatprep.subr.mxu0 0.0
        %1030 = vmatpush2.xpose.msra.mxu0 0.0
        %1031 = vmatprep.subr.mxu0 0.0
        %1032 = vmatpush2.xpose.msra.mxu0 0.0
        %1033 = vmatprep.subr.mxu0 0.0
        %1034 = vmatpush2.xpose.msra.mxu0 0.0
        %1035 = vmatprep.subr.mxu0 0.0
        %1036 = vmatpush2.xpose.msra.mxu0 0.0
        %1037 = vmatprep.subr.mxu0 0.0
        %1038 = vmatpush2.xpose.msra.mxu0 0.0
        %1039 = vmatprep.mubr.f32.mxu0 0.0
        %1040 = vmatmul.mubr.f32.gmra.mxu0 %v970
        %v1041 = vpop.f32.mrf.mxu0
        %v1042 = vadd.f32 0.0, %v1041
        %v1043 = vpop.f32.mrf.mxu0
        %1044 = vdwg.mxu0
        %v1046 = vsel %vm816, %v813, 0
        %v1049 = vsel %vm816, %v732, 0
        %1051 = vmatprep.subr.mxu0 0.0
        %1052 = vmatpush1.xpose.msra.mxu0 0.0
        %1053 = vmatprep.subr.mxu0 0.0
        %1054 = vmatpush1.xpose.msra.mxu0 0.0
        %1055 = vmatprep.subr.mxu0 0.0
        %1056 = vmatpush1.xpose.msra.mxu0 0.0
        %1057 = vmatprep.subr.mxu0 0.0
        %1058 = vmatpush1.xpose.msra.mxu0 0.0
        %1059 = vmatprep.subr.mxu0 0.0
        %1060 = vmatpush1.xpose.msra.mxu0 0.0
        %1061 = vmatprep.subr.mxu0 0.0
        %1062 = vmatpush1.xpose.msra.mxu0 0.0
        %1063 = vmatprep.subr.mxu0 0.0
        %1064 = vmatpush1.xpose.msra.mxu0 0.0
        %1065 = vmatprep.subr.mxu0 0.0
        %1066 = vmatpush1.xpose.msra.mxu0 0.0
        %1067 = vmatprep.subr.mxu0 0.0
        %1068 = vmatpush1.xpose.msra.mxu0 0.0
        %1069 = vmatprep.subr.mxu0 0.0
        %1070 = vmatpush1.xpose.msra.mxu0 0.0
        %1071 = vmatprep.subr.mxu0 0.0
        %1072 = vmatpush1.xpose.msra.mxu0 0.0
        %1073 = vmatprep.subr.mxu0 0.0
        %1074 = vmatpush1.xpose.msra.mxu0 0.0
        %1075 = vmatprep.subr.mxu0 0.0
        %1076 = vmatpush1.xpose.msra.mxu0 0.0
        %1077 = vmatprep.subr.mxu0 0.0
        %1078 = vmatpush1.xpose.msra.mxu0 0.0
        %1079 = vmatprep.subr.mxu0 0.0
        %1080 = vmatpush1.xpose.msra.mxu0 0.0
        %1081 = vmatprep.subr.mxu0 0.0
        %1082 = vmatpush1.xpose.msra.mxu0 %v1049
        %1083 = vmatprep.subr.mxu0 0.0
        %1084 = vmatpush2.xpose.msra.mxu0 0.0
        %1085 = vmatprep.subr.mxu0 0.0
        %1086 = vmatpush2.xpose.msra.mxu0 0.0
        %1087 = vmatprep.subr.mxu0 0.0
        %1088 = vmatpush2.xpose.msra.mxu0 0.0
        %1089 = vmatprep.subr.mxu0 0.0
        %1090 = vmatpush2.xpose.msra.mxu0 0.0
        %1091 = vmatprep.subr.mxu0 0.0
        %1092 = vmatpush2.xpose.msra.mxu0 0.0
        %1093 = vmatprep.subr.mxu0 0.0
        %1094 = vmatpush2.xpose.msra.mxu0 0.0
        %1095 = vmatprep.subr.mxu0 0.0
        %1096 = vmatpush2.xpose.msra.mxu0 0.0
        %1097 = vmatprep.subr.mxu0 0.0
        %1098 = vmatpush2.xpose.msra.mxu0 0.0
        %1099 = vmatprep.subr.mxu0 0.0
        %1100 = vmatpush2.xpose.msra.mxu0 0.0
        %1101 = vmatprep.subr.mxu0 0.0
        %1102 = vmatpush2.xpose.msra.mxu0 0.0
        %1103 = vmatprep.subr.mxu0 0.0
        %1104 = vmatpush2.xpose.msra.mxu0 0.0
        %1105 = vmatprep.subr.mxu0 0.0
        %1106 = vmatpush2.xpose.msra.mxu0 0.0
        %1107 = vmatprep.subr.mxu0 0.0
        %1108 = vmatpush2.xpose.msra.mxu0 0.0
        %1109 = vmatprep.subr.mxu0 0.0
        %1110 = vmatpush2.xpose.msra.mxu0 0.0
        %1111 = vmatprep.subr.mxu0 0.0
        %1112 = vmatpush2.xpose.msra.mxu0 0.0
        %1113 = vmatprep.subr.mxu0 0.0
        %1114 = vmatpush2.xpose.msra.mxu0 0.0
        %1115 = vmatprep.mubr.f32.mxu0 0.0
        %1116 = vmatmul.mubr.f32.gmra.mxu0 %v1046
        %v1117 = vpop.f32.mrf.mxu0
        %v1118 = vadd.f32 0.0, %v1117
        %v1119 = vpop.f32.mrf.mxu0
        %1120 = vdwg.mxu0
        %v1122 = vsel %vm816, %v804, 0
        %v1125 = vsel %vm816, %v733, 0
        %1127 = vmatprep.subr.mxu0 0.0
        %1128 = vmatpush1.xpose.msra.mxu0 0.0
        %1129 = vmatprep.subr.mxu0 0.0
        %1130 = vmatpush1.xpose.msra.mxu0 0.0
        %1131 = vmatprep.subr.mxu0 0.0
        %1132 = vmatpush1.xpose.msra.mxu0 0.0
        %1133 = vmatprep.subr.mxu0 0.0
        %1134 = vmatpush1.xpose.msra.mxu0 0.0
        %1135 = vmatprep.subr.mxu0 0.0
        %1136 = vmatpush1.xpose.msra.mxu0 0.0
        %1137 = vmatprep.subr.mxu0 0.0
        %1138 = vmatpush1.xpose.msra.mxu0 0.0
        %1139 = vmatprep.subr.mxu0 0.0
        %1140 = vmatpush1.xpose.msra.mxu0 0.0
        %1141 = vmatprep.subr.mxu0 0.0
        %1142 = vmatpush1.xpose.msra.mxu0 0.0
        %1143 = vmatprep.subr.mxu0 0.0
        %1144 = vmatpush1.xpose.msra.mxu0 0.0
        %1145 = vmatprep.subr.mxu0 0.0
        %1146 = vmatpush1.xpose.msra.mxu0 0.0
        %1147 = vmatprep.subr.mxu0 0.0
        %1148 = vmatpush1.xpose.msra.mxu0 0.0
        %1149 = vmatprep.subr.mxu0 0.0
        %1150 = vmatpush1.xpose.msra.mxu0 0.0
        %1151 = vmatprep.subr.mxu0 0.0
        %1152 = vmatpush1.xpose.msra.mxu0 0.0
        %1153 = vmatprep.subr.mxu0 0.0
        %1154 = vmatpush1.xpose.msra.mxu0 0.0
        %1155 = vmatprep.subr.mxu0 0.0
        %1156 = vmatpush1.xpose.msra.mxu0 0.0
        %1157 = vmatprep.subr.mxu0 0.0
        %1158 = vmatpush1.xpose.msra.mxu0 %v1125
        %1159 = vmatprep.subr.mxu0 0.0
        %1160 = vmatpush2.xpose.msra.mxu0 0.0
        %1161 = vmatprep.subr.mxu0 0.0
        %1162 = vmatpush2.xpose.msra.mxu0 0.0
        %1163 = vmatprep.subr.mxu0 0.0
        %1164 = vmatpush2.xpose.msra.mxu0 0.0
        %1165 = vmatprep.subr.mxu0 0.0
        %1166 = vmatpush2.xpose.msra.mxu0 0.0
        %1167 = vmatprep.subr.mxu0 0.0
        %1168 = vmatpush2.xpose.msra.mxu0 0.0
        %1169 = vmatprep.subr.mxu0 0.0
        %1170 = vmatpush2.xpose.msra.mxu0 0.0
        %1171 = vmatprep.subr.mxu0 0.0
        %1172 = vmatpush2.xpose.msra.mxu0 0.0
        %1173 = vmatprep.subr.mxu0 0.0
        %1174 = vmatpush2.xpose.msra.mxu0 0.0
        %1175 = vmatprep.subr.mxu0 0.0
        %1176 = vmatpush2.xpose.msra.mxu0 0.0
        %1177 = vmatprep.subr.mxu0 0.0
        %1178 = vmatpush2.xpose.msra.mxu0 0.0
        %1179 = vmatprep.subr.mxu0 0.0
        %1180 = vmatpush2.xpose.msra.mxu0 0.0
        %1181 = vmatprep.subr.mxu0 0.0
        %1182 = vmatpush2.xpose.msra.mxu0 0.0
        %1183 = vmatprep.subr.mxu0 0.0
        %1184 = vmatpush2.xpose.msra.mxu0 0.0
        %1185 = vmatprep.subr.mxu0 0.0
        %1186 = vmatpush2.xpose.msra.mxu0 0.0
        %1187 = vmatprep.subr.mxu0 0.0
        %1188 = vmatpush2.xpose.msra.mxu0 0.0
        %1189 = vmatprep.subr.mxu0 0.0
        %1190 = vmatpush2.xpose.msra.mxu0 0.0
        %1191 = vmatprep.mubr.f32.mxu0 0.0
        %1192 = vmatmul.mubr.f32.gmra.mxu0 %v1122
        %v1193 = vpop.f32.mrf.mxu0
        %v1194 = vadd.f32 0.0, %v1193
        %v1195 = vpop.f32.mrf.mxu0
        %1196 = vdwg.mxu0
        %v1198 = vsel %vm816, %v814, 0
        %v1201 = vsel %vm816, %v734, 0
        %1203 = vmatprep.subr.mxu0 0.0
        %1204 = vmatpush1.xpose.msra.mxu0 0.0
        %1205 = vmatprep.subr.mxu0 0.0
        %1206 = vmatpush1.xpose.msra.mxu0 0.0
        %1207 = vmatprep.subr.mxu0 0.0
        %1208 = vmatpush1.xpose.msra.mxu0 0.0
        %1209 = vmatprep.subr.mxu0 0.0
        %1210 = vmatpush1.xpose.msra.mxu0 0.0
        %1211 = vmatprep.subr.mxu0 0.0
        %1212 = vmatpush1.xpose.msra.mxu0 0.0
        %1213 = vmatprep.subr.mxu0 0.0
        %1214 = vmatpush1.xpose.msra.mxu0 0.0
        %1215 = vmatprep.subr.mxu0 0.0
        %1216 = vmatpush1.xpose.msra.mxu0 0.0
        %1217 = vmatprep.subr.mxu0 0.0
        %1218 = vmatpush1.xpose.msra.mxu0 0.0
        %1219 = vmatprep.subr.mxu0 0.0
        %1220 = vmatpush1.xpose.msra.mxu0 0.0
        %1221 = vmatprep.subr.mxu0 0.0
        %1222 = vmatpush1.xpose.msra.mxu0 0.0
        %1223 = vmatprep.subr.mxu0 0.0
        %1224 = vmatpush1.xpose.msra.mxu0 0.0
        %1225 = vmatprep.subr.mxu0 0.0
        %1226 = vmatpush1.xpose.msra.mxu0 0.0
        %1227 = vmatprep.subr.mxu0 0.0
        %1228 = vmatpush1.xpose.msra.mxu0 0.0
        %1229 = vmatprep.subr.mxu0 0.0
        %1230 = vmatpush1.xpose.msra.mxu0 0.0
        %1231 = vmatprep.subr.mxu0 0.0
        %1232 = vmatpush1.xpose.msra.mxu0 0.0
        %1233 = vmatprep.subr.mxu0 0.0
        %1234 = vmatpush1.xpose.msra.mxu0 %v1201
        %1235 = vmatprep.subr.mxu0 0.0
        %1236 = vmatpush2.xpose.msra.mxu0 0.0
        %1237 = vmatprep.subr.mxu0 0.0
        %1238 = vmatpush2.xpose.msra.mxu0 0.0
        %1239 = vmatprep.subr.mxu0 0.0
        %1240 = vmatpush2.xpose.msra.mxu0 0.0
        %1241 = vmatprep.subr.mxu0 0.0
        %1242 = vmatpush2.xpose.msra.mxu0 0.0
        %1243 = vmatprep.subr.mxu0 0.0
        %1244 = vmatpush2.xpose.msra.mxu0 0.0
        %1245 = vmatprep.subr.mxu0 0.0
        %1246 = vmatpush2.xpose.msra.mxu0 0.0
        %1247 = vmatprep.subr.mxu0 0.0
        %1248 = vmatpush2.xpose.msra.mxu0 0.0
        %1249 = vmatprep.subr.mxu0 0.0
        %1250 = vmatpush2.xpose.msra.mxu0 0.0
        %1251 = vmatprep.subr.mxu0 0.0
        %1252 = vmatpush2.xpose.msra.mxu0 0.0
        %1253 = vmatprep.subr.mxu0 0.0
        %1254 = vmatpush2.xpose.msra.mxu0 0.0
        %1255 = vmatprep.subr.mxu0 0.0
        %1256 = vmatpush2.xpose.msra.mxu0 0.0
        %1257 = vmatprep.subr.mxu0 0.0
        %1258 = vmatpush2.xpose.msra.mxu0 0.0
        %1259 = vmatprep.subr.mxu0 0.0
        %1260 = vmatpush2.xpose.msra.mxu0 0.0
        %1261 = vmatprep.subr.mxu0 0.0
        %1262 = vmatpush2.xpose.msra.mxu0 0.0
        %1263 = vmatprep.subr.mxu0 0.0
        %1264 = vmatpush2.xpose.msra.mxu0 0.0
        %1265 = vmatprep.subr.mxu0 0.0
        %1266 = vmatpush2.xpose.msra.mxu0 0.0
        %1267 = vmatprep.mubr.f32.mxu0 0.0
        %1268 = vmatmul.mubr.f32.gmra.mxu0 %v1198
        %v1269 = vpop.f32.mrf.mxu0
        %v1270 = vadd.f32 0.0, %v1269
        %v1271 = vpop.f32.mrf.mxu0
        %1272 = vdwg.mxu0
        %v1274 = vsel %vm816, %v811, 0
        %v1277 = vsel %vm816, %v735, 0
        %1279 = vmatprep.subr.mxu0 0.0
        %1280 = vmatpush1.xpose.msra.mxu0 0.0
        %1281 = vmatprep.subr.mxu0 0.0
        %1282 = vmatpush1.xpose.msra.mxu0 0.0
        %1283 = vmatprep.subr.mxu0 0.0
        %1284 = vmatpush1.xpose.msra.mxu0 0.0
        %1285 = vmatprep.subr.mxu0 0.0
        %1286 = vmatpush1.xpose.msra.mxu0 0.0
        %1287 = vmatprep.subr.mxu0 0.0
        %1288 = vmatpush1.xpose.msra.mxu0 0.0
        %1289 = vmatprep.subr.mxu0 0.0
        %1290 = vmatpush1.xpose.msra.mxu0 0.0
        %1291 = vmatprep.subr.mxu0 0.0
        %1292 = vmatpush1.xpose.msra.mxu0 0.0
        %1293 = vmatprep.subr.mxu0 0.0
        %1294 = vmatpush1.xpose.msra.mxu0 0.0
        %1295 = vmatprep.subr.mxu0 0.0
        %1296 = vmatpush1.xpose.msra.mxu0 0.0
        %1297 = vmatprep.subr.mxu0 0.0
        %1298 = vmatpush1.xpose.msra.mxu0 0.0
        %1299 = vmatprep.subr.mxu0 0.0
        %1300 = vmatpush1.xpose.msra.mxu0 0.0
        %1301 = vmatprep.subr.mxu0 0.0
        %1302 = vmatpush1.xpose.msra.mxu0 0.0
        %1303 = vmatprep.subr.mxu0 0.0
        %1304 = vmatpush1.xpose.msra.mxu0 0.0
        %1305 = vmatprep.subr.mxu0 0.0
        %1306 = vmatpush1.xpose.msra.mxu0 0.0
        %1307 = vmatprep.subr.mxu0 0.0
        %1308 = vmatpush1.xpose.msra.mxu0 0.0
        %1309 = vmatprep.subr.mxu0 0.0
        %1310 = vmatpush1.xpose.msra.mxu0 %v1277
        %1311 = vmatprep.subr.mxu0 0.0
        %1312 = vmatpush2.xpose.msra.mxu0 0.0
        %1313 = vmatprep.subr.mxu0 0.0
        %1314 = vmatpush2.xpose.msra.mxu0 0.0
        %1315 = vmatprep.subr.mxu0 0.0
        %1316 = vmatpush2.xpose.msra.mxu0 0.0
        %1317 = vmatprep.subr.mxu0 0.0
        %1318 = vmatpush2.xpose.msra.mxu0 0.0
        %1319 = vmatprep.subr.mxu0 0.0
        %1320 = vmatpush2.xpose.msra.mxu0 0.0
        %1321 = vmatprep.subr.mxu0 0.0
        %1322 = vmatpush2.xpose.msra.mxu0 0.0
        %1323 = vmatprep.subr.mxu0 0.0
        %1324 = vmatpush2.xpose.msra.mxu0 0.0
        %1325 = vmatprep.subr.mxu0 0.0
        %1326 = vmatpush2.xpose.msra.mxu0 0.0
        %1327 = vmatprep.subr.mxu0 0.0
        %1328 = vmatpush2.xpose.msra.mxu0 0.0
        %1329 = vmatprep.subr.mxu0 0.0
        %1330 = vmatpush2.xpose.msra.mxu0 0.0
        %1331 = vmatprep.subr.mxu0 0.0
        %1332 = vmatpush2.xpose.msra.mxu0 0.0
        %1333 = vmatprep.subr.mxu0 0.0
        %1334 = vmatpush2.xpose.msra.mxu0 0.0
        %1335 = vmatprep.subr.mxu0 0.0
        %1336 = vmatpush2.xpose.msra.mxu0 0.0
        %1337 = vmatprep.subr.mxu0 0.0
        %1338 = vmatpush2.xpose.msra.mxu0 0.0
        %1339 = vmatprep.subr.mxu0 0.0
        %1340 = vmatpush2.xpose.msra.mxu0 0.0
        %1341 = vmatprep.subr.mxu0 0.0
        %1342 = vmatpush2.xpose.msra.mxu0 0.0
        %1343 = vmatprep.mubr.f32.mxu0 0.0
        %1344 = vmatmul.mubr.f32.gmra.mxu0 %v1274
        %v1345 = vpop.f32.mrf.mxu0
        %v1346 = vadd.f32 0.0, %v1345
        %v1347 = vpop.f32.mrf.mxu0
        %1348 = vdwg.mxu0
        %v1350 = vsel %vm816, %v815, 0
        %v1353 = vsel %vm816, %v736, 0
        %1355 = vmatprep.subr.mxu0 0.0
        %1356 = vmatpush1.xpose.msra.mxu0 0.0
        %1357 = vmatprep.subr.mxu0 0.0
        %1358 = vmatpush1.xpose.msra.mxu0 0.0
        %1359 = vmatprep.subr.mxu0 0.0
        %1360 = vmatpush1.xpose.msra.mxu0 0.0
        %1361 = vmatprep.subr.mxu0 0.0
        %1362 = vmatpush1.xpose.msra.mxu0 0.0
        %1363 = vmatprep.subr.mxu0 0.0
        %1364 = vmatpush1.xpose.msra.mxu0 0.0
        %1365 = vmatprep.subr.mxu0 0.0
        %1366 = vmatpush1.xpose.msra.mxu0 0.0
        %1367 = vmatprep.subr.mxu0 0.0
        %1368 = vmatpush1.xpose.msra.mxu0 0.0
        %1369 = vmatprep.subr.mxu0 0.0
        %1370 = vmatpush1.xpose.msra.mxu0 0.0
        %1371 = vmatprep.subr.mxu0 0.0
        %1372 = vmatpush1.xpose.msra.mxu0 0.0
        %1373 = vmatprep.subr.mxu0 0.0
        %1374 = vmatpush1.xpose.msra.mxu0 0.0
        %1375 = vmatprep.subr.mxu0 0.0
        %1376 = vmatpush1.xpose.msra.mxu0 0.0
        %1377 = vmatprep.subr.mxu0 0.0
        %1378 = vmatpush1.xpose.msra.mxu0 0.0
        %1379 = vmatprep.subr.mxu0 0.0
        %1380 = vmatpush1.xpose.msra.mxu0 0.0
        %1381 = vmatprep.subr.mxu0 0.0
        %1382 = vmatpush1.xpose.msra.mxu0 0.0
        %1383 = vmatprep.subr.mxu0 0.0
        %1384 = vmatpush1.xpose.msra.mxu0 0.0
        %1385 = vmatprep.subr.mxu0 0.0
        %1386 = vmatpush1.xpose.msra.mxu0 %v1353
        %1387 = vmatprep.subr.mxu0 0.0
        %1388 = vmatpush2.xpose.msra.mxu0 0.0
        %1389 = vmatprep.subr.mxu0 0.0
        %1390 = vmatpush2.xpose.msra.mxu0 0.0
        %1391 = vmatprep.subr.mxu0 0.0
        %1392 = vmatpush2.xpose.msra.mxu0 0.0
        %1393 = vmatprep.subr.mxu0 0.0
        %1394 = vmatpush2.xpose.msra.mxu0 0.0
        %1395 = vmatprep.subr.mxu0 0.0
        %1396 = vmatpush2.xpose.msra.mxu0 0.0
        %1397 = vmatprep.subr.mxu0 0.0
        %1398 = vmatpush2.xpose.msra.mxu0 0.0
        %1399 = vmatprep.subr.mxu0 0.0
        %1400 = vmatpush2.xpose.msra.mxu0 0.0
        %1401 = vmatprep.subr.mxu0 0.0
        %1402 = vmatpush2.xpose.msra.mxu0 0.0
        %1403 = vmatprep.subr.mxu0 0.0
        %1404 = vmatpush2.xpose.msra.mxu0 0.0
        %1405 = vmatprep.subr.mxu0 0.0
        %1406 = vmatpush2.xpose.msra.mxu0 0.0
        %1407 = vmatprep.subr.mxu0 0.0
        %1408 = vmatpush2.xpose.msra.mxu0 0.0
        %1409 = vmatprep.subr.mxu0 0.0
        %1410 = vmatpush2.xpose.msra.mxu0 0.0
        %1411 = vmatprep.subr.mxu0 0.0
        %1412 = vmatpush2.xpose.msra.mxu0 0.0
        %1413 = vmatprep.subr.mxu0 0.0
        %1414 = vmatpush2.xpose.msra.mxu0 0.0
        %1415 = vmatprep.subr.mxu0 0.0
        %1416 = vmatpush2.xpose.msra.mxu0 0.0
        %1417 = vmatprep.subr.mxu0 0.0
        %1418 = vmatpush2.xpose.msra.mxu0 0.0
        %1419 = vmatprep.mubr.f32.mxu0 0.0
        %1420 = vmatmul.mubr.f32.gmra.mxu0 %v1350
        %v1421 = vpop.f32.mrf.mxu0
        %v1422 = vadd.f32 0.0, %v1421
        %v1423 = vpop.f32.mrf.mxu0
        %1424 = vdwg.mxu0
        %v1433 = vrot.slane %v966, 7
        %vm1434 = vcmask 1041409
        %v1435 = vsel %vm1434, %v1433, %v890
        %v1436 = vrot.slane %v1042, 6
        %vm1437 = vcmask 1042434
        %v1438 = vsel %vm1437, %v1436, %v1435
        %v1439 = vrot.slane %v1118, 5
        %vm1440 = vcmask 1043459
        %v1441 = vsel %vm1440, %v1439, %v1438
        %v1442 = vrot.slane %v1194, 4
        %vm1443 = vcmask 1044484
        %v1444 = vsel %vm1443, %v1442, %v1441
        %v1445 = vrot.slane %v1270, 3
        %vm1446 = vcmask 1045509
        %v1447 = vsel %vm1446, %v1445, %v1444
        %v1448 = vrot.slane %v1346, 2
        %vm1449 = vcmask 1046534
        %v1450 = vsel %vm1449, %v1448, %v1447
        %v1451 = vrot.slane %v1422, 1
        %vm1452 = vcmask 1047559
        %v1453 = vsel %vm1452, %v1451, %v1450
        %v1455 = vsel %vm816, %v564, 0
        %v1458 = vsel %vm816, %v645, 0
        %1460 = vmatprep.subr.mxu0 0.0
        %1461 = vmatpush1.xpose.msra.mxu0 0.0
        %1462 = vmatprep.subr.mxu0 0.0
        %1463 = vmatpush1.xpose.msra.mxu0 0.0
        %1464 = vmatprep.subr.mxu0 0.0
        %1465 = vmatpush1.xpose.msra.mxu0 0.0
        %1466 = vmatprep.subr.mxu0 0.0
        %1467 = vmatpush1.xpose.msra.mxu0 0.0
        %1468 = vmatprep.subr.mxu0 0.0
        %1469 = vmatpush1.xpose.msra.mxu0 0.0
        %1470 = vmatprep.subr.mxu0 0.0
        %1471 = vmatpush1.xpose.msra.mxu0 0.0
        %1472 = vmatprep.subr.mxu0 0.0
        %1473 = vmatpush1.xpose.msra.mxu0 0.0
        %1474 = vmatprep.subr.mxu0 0.0
        %1475 = vmatpush1.xpose.msra.mxu0 0.0
        %1476 = vmatprep.subr.mxu0 0.0
        %1477 = vmatpush1.xpose.msra.mxu0 0.0
        %1478 = vmatprep.subr.mxu0 0.0
        %1479 = vmatpush1.xpose.msra.mxu0 0.0
        %1480 = vmatprep.subr.mxu0 0.0
        %1481 = vmatpush1.xpose.msra.mxu0 0.0
        %1482 = vmatprep.subr.mxu0 0.0
        %1483 = vmatpush1.xpose.msra.mxu0 0.0
        %1484 = vmatprep.subr.mxu0 0.0
        %1485 = vmatpush1.xpose.msra.mxu0 0.0
        %1486 = vmatprep.subr.mxu0 0.0
        %1487 = vmatpush1.xpose.msra.mxu0 0.0
        %1488 = vmatprep.subr.mxu0 0.0
        %1489 = vmatpush1.xpose.msra.mxu0 0.0
        %1490 = vmatprep.subr.mxu0 0.0
        %1491 = vmatpush1.xpose.msra.mxu0 %v1458
        %1492 = vmatprep.subr.mxu0 0.0
        %1493 = vmatpush2.xpose.msra.mxu0 0.0
        %1494 = vmatprep.subr.mxu0 0.0
        %1495 = vmatpush2.xpose.msra.mxu0 0.0
        %1496 = vmatprep.subr.mxu0 0.0
        %1497 = vmatpush2.xpose.msra.mxu0 0.0
        %1498 = vmatprep.subr.mxu0 0.0
        %1499 = vmatpush2.xpose.msra.mxu0 0.0
        %1500 = vmatprep.subr.mxu0 0.0
        %1501 = vmatpush2.xpose.msra.mxu0 0.0
        %1502 = vmatprep.subr.mxu0 0.0
        %1503 = vmatpush2.xpose.msra.mxu0 0.0
        %1504 = vmatprep.subr.mxu0 0.0
        %1505 = vmatpush2.xpose.msra.mxu0 0.0
        %1506 = vmatprep.subr.mxu0 0.0
        %1507 = vmatpush2.xpose.msra.mxu0 0.0
        %1508 = vmatprep.subr.mxu0 0.0
        %1509 = vmatpush2.xpose.msra.mxu0 0.0
        %1510 = vmatprep.subr.mxu0 0.0
        %1511 = vmatpush2.xpose.msra.mxu0 0.0
        %1512 = vmatprep.subr.mxu0 0.0
        %1513 = vmatpush2.xpose.msra.mxu0 0.0
        %1514 = vmatprep.subr.mxu0 0.0
        %1515 = vmatpush2.xpose.msra.mxu0 0.0
        %1516 = vmatprep.subr.mxu0 0.0
        %1517 = vmatpush2.xpose.msra.mxu0 0.0
        %1518 = vmatprep.subr.mxu0 0.0
        %1519 = vmatpush2.xpose.msra.mxu0 0.0
        %1520 = vmatprep.subr.mxu0 0.0
        %1521 = vmatpush2.xpose.msra.mxu0 0.0
        %1522 = vmatprep.subr.mxu0 0.0
        %1523 = vmatpush2.xpose.msra.mxu0 0.0
        %1524 = vmatprep.mubr.f32.mxu0 0.0
        %1525 = vmatmul.mubr.f32.gmra.mxu0 %v1455
        %v1526 = vpop.f32.mrf.mxu0
        %v1527 = vadd.f32 %v1453, %v1526
        %v1528 = vpop.f32.mrf.mxu0
        %1529 = vdwg.mxu0
        %v1530 = vmul.f32 %v1527, 0.35355338
        %v1532 = vlaneseq
        %v1533 = vshrl.u32 %v1532, 7
        %v1534 = vsub.s32 0, %v1533
        %v1535 = vrot.slane %v737, %v1534
        %v1537 = vadd.f32 %v1530, %v1535
        %v1538 = vsel %vm816, %v1537, -inf
        %1539 = vmax.xlane.f32.xlu0 %v1538
        %v1540 = vpop.xlane.xlu0 %1539
        %v1541 = vsub.f32 %v1537, %v1540
        %v1542 = vmul.f32 %v1541, 1.442695
        %v1543 = vpow.pop %v1542
        %v1544 = vsel %vm816, %v1543, 0.0
        %1545 = vadd.xlane.f32.xlu0 %v1544
        %v1546 = vpop.xlane.xlu0 %1545
        %v1547 = vrcp.pop %v1546
        %v1548 = vmul.f32 %v1546, %v1547
        %v1549 = vsub.f32 2.0, %v1548
        %v1550 = vmul.f32 %v1547, %v1549
        %v1551 = vmul.f32 %v1543, %v1550
        %1552 = vst.msk [vmem:[%s477] sm:$0xff] %vm816, %v1551
        %v1554 = vsel %vm816, %v1551, 0
        %1556 = vmatprep.subr.mxu0 0.0
        %1557 = vmatpush1.msra.mxu0 0.0
        %1558 = vmatprep.subr.mxu0 0.0
        %1559 = vmatpush1.msra.mxu0 0.0
        %1560 = vmatprep.subr.mxu0 0.0
        %1561 = vmatpush1.msra.mxu0 0.0
        %1562 = vmatprep.subr.mxu0 0.0
        %1563 = vmatpush1.msra.mxu0 0.0
        %1564 = vmatprep.subr.mxu0 0.0
        %1565 = vmatpush1.msra.mxu0 0.0
        %1566 = vmatprep.subr.mxu0 0.0
        %1567 = vmatpush1.msra.mxu0 0.0
        %1568 = vmatprep.subr.mxu0 0.0
        %1569 = vmatpush1.msra.mxu0 0.0
        %1570 = vmatprep.subr.mxu0 0.0
        %1571 = vmatpush1.msra.mxu0 0.0
        %1572 = vmatprep.subr.mxu0 0.0
        %1573 = vmatpush1.msra.mxu0 0.0
        %1574 = vmatprep.subr.mxu0 0.0
        %1575 = vmatpush1.msra.mxu0 0.0
        %1576 = vmatprep.subr.mxu0 0.0
        %1577 = vmatpush1.msra.mxu0 0.0
        %1578 = vmatprep.subr.mxu0 0.0
        %1579 = vmatpush1.msra.mxu0 0.0
        %1580 = vmatprep.subr.mxu0 0.0
        %1581 = vmatpush1.msra.mxu0 0.0
        %1582 = vmatprep.subr.mxu0 0.0
        %1583 = vmatpush1.msra.mxu0 0.0
        %1584 = vmatprep.subr.mxu0 0.0
        %1585 = vmatpush1.msra.mxu0 0.0
        %1586 = vmatprep.subr.mxu0 0.0
        %1587 = vmatpush1.msra.mxu0 %v726
        %1588 = vmatprep.subr.mxu0 0.0
        %1589 = vmatpush2.msra.mxu0 0.0
        %1590 = vmatprep.subr.mxu0 0.0
        %1591 = vmatpush2.msra.mxu0 0.0
        %1592 = vmatprep.subr.mxu0 0.0
        %1593 = vmatpush2.msra.mxu0 0.0
        %1594 = vmatprep.subr.mxu0 0.0
        %1595 = vmatpush2.msra.mxu0 0.0
        %1596 = vmatprep.subr.mxu0 0.0
        %1597 = vmatpush2.msra.mxu0 0.0
        %1598 = vmatprep.subr.mxu0 0.0
        %1599 = vmatpush2.msra.mxu0 0.0
        %1600 = vmatprep.subr.mxu0 0.0
        %1601 = vmatpush2.msra.mxu0 0.0
        %1602 = vmatprep.subr.mxu0 0.0
        %1603 = vmatpush2.msra.mxu0 0.0
        %1604 = vmatprep.subr.mxu0 0.0
        %1605 = vmatpush2.msra.mxu0 0.0
        %1606 = vmatprep.subr.mxu0 0.0
        %1607 = vmatpush2.msra.mxu0 0.0
        %1608 = vmatprep.subr.mxu0 0.0
        %1609 = vmatpush2.msra.mxu0 0.0
        %1610 = vmatprep.subr.mxu0 0.0
        %1611 = vmatpush2.msra.mxu0 0.0
        %1612 = vmatprep.subr.mxu0 0.0
        %1613 = vmatpush2.msra.mxu0 0.0
        %1614 = vmatprep.subr.mxu0 0.0
        %1615 = vmatpush2.msra.mxu0 0.0
        %1616 = vmatprep.subr.mxu0 0.0
        %1617 = vmatpush2.msra.mxu0 0.0
        %1618 = vmatprep.subr.mxu0 0.0
        %1619 = vmatpush2.msra.mxu0 0.0
        %1620 = vmatprep.mubr.f32.mxu0 0.0
        %1621 = vmatmul.mubr.f32.gmra.mxu0 %v1554
        %v1622 = vpop.f32.mrf.mxu0
        %v1623 = vadd.f32 0.0, %v1622
        %v1624 = vpop.f32.mrf.mxu0
        %1625 = vdwg.mxu0
        %1626 = vrot.lane.b32.xlu0 %v645, 120
        %v1627 = vpop.permute.xlu0 %1626
        %v1628 = vrot.slane %v890, 1
        %v1629 = vsel %vm1434, %v966, %v1628
        %v1630 = vrot.slane %v1042, 7
        %v1631 = vsel %vm1437, %v1630, %v1629
        %v1632 = vrot.slane %v1118, 6
        %v1633 = vsel %vm1440, %v1632, %v1631
        %v1634 = vrot.slane %v1194, 5
        %v1635 = vsel %vm1443, %v1634, %v1633
        %v1636 = vrot.slane %v1270, 4
        %v1637 = vsel %vm1446, %v1636, %v1635
        %v1638 = vrot.slane %v1346, 3
        %v1639 = vsel %vm1449, %v1638, %v1637
        %v1640 = vrot.slane %v1422, 2
        %v1641 = vsel %vm1452, %v1640, %v1639
        %v1643 = vsel %vm816, %v740, 0
        %v1645 = vsel %vm816, %v1627, 0
        %1647 = vmatprep.subr.mxu0 0.0
        %1648 = vmatpush1.xpose.msra.mxu0 0.0
        %1649 = vmatprep.subr.mxu0 0.0
        %1650 = vmatpush1.xpose.msra.mxu0 0.0
        %1651 = vmatprep.subr.mxu0 0.0
        %1652 = vmatpush1.xpose.msra.mxu0 0.0
        %1653 = vmatprep.subr.mxu0 0.0
        %1654 = vmatpush1.xpose.msra.mxu0 0.0
        %1655 = vmatprep.subr.mxu0 0.0
        %1656 = vmatpush1.xpose.msra.mxu0 0.0
        %1657 = vmatprep.subr.mxu0 0.0
        %1658 = vmatpush1.xpose.msra.mxu0 0.0
        %1659 = vmatprep.subr.mxu0 0.0
        %1660 = vmatpush1.xpose.msra.mxu0 0.0
        %1661 = vmatprep.subr.mxu0 0.0
        %1662 = vmatpush1.xpose.msra.mxu0 0.0
        %1663 = vmatprep.subr.mxu0 0.0
        %1664 = vmatpush1.xpose.msra.mxu0 0.0
        %1665 = vmatprep.subr.mxu0 0.0
        %1666 = vmatpush1.xpose.msra.mxu0 0.0
        %1667 = vmatprep.subr.mxu0 0.0
        %1668 = vmatpush1.xpose.msra.mxu0 0.0
        %1669 = vmatprep.subr.mxu0 0.0
        %1670 = vmatpush1.xpose.msra.mxu0 0.0
        %1671 = vmatprep.subr.mxu0 0.0
        %1672 = vmatpush1.xpose.msra.mxu0 0.0
        %1673 = vmatprep.subr.mxu0 0.0
        %1674 = vmatpush1.xpose.msra.mxu0 0.0
        %1675 = vmatprep.subr.mxu0 0.0
        %1676 = vmatpush1.xpose.msra.mxu0 0.0
        %1677 = vmatprep.subr.mxu0 0.0
        %1678 = vmatpush1.xpose.msra.mxu0 %v1645
        %1679 = vmatprep.subr.mxu0 0.0
        %1680 = vmatpush2.xpose.msra.mxu0 0.0
        %1681 = vmatprep.subr.mxu0 0.0
        %1682 = vmatpush2.xpose.msra.mxu0 0.0
        %1683 = vmatprep.subr.mxu0 0.0
        %1684 = vmatpush2.xpose.msra.mxu0 0.0
        %1685 = vmatprep.subr.mxu0 0.0
        %1686 = vmatpush2.xpose.msra.mxu0 0.0
        %1687 = vmatprep.subr.mxu0 0.0
        %1688 = vmatpush2.xpose.msra.mxu0 0.0
        %1689 = vmatprep.subr.mxu0 0.0
        %1690 = vmatpush2.xpose.msra.mxu0 0.0
        %1691 = vmatprep.subr.mxu0 0.0
        %1692 = vmatpush2.xpose.msra.mxu0 0.0
        %1693 = vmatprep.subr.mxu0 0.0
        %1694 = vmatpush2.xpose.msra.mxu0 0.0
        %1695 = vmatprep.subr.mxu0 0.0
        %1696 = vmatpush2.xpose.msra.mxu0 0.0
        %1697 = vmatprep.subr.mxu0 0.0
        %1698 = vmatpush2.xpose.msra.mxu0 0.0
        %1699 = vmatprep.subr.mxu0 0.0
        %1700 = vmatpush2.xpose.msra.mxu0 0.0
        %1701 = vmatprep.subr.mxu0 0.0
        %1702 = vmatpush2.xpose.msra.mxu0 0.0
        %1703 = vmatprep.subr.mxu0 0.0
        %1704 = vmatpush2.xpose.msra.mxu0 0.0
        %1705 = vmatprep.subr.mxu0 0.0
        %1706 = vmatpush2.xpose.msra.mxu0 0.0
        %1707 = vmatprep.subr.mxu0 0.0
        %1708 = vmatpush2.xpose.msra.mxu0 0.0
        %1709 = vmatprep.subr.mxu0 0.0
        %1710 = vmatpush2.xpose.msra.mxu0 0.0
        %1711 = vmatprep.mubr.f32.mxu0 0.0
        %1712 = vmatmul.mubr.f32.gmra.mxu0 %v1643
        %v1713 = vpop.f32.mrf.mxu0
        %v1714 = vadd.f32 %v1641, %v1713
        %v1715 = vpop.f32.mrf.mxu0
        %1716 = vdwg.mxu0
        %v1717 = vmul.f32 %v1714, 0.35355338
        %v1718 = vadd.f32 %v1717, %v1535
        %v1719 = vsel %vm816, %v1718, -inf
        %1720 = vmax.xlane.f32.xlu0 %v1719
        %v1721 = vpop.xlane.xlu0 %1720
        %v1722 = vsub.f32 %v1718, %v1721
        %v1723 = vmul.f32 %v1722, 1.442695
        %v1724 = vpow.pop %v1723
        %v1725 = vsel %vm816, %v1724, 0.0
        %1726 = vadd.xlane.f32.xlu0 %v1725
        %v1727 = vpop.xlane.xlu0 %1726
        %v1728 = vrcp.pop %v1727
        %v1729 = vmul.f32 %v1727, %v1728
        %v1730 = vsub.f32 2.0, %v1729
        %v1731 = vmul.f32 %v1728, %v1730
        %v1732 = vmul.f32 %v1724, %v1731
        %s1733 = scalar_lea.vmem %s477, 8 [#allocation12]
        %1734 = vst.msk [vmem:[%s1733] sm:$0xff] %vm816, %v1732
        %1736 = vrot.lane.b32.xlu0 %v726, 120
        %v1737 = vpop.permute.xlu0 %1736
        %v1740 = vsel %vm816, %v1732, 0
        %1742 = vmatprep.subr.mxu0 0.0
        %1743 = vmatpush1.msra.mxu0 0.0
        %1744 = vmatprep.subr.mxu0 0.0
        %1745 = vmatpush1.msra.mxu0 0.0
        %1746 = vmatprep.subr.mxu0 0.0
        %1747 = vmatpush1.msra.mxu0 0.0
        %1748 = vmatprep.subr.mxu0 0.0
        %1749 = vmatpush1.msra.mxu0 0.0
        %1750 = vmatprep.subr.mxu0 0.0
        %1751 = vmatpush1.msra.mxu0 0.0
        %1752 = vmatprep.subr.mxu0 0.0
        %1753 = vmatpush1.msra.mxu0 0.0
        %1754 = vmatprep.subr.mxu0 0.0
        %1755 = vmatpush1.msra.mxu0 0.0
        %1756 = vmatprep.subr.mxu0 0.0
        %1757 = vmatpush1.msra.mxu0 0.0
        %1758 = vmatprep.subr.mxu0 0.0
        %1759 = vmatpush1.msra.mxu0 0.0
        %1760 = vmatprep.subr.mxu0 0.0
        %1761 = vmatpush1.msra.mxu0 0.0
        %1762 = vmatprep.subr.mxu0 0.0
        %1763 = vmatpush1.msra.mxu0 0.0
        %1764 = vmatprep.subr.mxu0 0.0
        %1765 = vmatpush1.msra.mxu0 0.0
        %1766 = vmatprep.subr.mxu0 0.0
        %1767 = vmatpush1.msra.mxu0 0.0
        %1768 = vmatprep.subr.mxu0 0.0
        %1769 = vmatpush1.msra.mxu0 0.0
        %1770 = vmatprep.subr.mxu0 0.0
        %1771 = vmatpush1.msra.mxu0 0.0
        %1772 = vmatprep.subr.mxu0 0.0
        %1773 = vmatpush1.msra.mxu0 %v1737
        %1774 = vmatprep.subr.mxu0 0.0
        %1775 = vmatpush2.msra.mxu0 0.0
        %1776 = vmatprep.subr.mxu0 0.0
        %1777 = vmatpush2.msra.mxu0 0.0
        %1778 = vmatprep.subr.mxu0 0.0
        %1779 = vmatpush2.msra.mxu0 0.0
        %1780 = vmatprep.subr.mxu0 0.0
        %1781 = vmatpush2.msra.mxu0 0.0
        %1782 = vmatprep.subr.mxu0 0.0
        %1783 = vmatpush2.msra.mxu0 0.0
        %1784 = vmatprep.subr.mxu0 0.0
        %1785 = vmatpush2.msra.mxu0 0.0
        %1786 = vmatprep.subr.mxu0 0.0
        %1787 = vmatpush2.msra.mxu0 0.0
        %1788 = vmatprep.subr.mxu0 0.0
        %1789 = vmatpush2.msra.mxu0 0.0
        %1790 = vmatprep.subr.mxu0 0.0
        %1791 = vmatpush2.msra.mxu0 0.0
        %1792 = vmatprep.subr.mxu0 0.0
        %1793 = vmatpush2.msra.mxu0 0.0
        %1794 = vmatprep.subr.mxu0 0.0
        %1795 = vmatpush2.msra.mxu0 0.0
        %1796 = vmatprep.subr.mxu0 0.0
        %1797 = vmatpush2.msra.mxu0 0.0
        %1798 = vmatprep.subr.mxu0 0.0
        %1799 = vmatpush2.msra.mxu0 0.0
        %1800 = vmatprep.subr.mxu0 0.0
        %1801 = vmatpush2.msra.mxu0 0.0
        %1802 = vmatprep.subr.mxu0 0.0
        %1803 = vmatpush2.msra.mxu0 0.0
        %1804 = vmatprep.subr.mxu0 0.0
        %1805 = vmatpush2.msra.mxu0 0.0
        %1806 = vmatprep.mubr.f32.mxu0 0.0
        %1807 = vmatmul.mubr.f32.gmra.mxu0 %v1740
        %v1808 = vpop.f32.mrf.mxu0
        %v1809 = vadd.f32 0.0, %v1808
        %v1810 = vpop.f32.mrf.mxu0
        %1811 = vdwg.mxu0
        %1812 = vrot.lane.b32.xlu0 %v645, 112
        %v1813 = vpop.permute.xlu0 %1812
        %v1814 = vrot.slane %v890, 2
        %v1815 = vrot.slane %v966, 1
        %v1816 = vsel %vm1434, %v1815, %v1814
        %v1817 = vsel %vm1437, %v1042, %v1816
        %v1818 = vrot.slane %v1118, 7
        %v1819 = vsel %vm1440, %v1818, %v1817
        %v1820 = vrot.slane %v1194, 6
        %v1821 = vsel %vm1443, %v1820, %v1819
        %v1822 = vrot.slane %v1270, 5
        %v1823 = vsel %vm1446, %v1822, %v1821
        %v1824 = vrot.slane %v1346, 4
        %v1825 = vsel %vm1449, %v1824, %v1823
        %v1826 = vrot.slane %v1422, 3
        %v1827 = vsel %vm1452, %v1826, %v1825
        %v1829 = vsel %vm816, %v743, 0
        %v1831 = vsel %vm816, %v1813, 0
        %1833 = vmatprep.subr.mxu0 0.0
        %1834 = vmatpush1.xpose.msra.mxu0 0.0
        %1835 = vmatprep.subr.mxu0 0.0
        %1836 = vmatpush1.xpose.msra.mxu0 0.0
        %1837 = vmatprep.subr.mxu0 0.0
        %1838 = vmatpush1.xpose.msra.mxu0 0.0
        %1839 = vmatprep.subr.mxu0 0.0
        %1840 = vmatpush1.xpose.msra.mxu0 0.0
        %1841 = vmatprep.subr.mxu0 0.0
        %1842 = vmatpush1.xpose.msra.mxu0 0.0
        %1843 = vmatprep.subr.mxu0 0.0
        %1844 = vmatpush1.xpose.msra.mxu0 0.0
        %1845 = vmatprep.subr.mxu0 0.0
        %1846 = vmatpush1.xpose.msra.mxu0 0.0
        %1847 = vmatprep.subr.mxu0 0.0
        %1848 = vmatpush1.xpose.msra.mxu0 0.0
        %1849 = vmatprep.subr.mxu0 0.0
        %1850 = vmatpush1.xpose.msra.mxu0 0.0
        %1851 = vmatprep.subr.mxu0 0.0
        %1852 = vmatpush1.xpose.msra.mxu0 0.0
        %1853 = vmatprep.subr.mxu0 0.0
        %1854 = vmatpush1.xpose.msra.mxu0 0.0
        %1855 = vmatprep.subr.mxu0 0.0
        %1856 = vmatpush1.xpose.msra.mxu0 0.0
        %1857 = vmatprep.subr.mxu0 0.0
        %1858 = vmatpush1.xpose.msra.mxu0 0.0
        %1859 = vmatprep.subr.mxu0 0.0
        %1860 = vmatpush1.xpose.msra.mxu0 0.0
        %1861 = vmatprep.subr.mxu0 0.0
        %1862 = vmatpush1.xpose.msra.mxu0 0.0
        %1863 = vmatprep.subr.mxu0 0.0
        %1864 = vmatpush1.xpose.msra.mxu0 %v1831
        %1865 = vmatprep.subr.mxu0 0.0
        %1866 = vmatpush2.xpose.msra.mxu0 0.0
        %1867 = vmatprep.subr.mxu0 0.0
        %1868 = vmatpush2.xpose.msra.mxu0 0.0
        %1869 = vmatprep.subr.mxu0 0.0
        %1870 = vmatpush2.xpose.msra.mxu0 0.0
        %1871 = vmatprep.subr.mxu0 0.0
        %1872 = vmatpush2.xpose.msra.mxu0 0.0
        %1873 = vmatprep.subr.mxu0 0.0
        %1874 = vmatpush2.xpose.msra.mxu0 0.0
        %1875 = vmatprep.subr.mxu0 0.0
        %1876 = vmatpush2.xpose.msra.mxu0 0.0
        %1877 = vmatprep.subr.mxu0 0.0
        %1878 = vmatpush2.xpose.msra.mxu0 0.0
        %1879 = vmatprep.subr.mxu0 0.0
        %1880 = vmatpush2.xpose.msra.mxu0 0.0
        %1881 = vmatprep.subr.mxu0 0.0
        %1882 = vmatpush2.xpose.msra.mxu0 0.0
        %1883 = vmatprep.subr.mxu0 0.0
        %1884 = vmatpush2.xpose.msra.mxu0 0.0
        %1885 = vmatprep.subr.mxu0 0.0
        %1886 = vmatpush2.xpose.msra.mxu0 0.0
        %1887 = vmatprep.subr.mxu0 0.0
        %1888 = vmatpush2.xpose.msra.mxu0 0.0
        %1889 = vmatprep.subr.mxu0 0.0
        %1890 = vmatpush2.xpose.msra.mxu0 0.0
        %1891 = vmatprep.subr.mxu0 0.0
        %1892 = vmatpush2.xpose.msra.mxu0 0.0
        %1893 = vmatprep.subr.mxu0 0.0
        %1894 = vmatpush2.xpose.msra.mxu0 0.0
        %1895 = vmatprep.subr.mxu0 0.0
        %1896 = vmatpush2.xpose.msra.mxu0 0.0
        %1897 = vmatprep.mubr.f32.mxu0 0.0
        %1898 = vmatmul.mubr.f32.gmra.mxu0 %v1829
        %v1899 = vpop.f32.mrf.mxu0
        %v1900 = vadd.f32 %v1827, %v1899
        %v1901 = vpop.f32.mrf.mxu0
        %1902 = vdwg.mxu0
        %v1903 = vmul.f32 %v1900, 0.35355338
        %v1904 = vadd.f32 %v1903, %v1535
        %v1905 = vsel %vm816, %v1904, -inf
        %1906 = vmax.xlane.f32.xlu0 %v1905
        %v1907 = vpop.xlane.xlu0 %1906
        %v1908 = vsub.f32 %v1904, %v1907
        %v1909 = vmul.f32 %v1908, 1.442695
        %v1910 = vpow.pop %v1909
        %v1911 = vsel %vm816, %v1910, 0.0
        %1912 = vadd.xlane.f32.xlu0 %v1911
        %v1913 = vpop.xlane.xlu0 %1912
        %v1914 = vrcp.pop %v1913
        %v1915 = vmul.f32 %v1913, %v1914
        %v1916 = vsub.f32 2.0, %v1915
        %v1917 = vmul.f32 %v1914, %v1916
        %v1918 = vmul.f32 %v1910, %v1917
        %s1919 = scalar_lea.vmem %s477, 16 [#allocation12]
        %1920 = vst.msk [vmem:[%s1919] sm:$0xff] %vm816, %v1918
        %1921 = vrot.lane.b32.xlu0 %v726, 112
        %v1922 = vpop.permute.xlu0 %1921
        %v1925 = vsel %vm816, %v1918, 0
        %1927 = vmatprep.subr.mxu0 0.0
        %1928 = vmatpush1.msra.mxu0 0.0
        %1929 = vmatprep.subr.mxu0 0.0
        %1930 = vmatpush1.msra.mxu0 0.0
        %1931 = vmatprep.subr.mxu0 0.0
        %1932 = vmatpush1.msra.mxu0 0.0
        %1933 = vmatprep.subr.mxu0 0.0
        %1934 = vmatpush1.msra.mxu0 0.0
        %1935 = vmatprep.subr.mxu0 0.0
        %1936 = vmatpush1.msra.mxu0 0.0
        %1937 = vmatprep.subr.mxu0 0.0
        %1938 = vmatpush1.msra.mxu0 0.0
        %1939 = vmatprep.subr.mxu0 0.0
        %1940 = vmatpush1.msra.mxu0 0.0
        %1941 = vmatprep.subr.mxu0 0.0
        %1942 = vmatpush1.msra.mxu0 0.0
        %1943 = vmatprep.subr.mxu0 0.0
        %1944 = vmatpush1.msra.mxu0 0.0
        %1945 = vmatprep.subr.mxu0 0.0
        %1946 = vmatpush1.msra.mxu0 0.0
        %1947 = vmatprep.subr.mxu0 0.0
        %1948 = vmatpush1.msra.mxu0 0.0
        %1949 = vmatprep.subr.mxu0 0.0
        %1950 = vmatpush1.msra.mxu0 0.0
        %1951 = vmatprep.subr.mxu0 0.0
        %1952 = vmatpush1.msra.mxu0 0.0
        %1953 = vmatprep.subr.mxu0 0.0
        %1954 = vmatpush1.msra.mxu0 0.0
        %1955 = vmatprep.subr.mxu0 0.0
        %1956 = vmatpush1.msra.mxu0 0.0
        %1957 = vmatprep.subr.mxu0 0.0
        %1958 = vmatpush1.msra.mxu0 %v1922
        %1959 = vmatprep.subr.mxu0 0.0
        %1960 = vmatpush2.msra.mxu0 0.0
        %1961 = vmatprep.subr.mxu0 0.0
        %1962 = vmatpush2.msra.mxu0 0.0
        %1963 = vmatprep.subr.mxu0 0.0
        %1964 = vmatpush2.msra.mxu0 0.0
        %1965 = vmatprep.subr.mxu0 0.0
        %1966 = vmatpush2.msra.mxu0 0.0
        %1967 = vmatprep.subr.mxu0 0.0
        %1968 = vmatpush2.msra.mxu0 0.0
        %1969 = vmatprep.subr.mxu0 0.0
        %1970 = vmatpush2.msra.mxu0 0.0
        %1971 = vmatprep.subr.mxu0 0.0
        %1972 = vmatpush2.msra.mxu0 0.0
        %1973 = vmatprep.subr.mxu0 0.0
        %1974 = vmatpush2.msra.mxu0 0.0
        %1975 = vmatprep.subr.mxu0 0.0
        %1976 = vmatpush2.msra.mxu0 0.0
        %1977 = vmatprep.subr.mxu0 0.0
        %1978 = vmatpush2.msra.mxu0 0.0
        %1979 = vmatprep.subr.mxu0 0.0
        %1980 = vmatpush2.msra.mxu0 0.0
        %1981 = vmatprep.subr.mxu0 0.0
        %1982 = vmatpush2.msra.mxu0 0.0
        %1983 = vmatprep.subr.mxu0 0.0
        %1984 = vmatpush2.msra.mxu0 0.0
        %1985 = vmatprep.subr.mxu0 0.0
        %1986 = vmatpush2.msra.mxu0 0.0
        %1987 = vmatprep.subr.mxu0 0.0
        %1988 = vmatpush2.msra.mxu0 0.0
        %1989 = vmatprep.subr.mxu0 0.0
        %1990 = vmatpush2.msra.mxu0 0.0
        %1991 = vmatprep.mubr.f32.mxu0 0.0
        %1992 = vmatmul.mubr.f32.gmra.mxu0 %v1925
        %v1993 = vpop.f32.mrf.mxu0
        %v1994 = vadd.f32 0.0, %v1993
        %v1995 = vpop.f32.mrf.mxu0
        %1996 = vdwg.mxu0
        %1997 = vrot.lane.b32.xlu0 %v645, 104
        %v1998 = vpop.permute.xlu0 %1997
        %v1999 = vrot.slane %v890, 3
        %v2000 = vrot.slane %v966, 2
        %v2001 = vsel %vm1434, %v2000, %v1999
        %v2002 = vrot.slane %v1042, 1
        %v2003 = vsel %vm1437, %v2002, %v2001
        %v2004 = vsel %vm1440, %v1118, %v2003
        %v2005 = vrot.slane %v1194, 7
        %v2006 = vsel %vm1443, %v2005, %v2004
        %v2007 = vrot.slane %v1270, 6
        %v2008 = vsel %vm1446, %v2007, %v2006
        %v2009 = vrot.slane %v1346, 5
        %v2010 = vsel %vm1449, %v2009, %v2008
        %v2011 = vrot.slane %v1422, 4
        %v2012 = vsel %vm1452, %v2011, %v2010
        %v2014 = vsel %vm816, %v746, 0
        %v2016 = vsel %vm816, %v1998, 0
        %2018 = vmatprep.subr.mxu0 0.0
        %2019 = vmatpush1.xpose.msra.mxu0 0.0
        %2020 = vmatprep.subr.mxu0 0.0
        %2021 = vmatpush1.xpose.msra.mxu0 0.0
        %2022 = vmatprep.subr.mxu0 0.0
        %2023 = vmatpush1.xpose.msra.mxu0 0.0
        %2024 = vmatprep.subr.mxu0 0.0
        %2025 = vmatpush1.xpose.msra.mxu0 0.0
        %2026 = vmatprep.subr.mxu0 0.0
        %2027 = vmatpush1.xpose.msra.mxu0 0.0
        %2028 = vmatprep.subr.mxu0 0.0
        %2029 = vmatpush1.xpose.msra.mxu0 0.0
        %2030 = vmatprep.subr.mxu0 0.0
        %2031 = vmatpush1.xpose.msra.mxu0 0.0
        %2032 = vmatprep.subr.mxu0 0.0
        %2033 = vmatpush1.xpose.msra.mxu0 0.0
        %2034 = vmatprep.subr.mxu0 0.0
        %2035 = vmatpush1.xpose.msra.mxu0 0.0
        %2036 = vmatprep.subr.mxu0 0.0
        %2037 = vmatpush1.xpose.msra.mxu0 0.0
        %2038 = vmatprep.subr.mxu0 0.0
        %2039 = vmatpush1.xpose.msra.mxu0 0.0
        %2040 = vmatprep.subr.mxu0 0.0
        %2041 = vmatpush1.xpose.msra.mxu0 0.0
        %2042 = vmatprep.subr.mxu0 0.0
        %2043 = vmatpush1.xpose.msra.mxu0 0.0
        %2044 = vmatprep.subr.mxu0 0.0
        %2045 = vmatpush1.xpose.msra.mxu0 0.0
        %2046 = vmatprep.subr.mxu0 0.0
        %2047 = vmatpush1.xpose.msra.mxu0 0.0
        %2048 = vmatprep.subr.mxu0 0.0
        %2049 = vmatpush1.xpose.msra.mxu0 %v2016
        %2050 = vmatprep.subr.mxu0 0.0
        %2051 = vmatpush2.xpose.msra.mxu0 0.0
        %2052 = vmatprep.subr.mxu0 0.0
        %2053 = vmatpush2.xpose.msra.mxu0 0.0
        %2054 = vmatprep.subr.mxu0 0.0
        %2055 = vmatpush2.xpose.msra.mxu0 0.0
        %2056 = vmatprep.subr.mxu0 0.0
        %2057 = vmatpush2.xpose.msra.mxu0 0.0
        %2058 = vmatprep.subr.mxu0 0.0
        %2059 = vmatpush2.xpose.msra.mxu0 0.0
        %2060 = vmatprep.subr.mxu0 0.0
        %2061 = vmatpush2.xpose.msra.mxu0 0.0
        %2062 = vmatprep.subr.mxu0 0.0
        %2063 = vmatpush2.xpose.msra.mxu0 0.0
        %2064 = vmatprep.subr.mxu0 0.0
        %2065 = vmatpush2.xpose.msra.mxu0 0.0
        %2066 = vmatprep.subr.mxu0 0.0
        %2067 = vmatpush2.xpose.msra.mxu0 0.0
        %2068 = vmatprep.subr.mxu0 0.0
        %2069 = vmatpush2.xpose.msra.mxu0 0.0
        %2070 = vmatprep.subr.mxu0 0.0
        %2071 = vmatpush2.xpose.msra.mxu0 0.0
        %2072 = vmatprep.subr.mxu0 0.0
        %2073 = vmatpush2.xpose.msra.mxu0 0.0
        %2074 = vmatprep.subr.mxu0 0.0
        %2075 = vmatpush2.xpose.msra.mxu0 0.0
        %2076 = vmatprep.subr.mxu0 0.0
        %2077 = vmatpush2.xpose.msra.mxu0 0.0
        %2078 = vmatprep.subr.mxu0 0.0
        %2079 = vmatpush2.xpose.msra.mxu0 0.0
        %2080 = vmatprep.subr.mxu0 0.0
        %2081 = vmatpush2.xpose.msra.mxu0 0.0
        %2082 = vmatprep.mubr.f32.mxu0 0.0
        %2083 = vmatmul.mubr.f32.gmra.mxu0 %v2014
        %v2084 = vpop.f32.mrf.mxu0
        %v2085 = vadd.f32 %v2012, %v2084
        %v2086 = vpop.f32.mrf.mxu0
        %2087 = vdwg.mxu0
        %v2088 = vmul.f32 %v2085, 0.35355338
        %v2089 = vadd.f32 %v2088, %v1535
        %v2090 = vsel %vm816, %v2089, -inf
        %2091 = vmax.xlane.f32.xlu0 %v2090
        %v2092 = vpop.xlane.xlu0 %2091
        %v2093 = vsub.f32 %v2089, %v2092
        %v2094 = vmul.f32 %v2093, 1.442695
        %v2095 = vpow.pop %v2094
        %v2096 = vsel %vm816, %v2095, 0.0
        %2097 = vadd.xlane.f32.xlu0 %v2096
        %v2098 = vpop.xlane.xlu0 %2097
        %v2099 = vrcp.pop %v2098
        %v2100 = vmul.f32 %v2098, %v2099
        %v2101 = vsub.f32 2.0, %v2100
        %v2102 = vmul.f32 %v2099, %v2101
        %v2103 = vmul.f32 %v2095, %v2102
        %s2104 = scalar_lea.vmem %s477, 24 [#allocation12]
        %2105 = vst.msk [vmem:[%s2104] sm:$0xff] %vm816, %v2103
        %2106 = vrot.lane.b32.xlu0 %v726, 104
        %v2107 = vpop.permute.xlu0 %2106
        %v2110 = vsel %vm816, %v2103, 0
        %2112 = vmatprep.subr.mxu0 0.0
        %2113 = vmatpush1.msra.mxu0 0.0
        %2114 = vmatprep.subr.mxu0 0.0
        %2115 = vmatpush1.msra.mxu0 0.0
        %2116 = vmatprep.subr.mxu0 0.0
        %2117 = vmatpush1.msra.mxu0 0.0
        %2118 = vmatprep.subr.mxu0 0.0
        %2119 = vmatpush1.msra.mxu0 0.0
        %2120 = vmatprep.subr.mxu0 0.0
        %2121 = vmatpush1.msra.mxu0 0.0
        %2122 = vmatprep.subr.mxu0 0.0
        %2123 = vmatpush1.msra.mxu0 0.0
        %2124 = vmatprep.subr.mxu0 0.0
        %2125 = vmatpush1.msra.mxu0 0.0
        %2126 = vmatprep.subr.mxu0 0.0
        %2127 = vmatpush1.msra.mxu0 0.0
        %2128 = vmatprep.subr.mxu0 0.0
        %2129 = vmatpush1.msra.mxu0 0.0
        %2130 = vmatprep.subr.mxu0 0.0
        %2131 = vmatpush1.msra.mxu0 0.0
        %2132 = vmatprep.subr.mxu0 0.0
        %2133 = vmatpush1.msra.mxu0 0.0
        %2134 = vmatprep.subr.mxu0 0.0
        %2135 = vmatpush1.msra.mxu0 0.0
        %2136 = vmatprep.subr.mxu0 0.0
        %2137 = vmatpush1.msra.mxu0 0.0
        %2138 = vmatprep.subr.mxu0 0.0
        %2139 = vmatpush1.msra.mxu0 0.0
        %2140 = vmatprep.subr.mxu0 0.0
        %2141 = vmatpush1.msra.mxu0 0.0
        %2142 = vmatprep.subr.mxu0 0.0
        %2143 = vmatpush1.msra.mxu0 %v2107
        %2144 = vmatprep.subr.mxu0 0.0
        %2145 = vmatpush2.msra.mxu0 0.0
        %2146 = vmatprep.subr.mxu0 0.0
        %2147 = vmatpush2.msra.mxu0 0.0
        %2148 = vmatprep.subr.mxu0 0.0
        %2149 = vmatpush2.msra.mxu0 0.0
        %2150 = vmatprep.subr.mxu0 0.0
        %2151 = vmatpush2.msra.mxu0 0.0
        %2152 = vmatprep.subr.mxu0 0.0
        %2153 = vmatpush2.msra.mxu0 0.0
        %2154 = vmatprep.subr.mxu0 0.0
        %2155 = vmatpush2.msra.mxu0 0.0
        %2156 = vmatprep.subr.mxu0 0.0
        %2157 = vmatpush2.msra.mxu0 0.0
        %2158 = vmatprep.subr.mxu0 0.0
        %2159 = vmatpush2.msra.mxu0 0.0
        %2160 = vmatprep.subr.mxu0 0.0
        %2161 = vmatpush2.msra.mxu0 0.0
        %2162 = vmatprep.subr.mxu0 0.0
        %2163 = vmatpush2.msra.mxu0 0.0
        %2164 = vmatprep.subr.mxu0 0.0
        %2165 = vmatpush2.msra.mxu0 0.0
        %2166 = vmatprep.subr.mxu0 0.0
        %2167 = vmatpush2.msra.mxu0 0.0
        %2168 = vmatprep.subr.mxu0 0.0
        %2169 = vmatpush2.msra.mxu0 0.0
        %2170 = vmatprep.subr.mxu0 0.0
        %2171 = vmatpush2.msra.mxu0 0.0
        %2172 = vmatprep.subr.mxu0 0.0
        %2173 = vmatpush2.msra.mxu0 0.0
        %2174 = vmatprep.subr.mxu0 0.0
        %2175 = vmatpush2.msra.mxu0 0.0
        %2176 = vmatprep.mubr.f32.mxu0 0.0
        %2177 = vmatmul.mubr.f32.gmra.mxu0 %v2110
        %v2178 = vpop.f32.mrf.mxu0
        %v2179 = vadd.f32 0.0, %v2178
        %v2180 = vpop.f32.mrf.mxu0
        %2181 = vdwg.mxu0
        %v2182 = vcombine.high %v1551, %v1551
        %v2184 = vunpack.c.l.s4 1966171168
        %v2185 = vunpack.c.0.s8 %v2184
        %v2186 = vlaneseq
        %v2187 = vshrl.u32 %v2186, 7
        %v2188 = vsub.s32 %v2185, %v2187
        %v2189 = vrot.slane %v1551, %v2188
        %v2191 = vunpack.c.l.s4 1966171168
        %v2192 = vunpack.c.0.s8 %v2191
        %v2193 = vlaneseq
        %v2194 = vshrl.u32 %v2193, 7
        %v2195 = vsub.s32 %v2192, %v2194
        %v2196 = vrot.slane %v2182, %v2195
        %v2197 = vcombine.high %v2189, %v2189
        %v2198 = vcombine.high %v2196, %v2196
        %v2200 = vunpack.c.l.s4 1966171168
        %v2201 = vunpack.c.0.s8 %v2200
        %v2202 = vlaneseq
        %v2203 = vshrl.u32 %v2202, 7
        %v2204 = vsub.s32 %v2201, %v2203
        %v2205 = vrot.slane %v2189, %v2204
        %v2207 = vunpack.c.l.s4 1966171168
        %v2208 = vunpack.c.0.s8 %v2207
        %v2209 = vlaneseq
        %v2210 = vshrl.u32 %v2209, 7
        %v2211 = vsub.s32 %v2208, %v2210
        %v2212 = vrot.slane %v2196, %v2211
        %v2214 = vunpack.c.l.s4 1966171168
        %v2215 = vunpack.c.0.s8 %v2214
        %v2216 = vlaneseq
        %v2217 = vshrl.u32 %v2216, 7
        %v2218 = vsub.s32 %v2215, %v2217
        %v2219 = vrot.slane %v2197, %v2218
        %v2221 = vunpack.c.l.s4 1966171168
        %v2222 = vunpack.c.0.s8 %v2221
        %v2223 = vlaneseq
        %v2224 = vshrl.u32 %v2223, 7
        %v2225 = vsub.s32 %v2222, %v2224
        %v2226 = vrot.slane %v2198, %v2225
        %v2227 = vcombine.high %v2205, %v2205
        %v2228 = vcombine.high %v2212, %v2212
        %v2229 = vcombine.high %v2219, %v2219
        %v2230 = vcombine.high %v2226, %v2226
        %v2239 = vcombine.high %v1732, %v1732
        %v2241 = vunpack.c.l.s4 1966171168
        %v2242 = vunpack.c.0.s8 %v2241
        %v2243 = vlaneseq
        %v2244 = vshrl.u32 %v2243, 7
        %v2245 = vsub.s32 %v2242, %v2244
        %v2246 = vrot.slane %v1732, %v2245
        %v2248 = vunpack.c.l.s4 1966171168
        %v2249 = vunpack.c.0.s8 %v2248
        %v2250 = vlaneseq
        %v2251 = vshrl.u32 %v2250, 7
        %v2252 = vsub.s32 %v2249, %v2251
        %v2253 = vrot.slane %v2239, %v2252
        %v2254 = vcombine.high %v2246, %v2246
        %v2255 = vcombine.high %v2253, %v2253
        %v2257 = vunpack.c.l.s4 1966171168
        %v2258 = vunpack.c.0.s8 %v2257
        %v2259 = vlaneseq
        %v2260 = vshrl.u32 %v2259, 7
        %v2261 = vsub.s32 %v2258, %v2260
        %v2262 = vrot.slane %v2246, %v2261
        %v2264 = vunpack.c.l.s4 1966171168
        %v2265 = vunpack.c.0.s8 %v2264
        %v2266 = vlaneseq
        %v2267 = vshrl.u32 %v2266, 7
        %v2268 = vsub.s32 %v2265, %v2267
        %v2269 = vrot.slane %v2253, %v2268
        %v2271 = vunpack.c.l.s4 1966171168
        %v2272 = vunpack.c.0.s8 %v2271
        %v2273 = vlaneseq
        %v2274 = vshrl.u32 %v2273, 7
        %v2275 = vsub.s32 %v2272, %v2274
        %v2276 = vrot.slane %v2254, %v2275
        %v2278 = vunpack.c.l.s4 1966171168
        %v2279 = vunpack.c.0.s8 %v2278
        %v2280 = vlaneseq
        %v2281 = vshrl.u32 %v2280, 7
        %v2282 = vsub.s32 %v2279, %v2281
        %v2283 = vrot.slane %v2255, %v2282
        %v2284 = vcombine.high %v2262, %v2262
        %v2285 = vcombine.high %v2269, %v2269
        %v2286 = vcombine.high %v2276, %v2276
        %v2287 = vcombine.high %v2283, %v2283
        %v2288 = vcombine.high %v1918, %v1918
        %v2290 = vunpack.c.l.s4 1966171168
        %v2291 = vunpack.c.0.s8 %v2290
        %v2292 = vlaneseq
        %v2293 = vshrl.u32 %v2292, 7
        %v2294 = vsub.s32 %v2291, %v2293
        %v2295 = vrot.slane %v1918, %v2294
        %v2297 = vunpack.c.l.s4 1966171168
        %v2298 = vunpack.c.0.s8 %v2297
        %v2299 = vlaneseq
        %v2300 = vshrl.u32 %v2299, 7
        %v2301 = vsub.s32 %v2298, %v2300
        %v2302 = vrot.slane %v2288, %v2301
        %v2303 = vcombine.high %v2295, %v2295
        %v2304 = vcombine.high %v2302, %v2302
        %v2306 = vunpack.c.l.s4 1966171168
        %v2307 = vunpack.c.0.s8 %v2306
        %v2308 = vlaneseq
        %v2309 = vshrl.u32 %v2308, 7
        %v2310 = vsub.s32 %v2307, %v2309
        %v2311 = vrot.slane %v2295, %v2310
        %v2313 = vunpack.c.l.s4 1966171168
        %v2314 = vunpack.c.0.s8 %v2313
        %v2315 = vlaneseq
        %v2316 = vshrl.u32 %v2315, 7
        %v2317 = vsub.s32 %v2314, %v2316
        %v2318 = vrot.slane %v2302, %v2317
        %v2320 = vunpack.c.l.s4 1966171168
        %v2321 = vunpack.c.0.s8 %v2320
        %v2322 = vlaneseq
        %v2323 = vshrl.u32 %v2322, 7
        %v2324 = vsub.s32 %v2321, %v2323
        %v2325 = vrot.slane %v2303, %v2324
        %v2327 = vunpack.c.l.s4 1966171168
        %v2328 = vunpack.c.0.s8 %v2327
        %v2329 = vlaneseq
        %v2330 = vshrl.u32 %v2329, 7
        %v2331 = vsub.s32 %v2328, %v2330
        %v2332 = vrot.slane %v2304, %v2331
        %v2333 = vcombine.high %v2311, %v2311
        %v2334 = vcombine.high %v2318, %v2318
        %v2335 = vcombine.high %v2325, %v2325
        %v2336 = vcombine.high %v2332, %v2332
        %v2337 = vcombine.high %v2103, %v2103
        %v2339 = vunpack.c.l.s4 1966171168
        %v2340 = vunpack.c.0.s8 %v2339
        %v2341 = vlaneseq
        %v2342 = vshrl.u32 %v2341, 7
        %v2343 = vsub.s32 %v2340, %v2342
        %v2344 = vrot.slane %v2103, %v2343
        %v2346 = vunpack.c.l.s4 1966171168
        %v2347 = vunpack.c.0.s8 %v2346
        %v2348 = vlaneseq
        %v2349 = vshrl.u32 %v2348, 7
        %v2350 = vsub.s32 %v2347, %v2349
        %v2351 = vrot.slane %v2337, %v2350
        %v2352 = vcombine.high %v2344, %v2344
        %v2353 = vcombine.high %v2351, %v2351
        %v2355 = vunpack.c.l.s4 1966171168
        %v2356 = vunpack.c.0.s8 %v2355
        %v2357 = vlaneseq
        %v2358 = vshrl.u32 %v2357, 7
        %v2359 = vsub.s32 %v2356, %v2358
        %v2360 = vrot.slane %v2344, %v2359
        %v2362 = vunpack.c.l.s4 1966171168
        %v2363 = vunpack.c.0.s8 %v2362
        %v2364 = vlaneseq
        %v2365 = vshrl.u32 %v2364, 7
        %v2366 = vsub.s32 %v2363, %v2365
        %v2367 = vrot.slane %v2351, %v2366
        %v2369 = vunpack.c.l.s4 1966171168
        %v2370 = vunpack.c.0.s8 %v2369
        %v2371 = vlaneseq
        %v2372 = vshrl.u32 %v2371, 7
        %v2373 = vsub.s32 %v2370, %v2372
        %v2374 = vrot.slane %v2352, %v2373
        %v2376 = vunpack.c.l.s4 1966171168
        %v2377 = vunpack.c.0.s8 %v2376
        %v2378 = vlaneseq
        %v2379 = vshrl.u32 %v2378, 7
        %v2380 = vsub.s32 %v2377, %v2379
        %v2381 = vrot.slane %v2353, %v2380
        %v2382 = vcombine.high %v2360, %v2360
        %v2383 = vcombine.high %v2367, %v2367
        %v2384 = vcombine.high %v2374, %v2374
        %v2385 = vcombine.high %v2381, %v2381
        %v2386 = vlaneseq
        %v2387 = vshrl.u32 %v2386, 7
        %v2388 = vsub.s32 0, %v2387
        %v2389 = vrot.slane %v2262, %v2388
        %v2390 = vlaneseq
        %v2391 = vshrl.u32 %v2390, 7
        %v2392 = vsub.s32 0, %v2391
        %v2393 = vrot.slane %v2276, %v2392
        %v2394 = vlaneseq
        %v2395 = vshrl.u32 %v2394, 7
        %v2396 = vsub.s32 0, %v2395
        %v2397 = vrot.slane %v2284, %v2396
        %v2398 = vlaneseq
        %v2399 = vshrl.u32 %v2398, 7
        %v2400 = vsub.s32 0, %v2399
        %v2401 = vrot.slane %v2286, %v2400
        %v2402 = vlaneseq
        %v2403 = vshrl.u32 %v2402, 7
        %v2404 = vsub.s32 0, %v2403
        %v2405 = vrot.slane %v2269, %v2404
        %v2406 = vlaneseq
        %v2407 = vshrl.u32 %v2406, 7
        %v2408 = vsub.s32 0, %v2407
        %v2409 = vrot.slane %v2283, %v2408
        %v2410 = vlaneseq
        %v2411 = vshrl.u32 %v2410, 7
        %v2412 = vsub.s32 0, %v2411
        %v2413 = vrot.slane %v2285, %v2412
        %v2414 = vlaneseq
        %v2415 = vshrl.u32 %v2414, 7
        %v2416 = vsub.s32 0, %v2415
        %v2417 = vrot.slane %v2287, %v2416
        %v2426 = vlaneseq
        %v2427 = vshrl.u32 %v2426, 7
        %v2428 = vsub.s32 0, %v2427
        %v2429 = vrot.slane %v2311, %v2428
        %v2430 = vlaneseq
        %v2431 = vshrl.u32 %v2430, 7
        %v2432 = vsub.s32 0, %v2431
        %v2433 = vrot.slane %v2325, %v2432
        %v2434 = vlaneseq
        %v2435 = vshrl.u32 %v2434, 7
        %v2436 = vsub.s32 0, %v2435
        %v2437 = vrot.slane %v2333, %v2436
        %v2438 = vlaneseq
        %v2439 = vshrl.u32 %v2438, 7
        %v2440 = vsub.s32 0, %v2439
        %v2441 = vrot.slane %v2335, %v2440
        %v2442 = vlaneseq
        %v2443 = vshrl.u32 %v2442, 7
        %v2444 = vsub.s32 0, %v2443
        %v2445 = vrot.slane %v2318, %v2444
        %v2446 = vlaneseq
        %v2447 = vshrl.u32 %v2446, 7
        %v2448 = vsub.s32 0, %v2447
        %v2449 = vrot.slane %v2332, %v2448
        %v2450 = vlaneseq
        %v2451 = vshrl.u32 %v2450, 7
        %v2452 = vsub.s32 0, %v2451
        %v2453 = vrot.slane %v2334, %v2452
        %v2454 = vlaneseq
        %v2455 = vshrl.u32 %v2454, 7
        %v2456 = vsub.s32 0, %v2455
        %v2457 = vrot.slane %v2336, %v2456
        %v2466 = vlaneseq
        %v2467 = vshrl.u32 %v2466, 7
        %v2468 = vsub.s32 0, %v2467
        %v2469 = vrot.slane %v2360, %v2468
        %v2470 = vlaneseq
        %v2471 = vshrl.u32 %v2470, 7
        %v2472 = vsub.s32 0, %v2471
        %v2473 = vrot.slane %v2374, %v2472
        %v2474 = vlaneseq
        %v2475 = vshrl.u32 %v2474, 7
        %v2476 = vsub.s32 0, %v2475
        %v2477 = vrot.slane %v2382, %v2476
        %v2478 = vlaneseq
        %v2479 = vshrl.u32 %v2478, 7
        %v2480 = vsub.s32 0, %v2479
        %v2481 = vrot.slane %v2384, %v2480
        %v2482 = vlaneseq
        %v2483 = vshrl.u32 %v2482, 7
        %v2484 = vsub.s32 0, %v2483
        %v2485 = vrot.slane %v2367, %v2484
        %v2486 = vlaneseq
        %v2487 = vshrl.u32 %v2486, 7
        %v2488 = vsub.s32 0, %v2487
        %v2489 = vrot.slane %v2381, %v2488
        %v2490 = vlaneseq
        %v2491 = vshrl.u32 %v2490, 7
        %v2492 = vsub.s32 0, %v2491
        %v2493 = vrot.slane %v2383, %v2492
        %v2494 = vlaneseq
        %v2495 = vshrl.u32 %v2494, 7
        %v2496 = vsub.s32 0, %v2495
        %v2497 = vrot.slane %v2385, %v2496
        %vm2506 = vcmask 1040384
        %v2507 = vsel %vm2506, %v2205, %v2389
        %v2508 = vsel %vm2506, %v2219, %v2393
        %v2509 = vsel %vm2506, %v2227, %v2397
        %v2510 = vsel %vm2506, %v2229, %v2401
        %v2511 = vsel %vm2506, %v2212, %v2405
        %v2512 = vsel %vm2506, %v2226, %v2409
        %v2513 = vsel %vm2506, %v2228, %v2413
        %v2514 = vsel %vm2506, %v2230, %v2417
        %vm2515 = vcmask 1041408
        %v2516 = vsel %vm2515, %v2507, %v2429
        %v2517 = vsel %vm2515, %v2508, %v2433
        %v2518 = vsel %vm2515, %v2509, %v2437
        %v2519 = vsel %vm2515, %v2510, %v2441
        %v2520 = vsel %vm2515, %v2511, %v2445
        %v2521 = vsel %vm2515, %v2512, %v2449
        %v2522 = vsel %vm2515, %v2513, %v2453
        %v2523 = vsel %vm2515, %v2514, %v2457
        %vm2524 = vcmask 1042432
        %v2525 = vsel %vm2524, %v2516, %v2469
        %v2526 = vsel %vm2524, %v2517, %v2473
        %v2527 = vsel %vm2524, %v2518, %v2477
        %v2528 = vsel %vm2524, %v2519, %v2481
        %v2529 = vsel %vm2524, %v2520, %v2485
        %v2530 = vsel %vm2524, %v2521, %v2489
        %v2531 = vsel %vm2524, %v2522, %v2493
        %v2532 = vsel %vm2524, %v2523, %v2497
        %v2534 = vsel %vm816, %v2525, 0
        %2536 = vmatprep.subr.mxu0 0.0
        %2537 = vmatpush1.msra.mxu0 0.0
        %2538 = vmatprep.subr.mxu0 0.0
        %2539 = vmatpush1.msra.mxu0 0.0
        %2540 = vmatprep.subr.mxu0 0.0
        %2541 = vmatpush1.msra.mxu0 0.0
        %2542 = vmatprep.subr.mxu0 0.0
        %2543 = vmatpush1.msra.mxu0 0.0
        %2544 = vmatprep.subr.mxu0 0.0
        %2545 = vmatpush1.msra.mxu0 0.0
        %2546 = vmatprep.subr.mxu0 0.0
        %2547 = vmatpush1.msra.mxu0 0.0
        %2548 = vmatprep.subr.mxu0 0.0
        %2549 = vmatpush1.msra.mxu0 0.0
        %2550 = vmatprep.subr.mxu0 0.0
        %2551 = vmatpush1.msra.mxu0 0.0
        %2552 = vmatprep.subr.mxu0 0.0
        %2553 = vmatpush1.msra.mxu0 0.0
        %2554 = vmatprep.subr.mxu0 0.0
        %2555 = vmatpush1.msra.mxu0 0.0
        %2556 = vmatprep.subr.mxu0 0.0
        %2557 = vmatpush1.msra.mxu0 0.0
        %2558 = vmatprep.subr.mxu0 0.0
        %2559 = vmatpush1.msra.mxu0 0.0
        %2560 = vmatprep.subr.mxu0 0.0
        %2561 = vmatpush1.msra.mxu0 0.0
        %2562 = vmatprep.subr.mxu0 0.0
        %2563 = vmatpush1.msra.mxu0 0.0
        %2564 = vmatprep.subr.mxu0 0.0
        %2565 = vmatpush1.msra.mxu0 0.0
        %2566 = vmatprep.subr.mxu0 0.0
        %2567 = vmatpush1.msra.mxu0 %v729
        %2568 = vmatprep.subr.mxu0 0.0
        %2569 = vmatpush2.msra.mxu0 0.0
        %2570 = vmatprep.subr.mxu0 0.0
        %2571 = vmatpush2.msra.mxu0 0.0
        %2572 = vmatprep.subr.mxu0 0.0
        %2573 = vmatpush2.msra.mxu0 0.0
        %2574 = vmatprep.subr.mxu0 0.0
        %2575 = vmatpush2.msra.mxu0 0.0
        %2576 = vmatprep.subr.mxu0 0.0
        %2577 = vmatpush2.msra.mxu0 0.0
        %2578 = vmatprep.subr.mxu0 0.0
        %2579 = vmatpush2.msra.mxu0 0.0
        %2580 = vmatprep.subr.mxu0 0.0
        %2581 = vmatpush2.msra.mxu0 0.0
        %2582 = vmatprep.subr.mxu0 0.0
        %2583 = vmatpush2.msra.mxu0 0.0
        %2584 = vmatprep.subr.mxu0 0.0
        %2585 = vmatpush2.msra.mxu0 0.0
        %2586 = vmatprep.subr.mxu0 0.0
        %2587 = vmatpush2.msra.mxu0 0.0
        %2588 = vmatprep.subr.mxu0 0.0
        %2589 = vmatpush2.msra.mxu0 0.0
        %2590 = vmatprep.subr.mxu0 0.0
        %2591 = vmatpush2.msra.mxu0 0.0
        %2592 = vmatprep.subr.mxu0 0.0
        %2593 = vmatpush2.msra.mxu0 0.0
        %2594 = vmatprep.subr.mxu0 0.0
        %2595 = vmatpush2.msra.mxu0 0.0
        %2596 = vmatprep.subr.mxu0 0.0
        %2597 = vmatpush2.msra.mxu0 0.0
        %2598 = vmatprep.subr.mxu0 0.0
        %2599 = vmatpush2.msra.mxu0 0.0
        %2600 = vmatprep.mubr.f32.mxu0 0.0
        %2601 = vmatmul.mubr.f32.gmra.mxu0 %v2534
        %v2602 = vpop.f32.mrf.mxu0
        %v2603 = vadd.f32 0.0, %v2602
        %v2604 = vpop.f32.mrf.mxu0
        %2605 = vdwg.mxu0
        %v2607 = vsel %vm816, %v2526, 0
        %2609 = vmatprep.subr.mxu0 0.0
        %2610 = vmatpush1.msra.mxu0 0.0
        %2611 = vmatprep.subr.mxu0 0.0
        %2612 = vmatpush1.msra.mxu0 0.0
        %2613 = vmatprep.subr.mxu0 0.0
        %2614 = vmatpush1.msra.mxu0 0.0
        %2615 = vmatprep.subr.mxu0 0.0
        %2616 = vmatpush1.msra.mxu0 0.0
        %2617 = vmatprep.subr.mxu0 0.0
        %2618 = vmatpush1.msra.mxu0 0.0
        %2619 = vmatprep.subr.mxu0 0.0
        %2620 = vmatpush1.msra.mxu0 0.0
        %2621 = vmatprep.subr.mxu0 0.0
        %2622 = vmatpush1.msra.mxu0 0.0
        %2623 = vmatprep.subr.mxu0 0.0
        %2624 = vmatpush1.msra.mxu0 0.0
        %2625 = vmatprep.subr.mxu0 0.0
        %2626 = vmatpush1.msra.mxu0 0.0
        %2627 = vmatprep.subr.mxu0 0.0
        %2628 = vmatpush1.msra.mxu0 0.0
        %2629 = vmatprep.subr.mxu0 0.0
        %2630 = vmatpush1.msra.mxu0 0.0
        %2631 = vmatprep.subr.mxu0 0.0
        %2632 = vmatpush1.msra.mxu0 0.0
        %2633 = vmatprep.subr.mxu0 0.0
        %2634 = vmatpush1.msra.mxu0 0.0
        %2635 = vmatprep.subr.mxu0 0.0
        %2636 = vmatpush1.msra.mxu0 0.0
        %2637 = vmatprep.subr.mxu0 0.0
        %2638 = vmatpush1.msra.mxu0 0.0
        %2639 = vmatprep.subr.mxu0 0.0
        %2640 = vmatpush1.msra.mxu0 %v730
        %2641 = vmatprep.subr.mxu0 0.0
        %2642 = vmatpush2.msra.mxu0 0.0
        %2643 = vmatprep.subr.mxu0 0.0
        %2644 = vmatpush2.msra.mxu0 0.0
        %2645 = vmatprep.subr.mxu0 0.0
        %2646 = vmatpush2.msra.mxu0 0.0
        %2647 = vmatprep.subr.mxu0 0.0
        %2648 = vmatpush2.msra.mxu0 0.0
        %2649 = vmatprep.subr.mxu0 0.0
        %2650 = vmatpush2.msra.mxu0 0.0
        %2651 = vmatprep.subr.mxu0 0.0
        %2652 = vmatpush2.msra.mxu0 0.0
        %2653 = vmatprep.subr.mxu0 0.0
        %2654 = vmatpush2.msra.mxu0 0.0
        %2655 = vmatprep.subr.mxu0 0.0
        %2656 = vmatpush2.msra.mxu0 0.0
        %2657 = vmatprep.subr.mxu0 0.0
        %2658 = vmatpush2.msra.mxu0 0.0
        %2659 = vmatprep.subr.mxu0 0.0
        %2660 = vmatpush2.msra.mxu0 0.0
        %2661 = vmatprep.subr.mxu0 0.0
        %2662 = vmatpush2.msra.mxu0 0.0
        %2663 = vmatprep.subr.mxu0 0.0
        %2664 = vmatpush2.msra.mxu0 0.0
        %2665 = vmatprep.subr.mxu0 0.0
        %2666 = vmatpush2.msra.mxu0 0.0
        %2667 = vmatprep.subr.mxu0 0.0
        %2668 = vmatpush2.msra.mxu0 0.0
        %2669 = vmatprep.subr.mxu0 0.0
        %2670 = vmatpush2.msra.mxu0 0.0
        %2671 = vmatprep.subr.mxu0 0.0
        %2672 = vmatpush2.msra.mxu0 0.0
        %2673 = vmatprep.mubr.f32.mxu0 0.0
        %2674 = vmatmul.mubr.f32.gmra.mxu0 %v2607
        %v2675 = vpop.f32.mrf.mxu0
        %v2676 = vadd.f32 0.0, %v2675
        %v2677 = vpop.f32.mrf.mxu0
        %2678 = vdwg.mxu0
        %v2680 = vsel %vm816, %v2527, 0
        %2682 = vmatprep.subr.mxu0 0.0
        %2683 = vmatpush1.msra.mxu0 0.0
        %2684 = vmatprep.subr.mxu0 0.0
        %2685 = vmatpush1.msra.mxu0 0.0
        %2686 = vmatprep.subr.mxu0 0.0
        %2687 = vmatpush1.msra.mxu0 0.0
        %2688 = vmatprep.subr.mxu0 0.0
        %2689 = vmatpush1.msra.mxu0 0.0
        %2690 = vmatprep.subr.mxu0 0.0
        %2691 = vmatpush1.msra.mxu0 0.0
        %2692 = vmatprep.subr.mxu0 0.0
        %2693 = vmatpush1.msra.mxu0 0.0
        %2694 = vmatprep.subr.mxu0 0.0
        %2695 = vmatpush1.msra.mxu0 0.0
        %2696 = vmatprep.subr.mxu0 0.0
        %2697 = vmatpush1.msra.mxu0 0.0
        %2698 = vmatprep.subr.mxu0 0.0
        %2699 = vmatpush1.msra.mxu0 0.0
        %2700 = vmatprep.subr.mxu0 0.0
        %2701 = vmatpush1.msra.mxu0 0.0
        %2702 = vmatprep.subr.mxu0 0.0
        %2703 = vmatpush1.msra.mxu0 0.0
        %2704 = vmatprep.subr.mxu0 0.0
        %2705 = vmatpush1.msra.mxu0 0.0
        %2706 = vmatprep.subr.mxu0 0.0
        %2707 = vmatpush1.msra.mxu0 0.0
        %2708 = vmatprep.subr.mxu0 0.0
        %2709 = vmatpush1.msra.mxu0 0.0
        %2710 = vmatprep.subr.mxu0 0.0
        %2711 = vmatpush1.msra.mxu0 0.0
        %2712 = vmatprep.subr.mxu0 0.0
        %2713 = vmatpush1.msra.mxu0 %v731
        %2714 = vmatprep.subr.mxu0 0.0
        %2715 = vmatpush2.msra.mxu0 0.0
        %2716 = vmatprep.subr.mxu0 0.0
        %2717 = vmatpush2.msra.mxu0 0.0
        %2718 = vmatprep.subr.mxu0 0.0
        %2719 = vmatpush2.msra.mxu0 0.0
        %2720 = vmatprep.subr.mxu0 0.0
        %2721 = vmatpush2.msra.mxu0 0.0
        %2722 = vmatprep.subr.mxu0 0.0
        %2723 = vmatpush2.msra.mxu0 0.0
        %2724 = vmatprep.subr.mxu0 0.0
        %2725 = vmatpush2.msra.mxu0 0.0
        %2726 = vmatprep.subr.mxu0 0.0
        %2727 = vmatpush2.msra.mxu0 0.0
        %2728 = vmatprep.subr.mxu0 0.0
        %2729 = vmatpush2.msra.mxu0 0.0
        %2730 = vmatprep.subr.mxu0 0.0
        %2731 = vmatpush2.msra.mxu0 0.0
        %2732 = vmatprep.subr.mxu0 0.0
        %2733 = vmatpush2.msra.mxu0 0.0
        %2734 = vmatprep.subr.mxu0 0.0
        %2735 = vmatpush2.msra.mxu0 0.0
        %2736 = vmatprep.subr.mxu0 0.0
        %2737 = vmatpush2.msra.mxu0 0.0
        %2738 = vmatprep.subr.mxu0 0.0
        %2739 = vmatpush2.msra.mxu0 0.0
        %2740 = vmatprep.subr.mxu0 0.0
        %2741 = vmatpush2.msra.mxu0 0.0
        %2742 = vmatprep.subr.mxu0 0.0
        %2743 = vmatpush2.msra.mxu0 0.0
        %2744 = vmatprep.subr.mxu0 0.0
        %2745 = vmatpush2.msra.mxu0 0.0
        %2746 = vmatprep.mubr.f32.mxu0 0.0
        %2747 = vmatmul.mubr.f32.gmra.mxu0 %v2680
        %v2748 = vpop.f32.mrf.mxu0
        %v2749 = vadd.f32 0.0, %v2748
        %v2750 = vpop.f32.mrf.mxu0
        %2751 = vdwg.mxu0
        %v2753 = vsel %vm816, %v2528, 0
        %2755 = vmatprep.subr.mxu0 0.0
        %2756 = vmatpush1.msra.mxu0 0.0
        %2757 = vmatprep.subr.mxu0 0.0
        %2758 = vmatpush1.msra.mxu0 0.0
        %2759 = vmatprep.subr.mxu0 0.0
        %2760 = vmatpush1.msra.mxu0 0.0
        %2761 = vmatprep.subr.mxu0 0.0
        %2762 = vmatpush1.msra.mxu0 0.0
        %2763 = vmatprep.subr.mxu0 0.0
        %2764 = vmatpush1.msra.mxu0 0.0
        %2765 = vmatprep.subr.mxu0 0.0
        %2766 = vmatpush1.msra.mxu0 0.0
        %2767 = vmatprep.subr.mxu0 0.0
        %2768 = vmatpush1.msra.mxu0 0.0
        %2769 = vmatprep.subr.mxu0 0.0
        %2770 = vmatpush1.msra.mxu0 0.0
        %2771 = vmatprep.subr.mxu0 0.0
        %2772 = vmatpush1.msra.mxu0 0.0
        %2773 = vmatprep.subr.mxu0 0.0
        %2774 = vmatpush1.msra.mxu0 0.0
        %2775 = vmatprep.subr.mxu0 0.0
        %2776 = vmatpush1.msra.mxu0 0.0
        %2777 = vmatprep.subr.mxu0 0.0
        %2778 = vmatpush1.msra.mxu0 0.0
        %2779 = vmatprep.subr.mxu0 0.0
        %2780 = vmatpush1.msra.mxu0 0.0
        %2781 = vmatprep.subr.mxu0 0.0
        %2782 = vmatpush1.msra.mxu0 0.0
        %2783 = vmatprep.subr.mxu0 0.0
        %2784 = vmatpush1.msra.mxu0 0.0
        %2785 = vmatprep.subr.mxu0 0.0
        %2786 = vmatpush1.msra.mxu0 %v732
        %2787 = vmatprep.subr.mxu0 0.0
        %2788 = vmatpush2.msra.mxu0 0.0
        %2789 = vmatprep.subr.mxu0 0.0
        %2790 = vmatpush2.msra.mxu0 0.0
        %2791 = vmatprep.subr.mxu0 0.0
        %2792 = vmatpush2.msra.mxu0 0.0
        %2793 = vmatprep.subr.mxu0 0.0
        %2794 = vmatpush2.msra.mxu0 0.0
        %2795 = vmatprep.subr.mxu0 0.0
        %2796 = vmatpush2.msra.mxu0 0.0
        %2797 = vmatprep.subr.mxu0 0.0
        %2798 = vmatpush2.msra.mxu0 0.0
        %2799 = vmatprep.subr.mxu0 0.0
        %2800 = vmatpush2.msra.mxu0 0.0
        %2801 = vmatprep.subr.mxu0 0.0
        %2802 = vmatpush2.msra.mxu0 0.0
        %2803 = vmatprep.subr.mxu0 0.0
        %2804 = vmatpush2.msra.mxu0 0.0
        %2805 = vmatprep.subr.mxu0 0.0
        %2806 = vmatpush2.msra.mxu0 0.0
        %2807 = vmatprep.subr.mxu0 0.0
        %2808 = vmatpush2.msra.mxu0 0.0
        %2809 = vmatprep.subr.mxu0 0.0
        %2810 = vmatpush2.msra.mxu0 0.0
        %2811 = vmatprep.subr.mxu0 0.0
        %2812 = vmatpush2.msra.mxu0 0.0
        %2813 = vmatprep.subr.mxu0 0.0
        %2814 = vmatpush2.msra.mxu0 0.0
        %2815 = vmatprep.subr.mxu0 0.0
        %2816 = vmatpush2.msra.mxu0 0.0
        %2817 = vmatprep.subr.mxu0 0.0
        %2818 = vmatpush2.msra.mxu0 0.0
        %2819 = vmatprep.mubr.f32.mxu0 0.0
        %2820 = vmatmul.mubr.f32.gmra.mxu0 %v2753
        %v2821 = vpop.f32.mrf.mxu0
        %v2822 = vadd.f32 0.0, %v2821
        %v2823 = vpop.f32.mrf.mxu0
        %2824 = vdwg.mxu0
        %v2826 = vsel %vm816, %v2529, 0
        %2828 = vmatprep.subr.mxu0 0.0
        %2829 = vmatpush1.msra.mxu0 0.0
        %2830 = vmatprep.subr.mxu0 0.0
        %2831 = vmatpush1.msra.mxu0 0.0
        %2832 = vmatprep.subr.mxu0 0.0
        %2833 = vmatpush1.msra.mxu0 0.0
        %2834 = vmatprep.subr.mxu0 0.0
        %2835 = vmatpush1.msra.mxu0 0.0
        %2836 = vmatprep.subr.mxu0 0.0
        %2837 = vmatpush1.msra.mxu0 0.0
        %2838 = vmatprep.subr.mxu0 0.0
        %2839 = vmatpush1.msra.mxu0 0.0
        %2840 = vmatprep.subr.mxu0 0.0
        %2841 = vmatpush1.msra.mxu0 0.0
        %2842 = vmatprep.subr.mxu0 0.0
        %2843 = vmatpush1.msra.mxu0 0.0
        %2844 = vmatprep.subr.mxu0 0.0
        %2845 = vmatpush1.msra.mxu0 0.0
        %2846 = vmatprep.subr.mxu0 0.0
        %2847 = vmatpush1.msra.mxu0 0.0
        %2848 = vmatprep.subr.mxu0 0.0
        %2849 = vmatpush1.msra.mxu0 0.0
        %2850 = vmatprep.subr.mxu0 0.0
        %2851 = vmatpush1.msra.mxu0 0.0
        %2852 = vmatprep.subr.mxu0 0.0
        %2853 = vmatpush1.msra.mxu0 0.0
        %2854 = vmatprep.subr.mxu0 0.0
        %2855 = vmatpush1.msra.mxu0 0.0
        %2856 = vmatprep.subr.mxu0 0.0
        %2857 = vmatpush1.msra.mxu0 0.0
        %2858 = vmatprep.subr.mxu0 0.0
        %2859 = vmatpush1.msra.mxu0 %v733
        %2860 = vmatprep.subr.mxu0 0.0
        %2861 = vmatpush2.msra.mxu0 0.0
        %2862 = vmatprep.subr.mxu0 0.0
        %2863 = vmatpush2.msra.mxu0 0.0
        %2864 = vmatprep.subr.mxu0 0.0
        %2865 = vmatpush2.msra.mxu0 0.0
        %2866 = vmatprep.subr.mxu0 0.0
        %2867 = vmatpush2.msra.mxu0 0.0
        %2868 = vmatprep.subr.mxu0 0.0
        %2869 = vmatpush2.msra.mxu0 0.0
        %2870 = vmatprep.subr.mxu0 0.0
        %2871 = vmatpush2.msra.mxu0 0.0
        %2872 = vmatprep.subr.mxu0 0.0
        %2873 = vmatpush2.msra.mxu0 0.0
        %2874 = vmatprep.subr.mxu0 0.0
        %2875 = vmatpush2.msra.mxu0 0.0
        %2876 = vmatprep.subr.mxu0 0.0
        %2877 = vmatpush2.msra.mxu0 0.0
        %2878 = vmatprep.subr.mxu0 0.0
        %2879 = vmatpush2.msra.mxu0 0.0
        %2880 = vmatprep.subr.mxu0 0.0
        %2881 = vmatpush2.msra.mxu0 0.0
        %2882 = vmatprep.subr.mxu0 0.0
        %2883 = vmatpush2.msra.mxu0 0.0
        %2884 = vmatprep.subr.mxu0 0.0
        %2885 = vmatpush2.msra.mxu0 0.0
        %2886 = vmatprep.subr.mxu0 0.0
        %2887 = vmatpush2.msra.mxu0 0.0
        %2888 = vmatprep.subr.mxu0 0.0
        %2889 = vmatpush2.msra.mxu0 0.0
        %2890 = vmatprep.subr.mxu0 0.0
        %2891 = vmatpush2.msra.mxu0 0.0
        %2892 = vmatprep.mubr.f32.mxu0 0.0
        %2893 = vmatmul.mubr.f32.gmra.mxu0 %v2826
        %v2894 = vpop.f32.mrf.mxu0
        %v2895 = vadd.f32 0.0, %v2894
        %v2896 = vpop.f32.mrf.mxu0
        %2897 = vdwg.mxu0
        %v2899 = vsel %vm816, %v2530, 0
        %2901 = vmatprep.subr.mxu0 0.0
        %2902 = vmatpush1.msra.mxu0 0.0
        %2903 = vmatprep.subr.mxu0 0.0
        %2904 = vmatpush1.msra.mxu0 0.0
        %2905 = vmatprep.subr.mxu0 0.0
        %2906 = vmatpush1.msra.mxu0 0.0
        %2907 = vmatprep.subr.mxu0 0.0
        %2908 = vmatpush1.msra.mxu0 0.0
        %2909 = vmatprep.subr.mxu0 0.0
        %2910 = vmatpush1.msra.mxu0 0.0
        %2911 = vmatprep.subr.mxu0 0.0
        %2912 = vmatpush1.msra.mxu0 0.0
        %2913 = vmatprep.subr.mxu0 0.0
        %2914 = vmatpush1.msra.mxu0 0.0
        %2915 = vmatprep.subr.mxu0 0.0
        %2916 = vmatpush1.msra.mxu0 0.0
        %2917 = vmatprep.subr.mxu0 0.0
        %2918 = vmatpush1.msra.mxu0 0.0
        %2919 = vmatprep.subr.mxu0 0.0
        %2920 = vmatpush1.msra.mxu0 0.0
        %2921 = vmatprep.subr.mxu0 0.0
        %2922 = vmatpush1.msra.mxu0 0.0
        %2923 = vmatprep.subr.mxu0 0.0
        %2924 = vmatpush1.msra.mxu0 0.0
        %2925 = vmatprep.subr.mxu0 0.0
        %2926 = vmatpush1.msra.mxu0 0.0
        %2927 = vmatprep.subr.mxu0 0.0
        %2928 = vmatpush1.msra.mxu0 0.0
        %2929 = vmatprep.subr.mxu0 0.0
        %2930 = vmatpush1.msra.mxu0 0.0
        %2931 = vmatprep.subr.mxu0 0.0
        %2932 = vmatpush1.msra.mxu0 %v734
        %2933 = vmatprep.subr.mxu0 0.0
        %2934 = vmatpush2.msra.mxu0 0.0
        %2935 = vmatprep.subr.mxu0 0.0
        %2936 = vmatpush2.msra.mxu0 0.0
        %2937 = vmatprep.subr.mxu0 0.0
        %2938 = vmatpush2.msra.mxu0 0.0
        %2939 = vmatprep.subr.mxu0 0.0
        %2940 = vmatpush2.msra.mxu0 0.0
        %2941 = vmatprep.subr.mxu0 0.0
        %2942 = vmatpush2.msra.mxu0 0.0
        %2943 = vmatprep.subr.mxu0 0.0
        %2944 = vmatpush2.msra.mxu0 0.0
        %2945 = vmatprep.subr.mxu0 0.0
        %2946 = vmatpush2.msra.mxu0 0.0
        %2947 = vmatprep.subr.mxu0 0.0
        %2948 = vmatpush2.msra.mxu0 0.0
        %2949 = vmatprep.subr.mxu0 0.0
        %2950 = vmatpush2.msra.mxu0 0.0
        %2951 = vmatprep.subr.mxu0 0.0
        %2952 = vmatpush2.msra.mxu0 0.0
        %2953 = vmatprep.subr.mxu0 0.0
        %2954 = vmatpush2.msra.mxu0 0.0
        %2955 = vmatprep.subr.mxu0 0.0
        %2956 = vmatpush2.msra.mxu0 0.0
        %2957 = vmatprep.subr.mxu0 0.0
        %2958 = vmatpush2.msra.mxu0 0.0
        %2959 = vmatprep.subr.mxu0 0.0
        %2960 = vmatpush2.msra.mxu0 0.0
        %2961 = vmatprep.subr.mxu0 0.0
        %2962 = vmatpush2.msra.mxu0 0.0
        %2963 = vmatprep.subr.mxu0 0.0
        %2964 = vmatpush2.msra.mxu0 0.0
        %2965 = vmatprep.mubr.f32.mxu0 0.0
        %2966 = vmatmul.mubr.f32.gmra.mxu0 %v2899
        %v2967 = vpop.f32.mrf.mxu0
        %v2968 = vadd.f32 0.0, %v2967
        %v2969 = vpop.f32.mrf.mxu0
        %2970 = vdwg.mxu0
        %v2972 = vsel %vm816, %v2531, 0
        %2974 = vmatprep.subr.mxu0 0.0
        %2975 = vmatpush1.msra.mxu0 0.0
        %2976 = vmatprep.subr.mxu0 0.0
        %2977 = vmatpush1.msra.mxu0 0.0
        %2978 = vmatprep.subr.mxu0 0.0
        %2979 = vmatpush1.msra.mxu0 0.0
        %2980 = vmatprep.subr.mxu0 0.0
        %2981 = vmatpush1.msra.mxu0 0.0
        %2982 = vmatprep.subr.mxu0 0.0
        %2983 = vmatpush1.msra.mxu0 0.0
        %2984 = vmatprep.subr.mxu0 0.0
        %2985 = vmatpush1.msra.mxu0 0.0
        %2986 = vmatprep.subr.mxu0 0.0
        %2987 = vmatpush1.msra.mxu0 0.0
        %2988 = vmatprep.subr.mxu0 0.0
        %2989 = vmatpush1.msra.mxu0 0.0
        %2990 = vmatprep.subr.mxu0 0.0
        %2991 = vmatpush1.msra.mxu0 0.0
        %2992 = vmatprep.subr.mxu0 0.0
        %2993 = vmatpush1.msra.mxu0 0.0
        %2994 = vmatprep.subr.mxu0 0.0
        %2995 = vmatpush1.msra.mxu0 0.0
        %2996 = vmatprep.subr.mxu0 0.0
        %2997 = vmatpush1.msra.mxu0 0.0
        %2998 = vmatprep.subr.mxu0 0.0
        %2999 = vmatpush1.msra.mxu0 0.0
        %3000 = vmatprep.subr.mxu0 0.0
        %3001 = vmatpush1.msra.mxu0 0.0
        %3002 = vmatprep.subr.mxu0 0.0
        %3003 = vmatpush1.msra.mxu0 0.0
        %3004 = vmatprep.subr.mxu0 0.0
        %3005 = vmatpush1.msra.mxu0 %v735
        %3006 = vmatprep.subr.mxu0 0.0
        %3007 = vmatpush2.msra.mxu0 0.0
        %3008 = vmatprep.subr.mxu0 0.0
        %3009 = vmatpush2.msra.mxu0 0.0
        %3010 = vmatprep.subr.mxu0 0.0
        %3011 = vmatpush2.msra.mxu0 0.0
        %3012 = vmatprep.subr.mxu0 0.0
        %3013 = vmatpush2.msra.mxu0 0.0
        %3014 = vmatprep.subr.mxu0 0.0
        %3015 = vmatpush2.msra.mxu0 0.0
        %3016 = vmatprep.subr.mxu0 0.0
        %3017 = vmatpush2.msra.mxu0 0.0
        %3018 = vmatprep.subr.mxu0 0.0
        %3019 = vmatpush2.msra.mxu0 0.0
        %3020 = vmatprep.subr.mxu0 0.0
        %3021 = vmatpush2.msra.mxu0 0.0
        %3022 = vmatprep.subr.mxu0 0.0
        %3023 = vmatpush2.msra.mxu0 0.0
        %3024 = vmatprep.subr.mxu0 0.0
        %3025 = vmatpush2.msra.mxu0 0.0
        %3026 = vmatprep.subr.mxu0 0.0
        %3027 = vmatpush2.msra.mxu0 0.0
        %3028 = vmatprep.subr.mxu0 0.0
        %3029 = vmatpush2.msra.mxu0 0.0
        %3030 = vmatprep.subr.mxu0 0.0
        %3031 = vmatpush2.msra.mxu0 0.0
        %3032 = vmatprep.subr.mxu0 0.0
        %3033 = vmatpush2.msra.mxu0 0.0
        %3034 = vmatprep.subr.mxu0 0.0
        %3035 = vmatpush2.msra.mxu0 0.0
        %3036 = vmatprep.subr.mxu0 0.0
        %3037 = vmatpush2.msra.mxu0 0.0
        %3038 = vmatprep.mubr.f32.mxu0 0.0
        %3039 = vmatmul.mubr.f32.gmra.mxu0 %v2972
        %v3040 = vpop.f32.mrf.mxu0
        %v3041 = vadd.f32 0.0, %v3040
        %v3042 = vpop.f32.mrf.mxu0
        %3043 = vdwg.mxu0
        %v3045 = vsel %vm816, %v2532, 0
        %3047 = vmatprep.subr.mxu0 0.0
        %3048 = vmatpush1.msra.mxu0 0.0
        %3049 = vmatprep.subr.mxu0 0.0
        %3050 = vmatpush1.msra.mxu0 0.0
        %3051 = vmatprep.subr.mxu0 0.0
        %3052 = vmatpush1.msra.mxu0 0.0
        %3053 = vmatprep.subr.mxu0 0.0
        %3054 = vmatpush1.msra.mxu0 0.0
        %3055 = vmatprep.subr.mxu0 0.0
        %3056 = vmatpush1.msra.mxu0 0.0
        %3057 = vmatprep.subr.mxu0 0.0
        %3058 = vmatpush1.msra.mxu0 0.0
        %3059 = vmatprep.subr.mxu0 0.0
        %3060 = vmatpush1.msra.mxu0 0.0
        %3061 = vmatprep.subr.mxu0 0.0
        %3062 = vmatpush1.msra.mxu0 0.0
        %3063 = vmatprep.subr.mxu0 0.0
        %3064 = vmatpush1.msra.mxu0 0.0
        %3065 = vmatprep.subr.mxu0 0.0
        %3066 = vmatpush1.msra.mxu0 0.0
        %3067 = vmatprep.subr.mxu0 0.0
        %3068 = vmatpush1.msra.mxu0 0.0
        %3069 = vmatprep.subr.mxu0 0.0
        %3070 = vmatpush1.msra.mxu0 0.0
        %3071 = vmatprep.subr.mxu0 0.0
        %3072 = vmatpush1.msra.mxu0 0.0
        %3073 = vmatprep.subr.mxu0 0.0
        %3074 = vmatpush1.msra.mxu0 0.0
        %3075 = vmatprep.subr.mxu0 0.0
        %3076 = vmatpush1.msra.mxu0 0.0
        %3077 = vmatprep.subr.mxu0 0.0
        %3078 = vmatpush1.msra.mxu0 %v736
        %3079 = vmatprep.subr.mxu0 0.0
        %3080 = vmatpush2.msra.mxu0 0.0
        %3081 = vmatprep.subr.mxu0 0.0
        %3082 = vmatpush2.msra.mxu0 0.0
        %3083 = vmatprep.subr.mxu0 0.0
        %3084 = vmatpush2.msra.mxu0 0.0
        %3085 = vmatprep.subr.mxu0 0.0
        %3086 = vmatpush2.msra.mxu0 0.0
        %3087 = vmatprep.subr.mxu0 0.0
        %3088 = vmatpush2.msra.mxu0 0.0
        %3089 = vmatprep.subr.mxu0 0.0
        %3090 = vmatpush2.msra.mxu0 0.0
        %3091 = vmatprep.subr.mxu0 0.0
        %3092 = vmatpush2.msra.mxu0 0.0
        %3093 = vmatprep.subr.mxu0 0.0
        %3094 = vmatpush2.msra.mxu0 0.0
        %3095 = vmatprep.subr.mxu0 0.0
        %3096 = vmatpush2.msra.mxu0 0.0
        %3097 = vmatprep.subr.mxu0 0.0
        %3098 = vmatpush2.msra.mxu0 0.0
        %3099 = vmatprep.subr.mxu0 0.0
        %3100 = vmatpush2.msra.mxu0 0.0
        %3101 = vmatprep.subr.mxu0 0.0
        %3102 = vmatpush2.msra.mxu0 0.0
        %3103 = vmatprep.subr.mxu0 0.0
        %3104 = vmatpush2.msra.mxu0 0.0
        %3105 = vmatprep.subr.mxu0 0.0
        %3106 = vmatpush2.msra.mxu0 0.0
        %3107 = vmatprep.subr.mxu0 0.0
        %3108 = vmatpush2.msra.mxu0 0.0
        %3109 = vmatprep.subr.mxu0 0.0
        %3110 = vmatpush2.msra.mxu0 0.0
        %3111 = vmatprep.mubr.f32.mxu0 0.0
        %3112 = vmatmul.mubr.f32.gmra.mxu0 %v3045
        %v3113 = vpop.f32.mrf.mxu0
        %v3114 = vadd.f32 0.0, %v3113
        %v3115 = vpop.f32.mrf.mxu0
        %3116 = vdwg.mxu0
        %v3118 = vcombine.high %v1623, %v1623
        %v3120 = vunpack.c.l.s4 1966171168
        %v3121 = vunpack.c.0.s8 %v3120
        %v3122 = vlaneseq
        %v3123 = vshrl.u32 %v3122, 7
        %v3124 = vsub.s32 %v3121, %v3123
        %v3125 = vrot.slane %v1623, %v3124
        %v3127 = vunpack.c.l.s4 1966171168
        %v3128 = vunpack.c.0.s8 %v3127
        %v3129 = vlaneseq
        %v3130 = vshrl.u32 %v3129, 7
        %v3131 = vsub.s32 %v3128, %v3130
        %v3132 = vrot.slane %v3118, %v3131
        %v3133 = vcombine.high %v3125, %v3125
        %v3134 = vcombine.high %v3132, %v3132
        %v3136 = vunpack.c.l.s4 1966171168
        %v3137 = vunpack.c.0.s8 %v3136
        %v3138 = vlaneseq
        %v3139 = vshrl.u32 %v3138, 7
        %v3140 = vsub.s32 %v3137, %v3139
        %v3141 = vrot.slane %v3125, %v3140
        %v3143 = vunpack.c.l.s4 1966171168
        %v3144 = vunpack.c.0.s8 %v3143
        %v3145 = vlaneseq
        %v3146 = vshrl.u32 %v3145, 7
        %v3147 = vsub.s32 %v3144, %v3146
        %v3148 = vrot.slane %v3132, %v3147
        %v3150 = vunpack.c.l.s4 1966171168
        %v3151 = vunpack.c.0.s8 %v3150
        %v3152 = vlaneseq
        %v3153 = vshrl.u32 %v3152, 7
        %v3154 = vsub.s32 %v3151, %v3153
        %v3155 = vrot.slane %v3133, %v3154
        %v3157 = vunpack.c.l.s4 1966171168
        %v3158 = vunpack.c.0.s8 %v3157
        %v3159 = vlaneseq
        %v3160 = vshrl.u32 %v3159, 7
        %v3161 = vsub.s32 %v3158, %v3160
        %v3162 = vrot.slane %v3134, %v3161
        %v3163 = vcombine.high %v3141, %v3141
        %v3164 = vcombine.high %v3148, %v3148
        %v3165 = vcombine.high %v3155, %v3155
        %v3166 = vcombine.high %v3162, %v3162
        %v3176 = vcombine.high %v1809, %v1809
        %v3178 = vunpack.c.l.s4 1966171168
        %v3179 = vunpack.c.0.s8 %v3178
        %v3180 = vlaneseq
        %v3181 = vshrl.u32 %v3180, 7
        %v3182 = vsub.s32 %v3179, %v3181
        %v3183 = vrot.slane %v1809, %v3182
        %v3185 = vunpack.c.l.s4 1966171168
        %v3186 = vunpack.c.0.s8 %v3185
        %v3187 = vlaneseq
        %v3188 = vshrl.u32 %v3187, 7
        %v3189 = vsub.s32 %v3186, %v3188
        %v3190 = vrot.slane %v3176, %v3189
        %v3191 = vcombine.high %v3183, %v3183
        %v3192 = vcombine.high %v3190, %v3190
        %v3194 = vunpack.c.l.s4 1966171168
        %v3195 = vunpack.c.0.s8 %v3194
        %v3196 = vlaneseq
        %v3197 = vshrl.u32 %v3196, 7
        %v3198 = vsub.s32 %v3195, %v3197
        %v3199 = vrot.slane %v3183, %v3198
        %v3201 = vunpack.c.l.s4 1966171168
        %v3202 = vunpack.c.0.s8 %v3201
        %v3203 = vlaneseq
        %v3204 = vshrl.u32 %v3203, 7
        %v3205 = vsub.s32 %v3202, %v3204
        %v3206 = vrot.slane %v3190, %v3205
        %v3208 = vunpack.c.l.s4 1966171168
        %v3209 = vunpack.c.0.s8 %v3208
        %v3210 = vlaneseq
        %v3211 = vshrl.u32 %v3210, 7
        %v3212 = vsub.s32 %v3209, %v3211
        %v3213 = vrot.slane %v3191, %v3212
        %v3215 = vunpack.c.l.s4 1966171168
        %v3216 = vunpack.c.0.s8 %v3215
        %v3217 = vlaneseq
        %v3218 = vshrl.u32 %v3217, 7
        %v3219 = vsub.s32 %v3216, %v3218
        %v3220 = vrot.slane %v3192, %v3219
        %v3221 = vcombine.high %v3199, %v3199
        %v3222 = vcombine.high %v3206, %v3206
        %v3223 = vcombine.high %v3213, %v3213
        %v3224 = vcombine.high %v3220, %v3220
        %v3226 = vcombine.high %v1994, %v1994
        %v3228 = vunpack.c.l.s4 1966171168
        %v3229 = vunpack.c.0.s8 %v3228
        %v3230 = vlaneseq
        %v3231 = vshrl.u32 %v3230, 7
        %v3232 = vsub.s32 %v3229, %v3231
        %v3233 = vrot.slane %v1994, %v3232
        %v3235 = vunpack.c.l.s4 1966171168
        %v3236 = vunpack.c.0.s8 %v3235
        %v3237 = vlaneseq
        %v3238 = vshrl.u32 %v3237, 7
        %v3239 = vsub.s32 %v3236, %v3238
        %v3240 = vrot.slane %v3226, %v3239
        %v3241 = vcombine.high %v3233, %v3233
        %v3242 = vcombine.high %v3240, %v3240
        %v3244 = vunpack.c.l.s4 1966171168
        %v3245 = vunpack.c.0.s8 %v3244
        %v3246 = vlaneseq
        %v3247 = vshrl.u32 %v3246, 7
        %v3248 = vsub.s32 %v3245, %v3247
        %v3249 = vrot.slane %v3233, %v3248
        %v3251 = vunpack.c.l.s4 1966171168
        %v3252 = vunpack.c.0.s8 %v3251
        %v3253 = vlaneseq
        %v3254 = vshrl.u32 %v3253, 7
        %v3255 = vsub.s32 %v3252, %v3254
        %v3256 = vrot.slane %v3240, %v3255
        %v3258 = vunpack.c.l.s4 1966171168
        %v3259 = vunpack.c.0.s8 %v3258
        %v3260 = vlaneseq
        %v3261 = vshrl.u32 %v3260, 7
        %v3262 = vsub.s32 %v3259, %v3261
        %v3263 = vrot.slane %v3241, %v3262
        %v3265 = vunpack.c.l.s4 1966171168
        %v3266 = vunpack.c.0.s8 %v3265
        %v3267 = vlaneseq
        %v3268 = vshrl.u32 %v3267, 7
        %v3269 = vsub.s32 %v3266, %v3268
        %v3270 = vrot.slane %v3242, %v3269
        %v3271 = vcombine.high %v3249, %v3249
        %v3272 = vcombine.high %v3256, %v3256
        %v3273 = vcombine.high %v3263, %v3263
        %v3274 = vcombine.high %v3270, %v3270
        %v3276 = vcombine.high %v2179, %v2179
        %v3278 = vunpack.c.l.s4 1966171168
        %v3279 = vunpack.c.0.s8 %v3278
        %v3280 = vlaneseq
        %v3281 = vshrl.u32 %v3280, 7
        %v3282 = vsub.s32 %v3279, %v3281
        %v3283 = vrot.slane %v2179, %v3282
        %v3285 = vunpack.c.l.s4 1966171168
        %v3286 = vunpack.c.0.s8 %v3285
        %v3287 = vlaneseq
        %v3288 = vshrl.u32 %v3287, 7
        %v3289 = vsub.s32 %v3286, %v3288
        %v3290 = vrot.slane %v3276, %v3289
        %v3291 = vcombine.high %v3283, %v3283
        %v3292 = vcombine.high %v3290, %v3290
        %v3294 = vunpack.c.l.s4 1966171168
        %v3295 = vunpack.c.0.s8 %v3294
        %v3296 = vlaneseq
        %v3297 = vshrl.u32 %v3296, 7
        %v3298 = vsub.s32 %v3295, %v3297
        %v3299 = vrot.slane %v3283, %v3298
        %v3301 = vunpack.c.l.s4 1966171168
        %v3302 = vunpack.c.0.s8 %v3301
        %v3303 = vlaneseq
        %v3304 = vshrl.u32 %v3303, 7
        %v3305 = vsub.s32 %v3302, %v3304
        %v3306 = vrot.slane %v3290, %v3305
        %v3308 = vunpack.c.l.s4 1966171168
        %v3309 = vunpack.c.0.s8 %v3308
        %v3310 = vlaneseq
        %v3311 = vshrl.u32 %v3310, 7
        %v3312 = vsub.s32 %v3309, %v3311
        %v3313 = vrot.slane %v3291, %v3312
        %v3315 = vunpack.c.l.s4 1966171168
        %v3316 = vunpack.c.0.s8 %v3315
        %v3317 = vlaneseq
        %v3318 = vshrl.u32 %v3317, 7
        %v3319 = vsub.s32 %v3316, %v3318
        %v3320 = vrot.slane %v3292, %v3319
        %v3321 = vcombine.high %v3299, %v3299
        %v3322 = vcombine.high %v3306, %v3306
        %v3323 = vcombine.high %v3313, %v3313
        %v3324 = vcombine.high %v3320, %v3320
        %v3325 = vlaneseq
        %v3326 = vshrl.u32 %v3325, 7
        %v3327 = vsub.s32 0, %v3326
        %v3328 = vrot.slane %v3199, %v3327
        %v3329 = vlaneseq
        %v3330 = vshrl.u32 %v3329, 7
        %v3331 = vsub.s32 0, %v3330
        %v3332 = vrot.slane %v3213, %v3331
        %v3333 = vlaneseq
        %v3334 = vshrl.u32 %v3333, 7
        %v3335 = vsub.s32 0, %v3334
        %v3336 = vrot.slane %v3221, %v3335
        %v3337 = vlaneseq
        %v3338 = vshrl.u32 %v3337, 7
        %v3339 = vsub.s32 0, %v3338
        %v3340 = vrot.slane %v3223, %v3339
        %v3341 = vlaneseq
        %v3342 = vshrl.u32 %v3341, 7
        %v3343 = vsub.s32 0, %v3342
        %v3344 = vrot.slane %v3206, %v3343
        %v3345 = vlaneseq
        %v3346 = vshrl.u32 %v3345, 7
        %v3347 = vsub.s32 0, %v3346
        %v3348 = vrot.slane %v3220, %v3347
        %v3349 = vlaneseq
        %v3350 = vshrl.u32 %v3349, 7
        %v3351 = vsub.s32 0, %v3350
        %v3352 = vrot.slane %v3222, %v3351
        %v3353 = vlaneseq
        %v3354 = vshrl.u32 %v3353, 7
        %v3355 = vsub.s32 0, %v3354
        %v3356 = vrot.slane %v3224, %v3355
        %v3365 = vlaneseq
        %v3366 = vshrl.u32 %v3365, 7
        %v3367 = vsub.s32 0, %v3366
        %v3368 = vrot.slane %v3249, %v3367
        %v3369 = vlaneseq
        %v3370 = vshrl.u32 %v3369, 7
        %v3371 = vsub.s32 0, %v3370
        %v3372 = vrot.slane %v3263, %v3371
        %v3373 = vlaneseq
        %v3374 = vshrl.u32 %v3373, 7
        %v3375 = vsub.s32 0, %v3374
        %v3376 = vrot.slane %v3271, %v3375
        %v3377 = vlaneseq
        %v3378 = vshrl.u32 %v3377, 7
        %v3379 = vsub.s32 0, %v3378
        %v3380 = vrot.slane %v3273, %v3379
        %v3381 = vlaneseq
        %v3382 = vshrl.u32 %v3381, 7
        %v3383 = vsub.s32 0, %v3382
        %v3384 = vrot.slane %v3256, %v3383
        %v3385 = vlaneseq
        %v3386 = vshrl.u32 %v3385, 7
        %v3387 = vsub.s32 0, %v3386
        %v3388 = vrot.slane %v3270, %v3387
        %v3389 = vlaneseq
        %v3390 = vshrl.u32 %v3389, 7
        %v3391 = vsub.s32 0, %v3390
        %v3392 = vrot.slane %v3272, %v3391
        %v3393 = vlaneseq
        %v3394 = vshrl.u32 %v3393, 7
        %v3395 = vsub.s32 0, %v3394
        %v3396 = vrot.slane %v3274, %v3395
        %v3405 = vlaneseq
        %v3406 = vshrl.u32 %v3405, 7
        %v3407 = vsub.s32 0, %v3406
        %v3408 = vrot.slane %v3299, %v3407
        %v3409 = vlaneseq
        %v3410 = vshrl.u32 %v3409, 7
        %v3411 = vsub.s32 0, %v3410
        %v3412 = vrot.slane %v3313, %v3411
        %v3413 = vlaneseq
        %v3414 = vshrl.u32 %v3413, 7
        %v3415 = vsub.s32 0, %v3414
        %v3416 = vrot.slane %v3321, %v3415
        %v3417 = vlaneseq
        %v3418 = vshrl.u32 %v3417, 7
        %v3419 = vsub.s32 0, %v3418
        %v3420 = vrot.slane %v3323, %v3419
        %v3421 = vlaneseq
        %v3422 = vshrl.u32 %v3421, 7
        %v3423 = vsub.s32 0, %v3422
        %v3424 = vrot.slane %v3306, %v3423
        %v3425 = vlaneseq
        %v3426 = vshrl.u32 %v3425, 7
        %v3427 = vsub.s32 0, %v3426
        %v3428 = vrot.slane %v3320, %v3427
        %v3429 = vlaneseq
        %v3430 = vshrl.u32 %v3429, 7
        %v3431 = vsub.s32 0, %v3430
        %v3432 = vrot.slane %v3322, %v3431
        %v3433 = vlaneseq
        %v3434 = vshrl.u32 %v3433, 7
        %v3435 = vsub.s32 0, %v3434
        %v3436 = vrot.slane %v3324, %v3435
        %v3445 = vsel %vm2506, %v3141, %v3328
        %v3446 = vsel %vm2506, %v3155, %v3332
        %v3447 = vsel %vm2506, %v3163, %v3336
        %v3448 = vsel %vm2506, %v3165, %v3340
        %v3449 = vsel %vm2506, %v3148, %v3344
        %v3450 = vsel %vm2506, %v3162, %v3348
        %v3451 = vsel %vm2506, %v3164, %v3352
        %v3452 = vsel %vm2506, %v3166, %v3356
        %v3453 = vsel %vm2515, %v3445, %v3368
        %v3454 = vsel %vm2515, %v3446, %v3372
        %v3455 = vsel %vm2515, %v3447, %v3376
        %v3456 = vsel %vm2515, %v3448, %v3380
        %v3457 = vsel %vm2515, %v3449, %v3384
        %v3458 = vsel %vm2515, %v3450, %v3388
        %v3459 = vsel %vm2515, %v3451, %v3392
        %v3460 = vsel %vm2515, %v3452, %v3396
        %v3461 = vsel %vm2524, %v3453, %v3408
        %v3462 = vsel %vm2524, %v3454, %v3412
        %v3463 = vsel %vm2524, %v3455, %v3416
        %v3464 = vsel %vm2524, %v3456, %v3420
        %v3465 = vsel %vm2524, %v3457, %v3424
        %v3466 = vsel %vm2524, %v3458, %v3428
        %v3467 = vsel %vm2524, %v3459, %v3432
        %v3468 = vsel %vm2524, %v3460, %v3436
        %v3469 = vadd.f32 %v3461, %v2603
        %v3470 = vadd.f32 %v3462, %v2676
        %v3471 = vadd.f32 %v3463, %v2749
        %v3472 = vadd.f32 %v3464, %v2822
        %v3473 = vadd.f32 %v3465, %v2895
        %v3474 = vadd.f32 %v3466, %v2968
        %v3475 = vadd.f32 %v3467, %v3041
        %v3476 = vadd.f32 %v3468, %v3114
        %v3477 = vcombine.low %v3469, %v3471
        %v3479 = vunpack.c.l.s4 1983009808
        %v3480 = vunpack.c.0.s8 %v3479
        %v3481 = vlaneseq
        %v3482 = vshrl.u32 %v3481, 7
        %v3483 = vsub.s32 %v3480, %v3482
        %v3484 = vrot.slane %v3477, %v3483
        %v3485 = vcombine.low %v3470, %v3472
        %v3487 = vunpack.c.l.s4 1983009808
        %v3488 = vunpack.c.0.s8 %v3487
        %v3489 = vlaneseq
        %v3490 = vshrl.u32 %v3489, 7
        %v3491 = vsub.s32 %v3488, %v3490
        %v3492 = vrot.slane %v3485, %v3491
        %v3493 = vcombine.low %v3473, %v3475
        %v3495 = vunpack.c.l.s4 1983009808
        %v3496 = vunpack.c.0.s8 %v3495
        %v3497 = vlaneseq
        %v3498 = vshrl.u32 %v3497, 7
        %v3499 = vsub.s32 %v3496, %v3498
        %v3500 = vrot.slane %v3493, %v3499
        %v3501 = vcombine.low %v3474, %v3476
        %v3503 = vunpack.c.l.s4 1983009808
        %v3504 = vunpack.c.0.s8 %v3503
        %v3505 = vlaneseq
        %v3506 = vshrl.u32 %v3505, 7
        %v3507 = vsub.s32 %v3504, %v3506
        %v3508 = vrot.slane %v3501, %v3507
        %v3509 = vcombine.low %v3484, %v3492
        %v3510 = vcombine.high %v3484, %v3492
        %v3512 = vunpack.c.l.s4 1934713408
        %v3513 = vunpack.c.0.s8 %v3512
        %v3514 = vlaneseq
        %v3515 = vshrl.u32 %v3514, 7
        %v3516 = vsub.s32 %v3513, %v3515
        %v3517 = vrot.slane %v3509, %v3516
        %v3519 = vunpack.c.l.s4 1934713408
        %v3520 = vunpack.c.0.s8 %v3519
        %v3521 = vlaneseq
        %v3522 = vshrl.u32 %v3521, 7
        %v3523 = vsub.s32 %v3520, %v3522
        %v3524 = vrot.slane %v3510, %v3523
        %v3525 = vcombine.low %v3500, %v3508
        %v3526 = vcombine.high %v3500, %v3508
        %v3528 = vunpack.c.l.s4 1934713408
        %v3529 = vunpack.c.0.s8 %v3528
        %v3530 = vlaneseq
        %v3531 = vshrl.u32 %v3530, 7
        %v3532 = vsub.s32 %v3529, %v3531
        %v3533 = vrot.slane %v3525, %v3532
        %v3535 = vunpack.c.l.s4 1934713408
        %v3536 = vunpack.c.0.s8 %v3535
        %v3537 = vlaneseq
        %v3538 = vshrl.u32 %v3537, 7
        %v3539 = vsub.s32 %v3536, %v3538
        %v3540 = vrot.slane %v3526, %v3539
        %v3541 = vcombine.low %v3517, %v3533
        %v3542 = vcombine.high %v3517, %v3533
        %v3543 = vcombine.low %v3524, %v3540
        %v3544 = vcombine.high %v3524, %v3540
        %3546 = vrot.lane.b32.xlu0 %v3542, 8
        %v3547 = vpop.permute.xlu0 %3546
        %3550 = vrot.lane.b32.xlu0 %v3543, 16
        %v3551 = vpop.permute.xlu0 %3550
        %3554 = vrot.lane.b32.xlu0 %v3544, 24
        %v3555 = vpop.permute.xlu0 %3554
        %v3557 = vsel %vm816, %v3541, %v3547
        %vm3558 = vcmask 130048
        %v3559 = vsel %vm3558, %v3557, %v3551
        %vm3560 = vcmask 195584
        %v3561 = vsel %vm3560, %v3559, %v3555
        %3562 = vst.msk [vmem:[%s470] sm:$0xff] %vm493, %v3561
        %s3563 = sand.u32 %s245, 1
        %s3564 = scalar_lea.sflag [#allocation4], %s3563
        %s3565 = sand.u32 %s245, 1
        %s3566 = smul.addr %s3565, 8
        %s3567 = scalar_lea.vmem [#allocation11], %s3566
        %s3568 = sand.u32 %s271, 1
        %s3569 = scalar_lea.sflag [#allocation13], %s3568
        %s3570 = sand.u32 %s271, 1
        %s3571 = smul.addr %s3570, 32
        %s3572 = scalar_lea.vmem [#allocation12], %s3571
        // Predicated region
        $region77: #{tpu_custom_call.1} parent=55 // pred_check
          %p3573 = pneg %p255
        $region78: #{tpu_custom_call.1} parent=55 // pred_check_branch
          %3575 = sbr.rel (%p3573) target = $region80
        $region79: #{tpu_custom_call.1} parent=55 // pred_region
          %s3577 = ssub.s32 128, 128
          %3578 = vsyncadd %s3564, %s3577
          %s3579 = smul.addr %s33, 128
          %s3580 = scalar_lea.hbm %s9, %s3579
          %s3582 = sshll.u32 %s3567, 4
          %s3583 = int_to_ptr.vmem [resolvable:$true] %s3582
          %3585 = dma.vmem_to_hbm [thread:$0]  %s3583, 128, %s3580, %s3564
        $region80: #{tpu_custom_call.1} parent=55 // pred_fallthru
          _
        // Predicated region
        $region81: #{tpu_custom_call.1} parent=55 // pred_check
          %p3586 = pneg %p281
        $region82: #{tpu_custom_call.1} parent=55 // pred_check_branch
          %3588 = sbr.rel (%p3586) target = $region84
        $region83: #{tpu_custom_call.1} parent=55 // pred_region
          %s3590 = ssub.s32 512, 512
          %3591 = vsyncadd %s3569, %s3590
          %s3592 = smul.addr %s33, 4
          %s3593 = smul.addr %s3592, 128
          %s3594 = scalar_lea.hbm %s10, %s3593
          %s3595 = sshll.u32 %s3572, 4
          %s3596 = int_to_ptr.vmem [resolvable:$true] %s3595
          %3601 = dma.vmem_to_hbm [thread:$0]  %s3596, 512, %s3594, %s3569, 128, 128, 8
        $region84: #{tpu_custom_call.1} parent=55 // pred_fallthru
          _
      $region56: #{tpu_custom_call.1} parent=5 // pred_fallthru
        _
      %p3602 = scmp.le.s32.totalorder 2, %s28
      // Predicated region
      $region85: #{tpu_custom_call.1} parent=5 // pred_check
        %p3603 = pneg %p3602
      $region86: #{tpu_custom_call.1} parent=5 // pred_check_branch
        %3605 = sbr.rel (%p3603) target = $region88
      $region87: #{tpu_custom_call.1} parent=5 // pred_region
        %s3606 = ssub.s32 %s28, 2
        // Predicated region
        $region89: #{tpu_custom_call.1} parent=87 // pred_check
          %p3607 = pneg %p261
        $region90: #{tpu_custom_call.1} parent=87 // pred_check_branch
          %3609 = sbr.rel (%p3607) target = $region92
        $region91: #{tpu_custom_call.1} parent=87 // pred_region
          %s3610 = sand.u32 %s246, 1
          %s3611 = scalar_lea.sflag [#allocation4], %s3610
          %s3612 = sand.u32 %s246, 1
          %s3613 = smul.addr %s3612, 8
          %s3614 = scalar_lea.vmem [#allocation11], %s3613
          %3615 = dma.done %s3611, 128
        $region92: #{tpu_custom_call.1} parent=87 // pred_fallthru
          _
        // Predicated region
        $region93: #{tpu_custom_call.1} parent=87 // pred_check
          %p3616 = pneg %p287
        $region94: #{tpu_custom_call.1} parent=87 // pred_check_branch
          %3618 = sbr.rel (%p3616) target = $region96
        $region95: #{tpu_custom_call.1} parent=87 // pred_region
          %s3619 = sand.u32 %s272, 1
          %s3620 = scalar_lea.sflag [#allocation13], %s3619
          %s3621 = sand.u32 %s272, 1
          %s3622 = smul.addr %s3621, 32
          %s3623 = scalar_lea.vmem [#allocation12], %s3622
          %3624 = dma.done %s3620, 512
        $region96: #{tpu_custom_call.1} parent=87 // pred_fallthru
          _
      $region88: #{tpu_custom_call.1} parent=5 // pred_fallthru
        _
    $region6: #{tpu_custom_call.1} parent=1 // loop_footer
      %s32 = sadd.s32 1, %s28
    $region7: #{tpu_custom_call.1} parent=1 // loop_footer_branch
      %27 = sbr.rel target = $region3
    $region8: #{tpu_custom_call.1} parent=1 // loop_exit
      _
    %3625 = vsyncpa [#allocation3], 1
    %s3626 = scalar_lea.sflag [#allocation3], 1
    %3627 = vsyncpa %s3626, 1
    %3628 = vsyncpa [#allocation6], 1
    %3629 = vsyncpa [#allocation9], 1
    %3630 = vsyncpa [#allocation4], 1
    %s3631 = scalar_lea.sflag [#allocation4], 1
    %3632 = vsyncpa %s3631, 1
    %3633 = vsyncpa [#allocation13], 1
    %s3634 = scalar_lea.sflag [#allocation13], 1
    %3635 = vsyncpa %s3634, 1

</llo_original>
